<compile_context>
chip_gen: v6e
topology: v6e:2x2x1
jax: 0.10.0
libtpu: 0.0.40
codegen_flags: <defaults>
</compile_context>

<pallas_src>
import functools

import jax
import jax.numpy as jnp
from jax.experimental import pallas as pl
from jax.experimental.pallas import tpu as pltpu


_LN_EPS = 1e-5


def _layer_norm(x, g, b):
    mean = jnp.mean(x, axis=-1, keepdims=True)
    var = jnp.mean(jnp.square(x - mean), axis=-1, keepdims=True)
    return (x - mean) * jax.lax.rsqrt(var + _LN_EPS) * g + b


# ----------------------------- kernel ---------------------------------------


def decoder_layer_kernel(
    # data (one batch element per grid step)
    x_ref,      # (1, T, E) fp32
    enc_ref,    # (1, S, E) bf16
    mask_ref,   # (T, T)    fp32 additive causal mask
    # self-attention weights (pre-transposed to (in, out); scaling folded in wq/bq)
    wq_ref, bq_ref, wk_ref, bk_ref, wv_ref, bv_ref, wo_ref, bo_ref,
    g_sa_ref, b_sa_ref,
    # encoder-attention weights
    ewq_ref, ebq_ref, ewk_ref, ebk_ref, ewv_ref, ebv_ref, ewo_ref, ebo_ref,
    g_ea_ref, b_ea_ref,
    # FFN weights
    w1_ref, b1_ref, w2_ref, b2_ref,
    g_f_ref, b_f_ref,
    # outputs: out_ref (1,T,E) [, attn_ref (1,T,S)]; scratch: ctx_scr (T,E) bf16
    *refs,
    num_heads, head_dim, need_attn,
):
    bf16, f32 = jnp.bfloat16, jnp.float32
    H, D = num_heads, head_dim

    if need_attn:
        out_ref, attn_ref, ctx_scr = refs
    else:
        out_ref, ctx_scr = refs
        attn_ref = None

    x = x_ref[0]           # (T, E) fp32 residual stream
    enc_bf = enc_ref[0]    # (S, E) bf16

    def linear(rows_bf, w_ref, b_ref):
        # bf16 x bf16 on the MXU, fp32 accumulation + fp32 bias add.
        return (jnp.dot(rows_bf, w_ref[...], preferred_element_type=f32)
                + b_ref[...])

    def mha(q_rows_bf, kv_rows_bf, wq, bq, wk, bk, wv, bv, wo, bo, mask,
            want_probs):
        # Projections over all rows of this batch element (q scaling is folded
        # into wq/bq at prep time).
        q = linear(q_rows_bf, wq, bq)       # (T, E)    fp32
        k = linear(kv_rows_bf, wk, bk)      # (S_kv, E) fp32
        v = linear(kv_rows_bf, wv, bv)      # (S_kv, E) fp32

        # Cast once to bf16; per-head slices below reuse these copies.
        qb, kb, vb = q.astype(bf16), k.astype(bf16), v.astype(bf16)

        probs_sum = None
        for h in range(H):                  # short static loop over heads
            lo = h * D
            qh = qb[:, lo:lo + D]           # (T, D) bf16
            kh = kb[:, lo:lo + D]           # (S_kv, D) bf16
            vh = vb[:, lo:lo + D]           # (S_kv, D) bf16

            s = jnp.einsum("qd,kd->qk", qh, kh,
                           preferred_element_type=f32)      # (T, S_kv) fp32
            if mask is not None:
                s = s + mask
            s = s - jnp.max(s, axis=-1, keepdims=True)
            p = jnp.exp(s)
            denom = jnp.sum(p, axis=-1, keepdims=True)
            if want_probs:
                p = p / denom               # exact: returned probs sum to 1
            else:
                p = p * pl.reciprocal(denom, approx=True)   # EUP slot

            ctx = jnp.einsum("qk,kd->qd", p.astype(bf16), vh,
                             preferred_element_type=f32)    # (T, D) fp32
            # Land this head's context in its lane slice of the scratch slab.
            ctx_scr[:, lo:lo + D] = ctx.astype(bf16)
            if want_probs:
                probs_sum = p if probs_sum is None else probs_sum + p

        # Single full-K output projection instead of H tiny K=D matmuls.
        out_rows = (jnp.dot(ctx_scr[...], wo[...], preferred_element_type=f32)
                    + bo[...])
        probs = probs_sum * (1.0 / H) if want_probs else None
        return out_rows, probs

    # ---- self attention block (post-LN) ----
    residual = x
    x_bf = x.astype(bf16)
    sa, _ = mha(x_bf, x_bf,
                wq_ref, bq_ref, wk_ref, bk_ref, wv_ref, bv_ref,
                wo_ref, bo_ref, mask_ref[...], want_probs=False)
    x = _layer_norm(residual + sa, g_sa_ref[...], b_sa_ref[...])

    # ---- encoder attention block (post-LN) ----
    residual = x
    ea, probs = mha(x.astype(bf16), enc_bf,
                    ewq_ref, ebq_ref, ewk_ref, ebk_ref, ewv_ref, ebv_ref,
                    ewo_ref, ebo_ref, None, want_probs=need_attn)
    x = _layer_norm(residual + ea, g_ea_ref[...], b_ea_ref[...])

    # ---- feed-forward block (post-LN) ----
    residual = x
    h1 = (jnp.dot(x.astype(bf16), w1_ref[...], preferred_element_type=f32)
          + b1_ref[...])
    h1 = jnp.maximum(h1, 0.0)               # relu activation_fn
    y = (jnp.dot(h1.astype(bf16), w2_ref[...], preferred_element_type=f32)
         + b2_ref[...])
    x = _layer_norm(residual + y, g_f_ref[...], b_f_ref[...])

    out_ref[0] = x                          # (T, E)
    if need_attn:
        attn_ref[0] = probs                 # (T, S) head-averaged


# ----------------------------- parameter prep --------------------------------
# One-time, outside the per-call path: dtype casts + folding the 1/sqrt(D)
# query scaling into wq/bq.  (In a decoder stack this runs once per layer at
# model-load time, not per forward.)


def prepare_decoder_layer_params(params, head_dim):
    scaling = float(head_dim) ** -0.5
    bf = lambda a: jnp.asarray(a, jnp.bfloat16)
    f32 = lambda a: jnp.asarray(a, jnp.float32)
    return {
        "wq": bf(f32(params["wq"]) * scaling), "bq": f32(params["bq"]) * scaling,
        "wk": bf(params["wk"]), "bk": f32(params["bk"]),
        "wv": bf(params["wv"]), "bv": f32(params["bv"]),
        "wo": bf(params["wo"]), "bo": f32(params["bo"]),
        "g_sa": f32(params["g_sa"]), "b_sa": f32(params["b_sa"]),
        "ewq": bf(f32(params["ewq"]) * scaling), "ebq": f32(params["ebq"]) * scaling,
        "ewk": bf(params["ewk"]), "ebk": f32(params["ebk"]),
        "ewv": bf(params["ewv"]), "ebv": f32(params["ebv"]),
        "ewo": bf(params["ewo"]), "ebo": f32(params["ebo"]),
        "g_ea": f32(params["g_ea"]), "b_ea": f32(params["b_ea"]),
        "w1": bf(params["w1"]), "b1": f32(params["b1"]),
        "w2": bf(params["w2"]), "b2": f32(params["b2"]),
        "g_f": f32(params["g_f"]), "b_f": f32(params["b_f"]),
    }


# ----------------------------- wrapper ---------------------------------------


def transformer_decoder_layer(x_tbe, enc_sbe, self_attn_mask, prepared,
                              num_heads, head_dim, need_attn=True):
    """x_tbe: (T, B, E), enc_sbe: (S, B, E). Returns (x, attn, None) like fairseq."""
    T, B, E = x_tbe.shape
    S = enc_sbe.shape[0]

    # Glue: batch-major activations for the kernel.  In a full decoder stack
    # these transposes (and the inverse at the end) are hoisted outside the
    # per-layer call; the weight casts are already hoisted into
    # prepare_decoder_layer_params().
    x_bte = jnp.transpose(x_tbe, (1, 0, 2)).astype(jnp.float32)        # (B,T,E)
    enc_bse = jnp.transpose(enc_sbe, (1, 0, 2)).astype(jnp.bfloat16)   # (B,S,E)
    mask = self_attn_mask.astype(jnp.float32)                          # (T,T)

    p = prepared
    args = (
        x_bte, enc_bse, mask,
        # self attention
        p["wq"], p["bq"], p["wk"], p["bk"], p["wv"], p["bv"], p["wo"], p["bo"],
        p["g_sa"], p["b_sa"],
        # encoder attention
        p["ewq"], p["ebq"], p["ewk"], p["ebk"], p["ewv"], p["ebv"],
        p["ewo"], p["ebo"], p["g_ea"], p["b_ea"],
        # FFN
        p["w1"], p["b1"], p["w2"], p["b2"], p["g_f"], p["b_f"],
    )

    def const_spec(shape):
        # Weight / mask blocks: constant index_map -> stay VMEM-resident
        # across the (parallel) batch grid axis.
        return pl.BlockSpec(shape, lambda b: (0,) * len(shape))

    in_specs = [
        pl.BlockSpec((1, T, E), lambda b: (b, 0, 0)),   # x
        pl.BlockSpec((1, S, E), lambda b: (b, 0, 0)),   # encoder_out
        const_spec(mask.shape),                         # self_attn_mask
    ] + [const_spec(a.shape) for a in args[3:]]

    out_specs = [pl.BlockSpec((1, T, E), lambda b: (b, 0, 0))]
    out_shape = [jax.ShapeDtypeStruct((B, T, E), jnp.float32)]
    if need_attn:
        out_specs.append(pl.BlockSpec((1, T, S), lambda b: (b, 0, 0)))
        out_shape.append(jax.ShapeDtypeStruct((B, T, S), jnp.float32))

    kernel = functools.partial(decoder_layer_kernel, num_heads=num_heads,
                               head_dim=head_dim, need_attn=need_attn)

    # Grid over batch: uses both TensorCores on v7x, near-neutral on the
    # single-TC v5e/v6e.  For realistic E/F sizes, raise vmem_limit_bytes in
    # CompilerParams and tile the FFN over its hidden dim.
    results = pl.pallas_call(
        kernel,
        out_shape=tuple(out_shape),
        grid_spec=pltpu.PrefetchScalarGridSpec(
            num_scalar_prefetch=0,
            grid=(B,),
            in_specs=in_specs,
            out_specs=out_specs,
            scratch_shapes=[pltpu.VMEM((T, E), jnp.bfloat16)],   # ctx slab
        ),
        compiler_params=pltpu.CompilerParams(
            dimension_semantics=("parallel",)),
    )(*args)

    out_bte = results[0]
    attn = results[1] if need_attn else None
    x_out = jnp.transpose(out_bte, (1, 0, 2))   # (T, B, E)
    return x_out, attn, None


# ----------------------------- pure-JAX reference ----------------------------
# Mirrors the kernel numerics (bf16 matmul operands, fp32 accumulation,
# fp32 softmax / LayerNorm / residuals).


def _ref_forward(x_tbe, enc_sbe, mask, p, num_heads, head_dim):
    bf16, f32 = jnp.bfloat16, jnp.float32
    H, D = num_heads, head_dim
    scaling = float(head_dim) ** -0.5

    def mm(a, b):
        return jnp.dot(a.astype(bf16), b.astype(bf16), preferred_element_type=f32)

    def ln(x, g, b):
        m = jnp.mean(x, -1, keepdims=True)
        v = jnp.mean(jnp.square(x - m), -1, keepdims=True)
        return (x - m) * jax.lax.rsqrt(v + _LN_EPS) * g + b

    def mha(q_in, kv_in, wq, bq, wk, bk, wv, bv, wo, bo, m):
        B, T, E = q_in.shape
        S = kv_in.shape[1]
        q = (mm(q_in, wq) + bq) * scaling
        k = mm(kv_in, wk) + bk
        v = mm(kv_in, wv) + bv
        qh = q.astype(bf16).reshape(B, T, H, D).transpose(0, 2, 1, 3)
        kh = k.astype(bf16).reshape(B, S, H, D).transpose(0, 2, 1, 3)
        vh = v.astype(bf16).reshape(B, S, H, D).transpose(0, 2, 1, 3)
        sc = jnp.einsum("bhtd,bhsd->bhts", qh, kh, preferred_element_type=f32)
        if m is not None:
            sc = sc + m
        pr = jax.nn.softmax(sc, axis=-1)
        ctx = jnp.einsum("bhts,bhsd->bhtd", pr.astype(bf16), vh,
                         preferred_element_type=f32)
        ctx = ctx.transpose(0, 2, 1, 3).reshape(B, T, E)
        return mm(ctx, wo) + bo, pr.mean(axis=1)

    x = jnp.transpose(x_tbe, (1, 0, 2)).astype(f32)
    enc = jnp.transpose(enc_sbe, (1, 0, 2)).astype(f32)

    res = x
    sa, _ = mha(x, x, p["wq"], p["bq"], p["wk"], p["bk"],
                p["wv"], p["bv"], p["wo"], p["bo"], mask)
    x = ln(res + sa, p["g_sa"], p["b_sa"])

    res = x
    ea, attn = mha(x, enc, p["ewq"], p["ebq"], p["ewk"], p["ebk"],
                   p["ewv"], p["ebv"], p["ewo"], p["ebo"], None)
    x = ln(res + ea, p["g_ea"], p["b_ea"])

    res = x
    h1 = jnp.maximum(mm(x, p["w1"]) + p["b1"], 0.0)
    x = ln(res + mm(h1, p["w2"]) + p["b2"], p["g_f"], p["b_f"])
    return jnp.transpose(x, (1, 0, 2)), attn


# ----------------------------- main ------------------------------------------


if __name__ == "__main__":
    T, S, B = 8, 8, 2          # tgt_len, src_len, batch
    E, H = 32, 4               # embed_dim, attention heads
    D = E // H                 # head_dim
    F = 64                     # ffn_embed_dim

    key = jax.random.PRNGKey(0)
    keys = jax.random.split(key, 32)
    ki = iter(keys)

    def w(shape, scale=0.05):
        return (scale * jax.random.normal(next(ki), shape)).astype(jnp.float32)

    # weights stored pre-transposed to (in_features, out_features)
    params = {
        "wq": w((E, E)), "bq": w((1, E)), "wk": w((E, E)), "bk": w((1, E)),
        "wv": w((E, E)), "bv": w((1, E)), "wo": w((E, E)), "bo": w((1, E)),
        "g_sa": 1.0 + w((1, E)), "b_sa": w((1, E)),
        "ewq": w((E, E)), "ebq": w((1, E)), "ewk": w((E, E)), "ebk": w((1, E)),
        "ewv": w((E, E)), "ebv": w((1, E)), "ewo": w((E, E)), "ebo": w((1, E)),
        "g_ea": 1.0 + w((1, E)), "b_ea": w((1, E)),
        "w1": w((E, F)), "b1": w((1, F)), "w2": w((F, E)), "b2": w((1, E)),
        "g_f": 1.0 + w((1, E)), "b_f": w((1, E)),
    }

    x = jax.random.normal(next(ki), (T, B, E), dtype=jnp.float32)
    encoder_out = jax.random.normal(next(ki), (S, B, E), dtype=jnp.float32)

    # causal (future) self-attention mask, additive float
    causal = jnp.tril(jnp.ones((T, T), dtype=bool))
    self_attn_mask = jnp.where(causal, 0.0, -1e30).astype(jnp.float32)

    # one-time weight prep (dtype casts + folded q scaling), hoisted out of the
    # per-call path
    prepared = prepare_decoder_layer_params(params, head_dim=D)

    out, attn, _ = transformer_decoder_layer(
        x, encoder_out, self_attn_mask, prepared, num_heads=H, head_dim=D,
        need_attn=True)
    out = jax.block_until_ready(out)
    attn = jax.block_until_ready(attn)

    ref_out, ref_attn = _ref_forward(x, encoder_out, self_attn_mask, params, H, D)

    assert out.shape == (T, B, E)
    assert attn.shape == (B, T, S)
    assert jnp.allclose(out, ref_out, rtol=2e-2, atol=2e-2), "output mismatch"
    assert jnp.allclose(attn, ref_attn, rtol=2e-2, atol=2e-2), "attn mismatch"

    # need_attn=False path: skips prob accumulation + the (B,T,S) HBM write.
    out_na, attn_na, _ = transformer_decoder_layer(
        x, encoder_out, self_attn_mask, prepared, num_heads=H, head_dim=D,
        need_attn=False)
    out_na = jax.block_until_ready(out_na)
    assert attn_na is None
    assert jnp.allclose(out_na, ref_out, rtol=2e-2, atol=2e-2), "no-attn mismatch"

    print("KERNEL_OK")
</pallas_src>

<mosaic_0001>
module attributes {stable_mosaic.version = 11 : i64} {
  func.func @decoder_layer_kernel(%arg0: i32, %arg1: memref<1x8x32xf32, #tpu.memory_space<vmem>>, %arg2: memref<1x8x32xbf16, #tpu.memory_space<vmem>>, %arg3: memref<8x8xf32, #tpu.memory_space<vmem>>, %arg4: memref<32x32xbf16, #tpu.memory_space<vmem>>, %arg5: memref<1x32xf32, #tpu.memory_space<vmem>>, %arg6: memref<32x32xbf16, #tpu.memory_space<vmem>>, %arg7: memref<1x32xf32, #tpu.memory_space<vmem>>, %arg8: memref<32x32xbf16, #tpu.memory_space<vmem>>, %arg9: memref<1x32xf32, #tpu.memory_space<vmem>>, %arg10: memref<32x32xbf16, #tpu.memory_space<vmem>>, %arg11: memref<1x32xf32, #tpu.memory_space<vmem>>, %arg12: memref<1x32xf32, #tpu.memory_space<vmem>>, %arg13: memref<1x32xf32, #tpu.memory_space<vmem>>, %arg14: memref<32x32xbf16, #tpu.memory_space<vmem>>, %arg15: memref<1x32xf32, #tpu.memory_space<vmem>>, %arg16: memref<32x32xbf16, #tpu.memory_space<vmem>>, %arg17: memref<1x32xf32, #tpu.memory_space<vmem>>, %arg18: memref<32x32xbf16, #tpu.memory_space<vmem>>, %arg19: memref<1x32xf32, #tpu.memory_space<vmem>>, %arg20: memref<32x32xbf16, #tpu.memory_space<vmem>>, %arg21: memref<1x32xf32, #tpu.memory_space<vmem>>, %arg22: memref<1x32xf32, #tpu.memory_space<vmem>>, %arg23: memref<1x32xf32, #tpu.memory_space<vmem>>, %arg24: memref<32x64xbf16, #tpu.memory_space<vmem>>, %arg25: memref<1x64xf32, #tpu.memory_space<vmem>>, %arg26: memref<64x32xbf16, #tpu.memory_space<vmem>>, %arg27: memref<1x32xf32, #tpu.memory_space<vmem>>, %arg28: memref<1x32xf32, #tpu.memory_space<vmem>>, %arg29: memref<1x32xf32, #tpu.memory_space<vmem>>, %arg30: memref<1x8x32xf32, #tpu.memory_space<vmem>>, %arg31: memref<1x8x8xf32, #tpu.memory_space<vmem>>, %arg32: memref<8x32xbf16, #tpu.memory_space<vmem>>) attributes {dimension_semantics = [#tpu.dimension_semantics<parallel>], iteration_bounds = array<i64: 2>, scalar_prefetch = 0 : i64, scratch_operands = 1 : i64, tpu.core_type = #tpu.core_type<tc>, window_params = [{transform_indices = @transform_0, window_bounds = array<i64: 1, 8, 32>}, {transform_indices = @transform_1, window_bounds = array<i64: 1, 8, 32>}, {pipeline_mode = #tpu.pipeline_mode<synchronous>, transform_indices = @transform_2, window_bounds = array<i64: 8, 8>}, {pipeline_mode = #tpu.pipeline_mode<synchronous>, transform_indices = @transform_3, window_bounds = array<i64: 32, 32>}, {pipeline_mode = #tpu.pipeline_mode<synchronous>, transform_indices = @transform_4, window_bounds = array<i64: 1, 32>}, {pipeline_mode = #tpu.pipeline_mode<synchronous>, transform_indices = @transform_5, window_bounds = array<i64: 32, 32>}, {pipeline_mode = #tpu.pipeline_mode<synchronous>, transform_indices = @transform_6, window_bounds = array<i64: 1, 32>}, {pipeline_mode = #tpu.pipeline_mode<synchronous>, transform_indices = @transform_7, window_bounds = array<i64: 32, 32>}, {pipeline_mode = #tpu.pipeline_mode<synchronous>, transform_indices = @transform_8, window_bounds = array<i64: 1, 32>}, {pipeline_mode = #tpu.pipeline_mode<synchronous>, transform_indices = @transform_9, window_bounds = array<i64: 32, 32>}, {pipeline_mode = #tpu.pipeline_mode<synchronous>, transform_indices = @transform_10, window_bounds = array<i64: 1, 32>}, {pipeline_mode = #tpu.pipeline_mode<synchronous>, transform_indices = @transform_11, window_bounds = array<i64: 1, 32>}, {pipeline_mode = #tpu.pipeline_mode<synchronous>, transform_indices = @transform_12, window_bounds = array<i64: 1, 32>}, {pipeline_mode = #tpu.pipeline_mode<synchronous>, transform_indices = @transform_13, window_bounds = array<i64: 32, 32>}, {pipeline_mode = #tpu.pipeline_mode<synchronous>, transform_indices = @transform_14, window_bounds = array<i64: 1, 32>}, {pipeline_mode = #tpu.pipeline_mode<synchronous>, transform_indices = @transform_15, window_bounds = array<i64: 32, 32>}, {pipeline_mode = #tpu.pipeline_mode<synchronous>, transform_indices = @transform_16, window_bounds = array<i64: 1, 32>}, {pipeline_mode = #tpu.pipeline_mode<synchronous>, transform_indices = @transform_17, window_bounds = array<i64: 32, 32>}, {pipeline_mode = #tpu.pipeline_mode<synchronous>, transform_indices = @transform_18, window_bounds = array<i64: 1, 32>}, {pipeline_mode = #tpu.pipeline_mode<synchronous>, transform_indices = @transform_19, window_bounds = array<i64: 32, 32>}, {pipeline_mode = #tpu.pipeline_mode<synchronous>, transform_indices = @transform_20, window_bounds = array<i64: 1, 32>}, {pipeline_mode = #tpu.pipeline_mode<synchronous>, transform_indices = @transform_21, window_bounds = array<i64: 1, 32>}, {pipeline_mode = #tpu.pipeline_mode<synchronous>, transform_indices = @transform_22, window_bounds = array<i64: 1, 32>}, {pipeline_mode = #tpu.pipeline_mode<synchronous>, transform_indices = @transform_23, window_bounds = array<i64: 32, 64>}, {pipeline_mode = #tpu.pipeline_mode<synchronous>, transform_indices = @transform_24, window_bounds = array<i64: 1, 64>}, {pipeline_mode = #tpu.pipeline_mode<synchronous>, transform_indices = @transform_25, window_bounds = array<i64: 64, 32>}, {pipeline_mode = #tpu.pipeline_mode<synchronous>, transform_indices = @transform_26, window_bounds = array<i64: 1, 32>}, {pipeline_mode = #tpu.pipeline_mode<synchronous>, transform_indices = @transform_27, window_bounds = array<i64: 1, 32>}, {pipeline_mode = #tpu.pipeline_mode<synchronous>, transform_indices = @transform_28, window_bounds = array<i64: 1, 32>}, {transform_indices = @transform_29, window_bounds = array<i64: 1, 8, 32>}, {transform_indices = @transform_30, window_bounds = array<i64: 1, 8, 8>}]} {
    %c0 = arith.constant 0 : index
    %c0_0 = arith.constant 0 : index
    %c0_1 = arith.constant 0 : index
    %0 = vector.load %arg1[%c0, %c0_0, %c0_1] : memref<1x8x32xf32, #tpu.memory_space<vmem>>, vector<1x8x32xf32>
    %1 = vector.shape_cast %0 : vector<1x8x32xf32> to vector<8x32xf32>
    %c0_2 = arith.constant 0 : index
    %c0_3 = arith.constant 0 : index
    %c0_4 = arith.constant 0 : index
    %2 = vector.load %arg2[%c0_2, %c0_3, %c0_4] : memref<1x8x32xbf16, #tpu.memory_space<vmem>>, vector<1x8x32xbf16>
    %3 = vector.shape_cast %2 : vector<1x8x32xbf16> to vector<8x32xbf16>
    %4 = arith.truncf %1 : vector<8x32xf32> to vector<8x32xbf16>
    %c0_5 = arith.constant 0 : index
    %c0_6 = arith.constant 0 : index
    %5 = vector.load %arg3[%c0_5, %c0_6] : memref<8x8xf32, #tpu.memory_space<vmem>>, vector<8x8xf32>
    %c0_7 = arith.constant 0 : index
    %c0_8 = arith.constant 0 : index
    %6 = vector.load %arg4[%c0_7, %c0_8] : memref<32x32xbf16, #tpu.memory_space<vmem>>, vector<32x32xbf16>
    %cst = arith.constant dense<0.000000e+00> : vector<8x32xf32>
    %7 = tpu.matmul %4, %6, %cst {dimension_numbers = #tpu.dot_dimension_numbers<[1], [0], [0], [1], [0, 0, 1, 1], [], []>} : vector<8x32xbf16>, vector<32x32xbf16>, vector<8x32xf32> -> vector<8x32xf32>
    %c0_9 = arith.constant 0 : index
    %c0_10 = arith.constant 0 : index
    %8 = vector.load %arg5[%c0_9, %c0_10] : memref<1x32xf32, #tpu.memory_space<vmem>>, vector<1x32xf32>
    %9 = vector.broadcast %8 : vector<1x32xf32> to vector<8x32xf32>
    %10 = arith.addf %7, %9 : vector<8x32xf32>
    %c0_11 = arith.constant 0 : index
    %c0_12 = arith.constant 0 : index
    %11 = vector.load %arg6[%c0_11, %c0_12] : memref<32x32xbf16, #tpu.memory_space<vmem>>, vector<32x32xbf16>
    %cst_13 = arith.constant dense<0.000000e+00> : vector<8x32xf32>
    %12 = tpu.matmul %4, %11, %cst_13 {dimension_numbers = #tpu.dot_dimension_numbers<[1], [0], [0], [1], [0, 0, 1, 1], [], []>} : vector<8x32xbf16>, vector<32x32xbf16>, vector<8x32xf32> -> vector<8x32xf32>
    %c0_14 = arith.constant 0 : index
    %c0_15 = arith.constant 0 : index
    %13 = vector.load %arg7[%c0_14, %c0_15] : memref<1x32xf32, #tpu.memory_space<vmem>>, vector<1x32xf32>
    %14 = vector.broadcast %13 : vector<1x32xf32> to vector<8x32xf32>
    %15 = arith.addf %12, %14 : vector<8x32xf32>
    %c0_16 = arith.constant 0 : index
    %c0_17 = arith.constant 0 : index
    %16 = vector.load %arg8[%c0_16, %c0_17] : memref<32x32xbf16, #tpu.memory_space<vmem>>, vector<32x32xbf16>
    %cst_18 = arith.constant dense<0.000000e+00> : vector<8x32xf32>
    %17 = tpu.matmul %4, %16, %cst_18 {dimension_numbers = #tpu.dot_dimension_numbers<[1], [0], [0], [1], [0, 0, 1, 1], [], []>} : vector<8x32xbf16>, vector<32x32xbf16>, vector<8x32xf32> -> vector<8x32xf32>
    %c0_19 = arith.constant 0 : index
    %c0_20 = arith.constant 0 : index
    %18 = vector.load %arg9[%c0_19, %c0_20] : memref<1x32xf32, #tpu.memory_space<vmem>>, vector<1x32xf32>
    %19 = vector.broadcast %18 : vector<1x32xf32> to vector<8x32xf32>
    %20 = arith.addf %17, %19 : vector<8x32xf32>
    %21 = arith.truncf %10 : vector<8x32xf32> to vector<8x32xbf16>
    %22 = arith.truncf %15 : vector<8x32xf32> to vector<8x32xbf16>
    %23 = arith.truncf %20 : vector<8x32xf32> to vector<8x32xbf16>
    %24 = vector.extract_strided_slice %21 {offsets = [0, 0], sizes = [8, 8], strides = [1, 1]} : vector<8x32xbf16> to vector<8x8xbf16>
    %25 = vector.extract_strided_slice %22 {offsets = [0, 0], sizes = [8, 8], strides = [1, 1]} : vector<8x32xbf16> to vector<8x8xbf16>
    %26 = vector.extract_strided_slice %23 {offsets = [0, 0], sizes = [8, 8], strides = [1, 1]} : vector<8x32xbf16> to vector<8x8xbf16>
    "tpu.trace_start"() <{level = 10 : i32, message = "qd,kd->qk"}> : () -> ()
    %cst_21 = arith.constant dense<0.000000e+00> : vector<8x8xf32>
    %27 = tpu.matmul %24, %25, %cst_21 {dimension_numbers = #tpu.dot_dimension_numbers<[1], [1], [0], [0], [0, 0, 1, 0], [], []>} : vector<8x8xbf16>, vector<8x8xbf16>, vector<8x8xf32> -> vector<8x8xf32>
    "tpu.trace_stop"() : () -> ()
    %28 = arith.addf %27, %5 : vector<8x8xf32>
    %cst_22 = arith.constant dense<0xFF800000> : vector<8xf32>
    %29 = vector.multi_reduction <maximumf>, %28, %cst_22 [1] : vector<8x8xf32> to vector<8xf32>
    %30 = vector.shape_cast %29 : vector<8xf32> to vector<8x1xf32>
    %31 = vector.broadcast %30 : vector<8x1xf32> to vector<8x8xf32>
    %32 = arith.subf %28, %31 : vector<8x8xf32>
    %33 = math.exp %32 : vector<8x8xf32>
    %cst_23 = arith.constant dense<0.000000e+00> : vector<8xf32>
    %34 = vector.multi_reduction <add>, %33, %cst_23 [1] : vector<8x8xf32> to vector<8xf32>
    %35 = vector.shape_cast %34 : vector<8xf32> to vector<8x1xf32>
    %36 = tpu.reciprocal %35 {approx = true} : vector<8x1xf32> -> vector<8x1xf32>
    %37 = vector.broadcast %36 : vector<8x1xf32> to vector<8x8xf32>
    %38 = arith.mulf %33, %37 : vector<8x8xf32>
    %39 = arith.truncf %38 : vector<8x8xf32> to vector<8x8xbf16>
    "tpu.trace_start"() <{level = 10 : i32, message = "qk,kd->qd"}> : () -> ()
    %cst_24 = arith.constant dense<0.000000e+00> : vector<8x8xf32>
    %40 = tpu.matmul %39, %26, %cst_24 {dimension_numbers = #tpu.dot_dimension_numbers<[1], [0], [0], [1], [0, 0, 1, 1], [], []>} : vector<8x8xbf16>, vector<8x8xbf16>, vector<8x8xf32> -> vector<8x8xf32>
    "tpu.trace_stop"() : () -> ()
    %41 = arith.truncf %40 : vector<8x8xf32> to vector<8x8xbf16>
    %c0_25 = arith.constant 0 : index
    %c0_26 = arith.constant 0 : index
    %42 = vector.load %arg32[%c0_25, %c0_26] : memref<8x32xbf16, #tpu.memory_space<vmem>>, vector<8x8xbf16>
    tpu.vector_store %arg32[%c0_25, %c0_26], %41 {strides = array<i32>} : memref<8x32xbf16, #tpu.memory_space<vmem>>, vector<8x8xbf16>,
    %43 = vector.extract_strided_slice %21 {offsets = [0, 8], sizes = [8, 8], strides = [1, 1]} : vector<8x32xbf16> to vector<8x8xbf16>
    %44 = vector.extract_strided_slice %22 {offsets = [0, 8], sizes = [8, 8], strides = [1, 1]} : vector<8x32xbf16> to vector<8x8xbf16>
    %45 = vector.extract_strided_slice %23 {offsets = [0, 8], sizes = [8, 8], strides = [1, 1]} : vector<8x32xbf16> to vector<8x8xbf16>
    "tpu.trace_start"() <{level = 10 : i32, message = "qd,kd->qk"}> : () -> ()
    %cst_27 = arith.constant dense<0.000000e+00> : vector<8x8xf32>
    %46 = tpu.matmul %43, %44, %cst_27 {dimension_numbers = #tpu.dot_dimension_numbers<[1], [1], [0], [0], [0, 0, 1, 0], [], []>} : vector<8x8xbf16>, vector<8x8xbf16>, vector<8x8xf32> -> vector<8x8xf32>
    "tpu.trace_stop"() : () -> ()
    %47 = arith.addf %46, %5 : vector<8x8xf32>
    %cst_28 = arith.constant dense<0xFF800000> : vector<8xf32>
    %48 = vector.multi_reduction <maximumf>, %47, %cst_28 [1] : vector<8x8xf32> to vector<8xf32>
    %49 = vector.shape_cast %48 : vector<8xf32> to vector<8x1xf32>
    %50 = vector.broadcast %49 : vector<8x1xf32> to vector<8x8xf32>
    %51 = arith.subf %47, %50 : vector<8x8xf32>
    %52 = math.exp %51 : vector<8x8xf32>
    %cst_29 = arith.constant dense<0.000000e+00> : vector<8xf32>
    %53 = vector.multi_reduction <add>, %52, %cst_29 [1] : vector<8x8xf32> to vector<8xf32>
    %54 = vector.shape_cast %53 : vector<8xf32> to vector<8x1xf32>
    %55 = tpu.reciprocal %54 {approx = true} : vector<8x1xf32> -> vector<8x1xf32>
    %56 = vector.broadcast %55 : vector<8x1xf32> to vector<8x8xf32>
    %57 = arith.mulf %52, %56 : vector<8x8xf32>
    %58 = arith.truncf %57 : vector<8x8xf32> to vector<8x8xbf16>
    "tpu.trace_start"() <{level = 10 : i32, message = "qk,kd->qd"}> : () -> ()
    %cst_30 = arith.constant dense<0.000000e+00> : vector<8x8xf32>
    %59 = tpu.matmul %58, %45, %cst_30 {dimension_numbers = #tpu.dot_dimension_numbers<[1], [0], [0], [1], [0, 0, 1, 1], [], []>} : vector<8x8xbf16>, vector<8x8xbf16>, vector<8x8xf32> -> vector<8x8xf32>
    "tpu.trace_stop"() : () -> ()
    %60 = arith.truncf %59 : vector<8x8xf32> to vector<8x8xbf16>
    %c0_31 = arith.constant 0 : index
    %c8 = arith.constant 8 : index
    %61 = vector.load %arg32[%c0_31, %c8] : memref<8x32xbf16, #tpu.memory_space<vmem>>, vector<8x8xbf16>
    tpu.vector_store %arg32[%c0_31, %c8], %60 {strides = array<i32>} : memref<8x32xbf16, #tpu.memory_space<vmem>>, vector<8x8xbf16>,
    %62 = vector.extract_strided_slice %21 {offsets = [0, 16], sizes = [8, 8], strides = [1, 1]} : vector<8x32xbf16> to vector<8x8xbf16>
    %63 = vector.extract_strided_slice %22 {offsets = [0, 16], sizes = [8, 8], strides = [1, 1]} : vector<8x32xbf16> to vector<8x8xbf16>
    %64 = vector.extract_strided_slice %23 {offsets = [0, 16], sizes = [8, 8], strides = [1, 1]} : vector<8x32xbf16> to vector<8x8xbf16>
    "tpu.trace_start"() <{level = 10 : i32, message = "qd,kd->qk"}> : () -> ()
    %cst_32 = arith.constant dense<0.000000e+00> : vector<8x8xf32>
    %65 = tpu.matmul %62, %63, %cst_32 {dimension_numbers = #tpu.dot_dimension_numbers<[1], [1], [0], [0], [0, 0, 1, 0], [], []>} : vector<8x8xbf16>, vector<8x8xbf16>, vector<8x8xf32> -> vector<8x8xf32>
    "tpu.trace_stop"() : () -> ()
    %66 = arith.addf %65, %5 : vector<8x8xf32>
    %cst_33 = arith.constant dense<0xFF800000> : vector<8xf32>
    %67 = vector.multi_reduction <maximumf>, %66, %cst_33 [1] : vector<8x8xf32> to vector<8xf32>
    %68 = vector.shape_cast %67 : vector<8xf32> to vector<8x1xf32>
    %69 = vector.broadcast %68 : vector<8x1xf32> to vector<8x8xf32>
    %70 = arith.subf %66, %69 : vector<8x8xf32>
    %71 = math.exp %70 : vector<8x8xf32>
    %cst_34 = arith.constant dense<0.000000e+00> : vector<8xf32>
    %72 = vector.multi_reduction <add>, %71, %cst_34 [1] : vector<8x8xf32> to vector<8xf32>
    %73 = vector.shape_cast %72 : vector<8xf32> to vector<8x1xf32>
    %74 = tpu.reciprocal %73 {approx = true} : vector<8x1xf32> -> vector<8x1xf32>
    %75 = vector.broadcast %74 : vector<8x1xf32> to vector<8x8xf32>
    %76 = arith.mulf %71, %75 : vector<8x8xf32>
    %77 = arith.truncf %76 : vector<8x8xf32> to vector<8x8xbf16>
    "tpu.trace_start"() <{level = 10 : i32, message = "qk,kd->qd"}> : () -> ()
    %cst_35 = arith.constant dense<0.000000e+00> : vector<8x8xf32>
    %78 = tpu.matmul %77, %64, %cst_35 {dimension_numbers = #tpu.dot_dimension_numbers<[1], [0], [0], [1], [0, 0, 1, 1], [], []>} : vector<8x8xbf16>, vector<8x8xbf16>, vector<8x8xf32> -> vector<8x8xf32>
    "tpu.trace_stop"() : () -> ()
    %79 = arith.truncf %78 : vector<8x8xf32> to vector<8x8xbf16>
    %c0_36 = arith.constant 0 : index
    %c16 = arith.constant 16 : index
    %80 = vector.load %arg32[%c0_36, %c16] : memref<8x32xbf16, #tpu.memory_space<vmem>>, vector<8x8xbf16>
    tpu.vector_store %arg32[%c0_36, %c16], %79 {strides = array<i32>} : memref<8x32xbf16, #tpu.memory_space<vmem>>, vector<8x8xbf16>,
    %81 = vector.extract_strided_slice %21 {offsets = [0, 24], sizes = [8, 8], strides = [1, 1]} : vector<8x32xbf16> to vector<8x8xbf16>
    %82 = vector.extract_strided_slice %22 {offsets = [0, 24], sizes = [8, 8], strides = [1, 1]} : vector<8x32xbf16> to vector<8x8xbf16>
    %83 = vector.extract_strided_slice %23 {offsets = [0, 24], sizes = [8, 8], strides = [1, 1]} : vector<8x32xbf16> to vector<8x8xbf16>
    "tpu.trace_start"() <{level = 10 : i32, message = "qd,kd->qk"}> : () -> ()
    %cst_37 = arith.constant dense<0.000000e+00> : vector<8x8xf32>
    %84 = tpu.matmul %81, %82, %cst_37 {dimension_numbers = #tpu.dot_dimension_numbers<[1], [1], [0], [0], [0, 0, 1, 0], [], []>} : vector<8x8xbf16>, vector<8x8xbf16>, vector<8x8xf32> -> vector<8x8xf32>
    "tpu.trace_stop"() : () -> ()
    %85 = arith.addf %84, %5 : vector<8x8xf32>
    %cst_38 = arith.constant dense<0xFF800000> : vector<8xf32>
    %86 = vector.multi_reduction <maximumf>, %85, %cst_38 [1] : vector<8x8xf32> to vector<8xf32>
    %87 = vector.shape_cast %86 : vector<8xf32> to vector<8x1xf32>
    %88 = vector.broadcast %87 : vector<8x1xf32> to vector<8x8xf32>
    %89 = arith.subf %85, %88 : vector<8x8xf32>
    %90 = math.exp %89 : vector<8x8xf32>
    %cst_39 = arith.constant dense<0.000000e+00> : vector<8xf32>
    %91 = vector.multi_reduction <add>, %90, %cst_39 [1] : vector<8x8xf32> to vector<8xf32>
    %92 = vector.shape_cast %91 : vector<8xf32> to vector<8x1xf32>
    %93 = tpu.reciprocal %92 {approx = true} : vector<8x1xf32> -> vector<8x1xf32>
    %94 = vector.broadcast %93 : vector<8x1xf32> to vector<8x8xf32>
    %95 = arith.mulf %90, %94 : vector<8x8xf32>
    %96 = arith.truncf %95 : vector<8x8xf32> to vector<8x8xbf16>
    "tpu.trace_start"() <{level = 10 : i32, message = "qk,kd->qd"}> : () -> ()
    %cst_40 = arith.constant dense<0.000000e+00> : vector<8x8xf32>
    %97 = tpu.matmul %96, %83, %cst_40 {dimension_numbers = #tpu.dot_dimension_numbers<[1], [0], [0], [1], [0, 0, 1, 1], [], []>} : vector<8x8xbf16>, vector<8x8xbf16>, vector<8x8xf32> -> vector<8x8xf32>
    "tpu.trace_stop"() : () -> ()
    %98 = arith.truncf %97 : vector<8x8xf32> to vector<8x8xbf16>
    %c0_41 = arith.constant 0 : index
    %c24 = arith.constant 24 : index
    %99 = vector.load %arg32[%c0_41, %c24] : memref<8x32xbf16, #tpu.memory_space<vmem>>, vector<8x8xbf16>
    tpu.vector_store %arg32[%c0_41, %c24], %98 {strides = array<i32>} : memref<8x32xbf16, #tpu.memory_space<vmem>>, vector<8x8xbf16>,
    %c0_42 = arith.constant 0 : index
    %c0_43 = arith.constant 0 : index
    %100 = vector.load %arg32[%c0_42, %c0_43] : memref<8x32xbf16, #tpu.memory_space<vmem>>, vector<8x32xbf16>
    %c0_44 = arith.constant 0 : index
    %c0_45 = arith.constant 0 : index
    %101 = vector.load %arg10[%c0_44, %c0_45] : memref<32x32xbf16, #tpu.memory_space<vmem>>, vector<32x32xbf16>
    %cst_46 = arith.constant dense<0.000000e+00> : vector<8x32xf32>
    %102 = tpu.matmul %100, %101, %cst_46 {dimension_numbers = #tpu.dot_dimension_numbers<[1], [0], [0], [1], [0, 0, 1, 1], [], []>} : vector<8x32xbf16>, vector<32x32xbf16>, vector<8x32xf32> -> vector<8x32xf32>
    %c0_47 = arith.constant 0 : index
    %c0_48 = arith.constant 0 : index
    %103 = vector.load %arg11[%c0_47, %c0_48] : memref<1x32xf32, #tpu.memory_space<vmem>>, vector<1x32xf32>
    %104 = vector.broadcast %103 : vector<1x32xf32> to vector<8x32xf32>
    %105 = arith.addf %102, %104 : vector<8x32xf32>
    %106 = arith.addf %1, %105 : vector<8x32xf32>
    %c0_49 = arith.constant 0 : index
    %c0_50 = arith.constant 0 : index
    %107 = vector.load %arg12[%c0_49, %c0_50] : memref<1x32xf32, #tpu.memory_space<vmem>>, vector<1x32xf32>
    %c0_51 = arith.constant 0 : index
    %c0_52 = arith.constant 0 : index
    %108 = vector.load %arg13[%c0_51, %c0_52] : memref<1x32xf32, #tpu.memory_space<vmem>>, vector<1x32xf32>
    %cst_53 = arith.constant dense<0.000000e+00> : vector<8xf32>
    %109 = vector.multi_reduction <add>, %106, %cst_53 [1] : vector<8x32xf32> to vector<8xf32>
    %110 = vector.shape_cast %109 : vector<8xf32> to vector<8x1xf32>
    %cst_54 = arith.constant 3.200000e+01 : f32
    %111 = vector.broadcast %cst_54 : f32 to vector<8x1xf32>
    %112 = arith.divf %110, %111 : vector<8x1xf32>
    %113 = vector.broadcast %112 : vector<8x1xf32> to vector<8x32xf32>
    %114 = arith.subf %106, %113 : vector<8x32xf32>
    %115 = arith.mulf %114, %114 : vector<8x32xf32>
    %cst_55 = arith.constant dense<0.000000e+00> : vector<8xf32>
    %116 = vector.multi_reduction <add>, %115, %cst_55 [1] : vector<8x32xf32> to vector<8xf32>
    %117 = vector.shape_cast %116 : vector<8xf32> to vector<8x1xf32>
    %cst_56 = arith.constant 3.200000e+01 : f32
    %118 = vector.broadcast %cst_56 : f32 to vector<8x1xf32>
    %119 = arith.divf %117, %118 : vector<8x1xf32>
    %120 = vector.broadcast %112 : vector<8x1xf32> to vector<8x32xf32>
    %121 = arith.subf %106, %120 : vector<8x32xf32>
    %cst_57 = arith.constant 9.99999974E-6 : f32
    %122 = vector.broadcast %cst_57 : f32 to vector<8x1xf32>
    %123 = arith.addf %119, %122 : vector<8x1xf32>
    %124 = math.rsqrt %123 : vector<8x1xf32>
    %125 = vector.broadcast %124 : vector<8x1xf32> to vector<8x32xf32>
    %126 = arith.mulf %121, %125 : vector<8x32xf32>
    %127 = vector.broadcast %107 : vector<1x32xf32> to vector<8x32xf32>
    %128 = arith.mulf %126, %127 : vector<8x32xf32>
    %129 = vector.broadcast %108 : vector<1x32xf32> to vector<8x32xf32>
    %130 = arith.addf %128, %129 : vector<8x32xf32>
    %131 = arith.truncf %130 : vector<8x32xf32> to vector<8x32xbf16>
    %c0_58 = arith.constant 0 : index
    %c0_59 = arith.constant 0 : index
    %132 = vector.load %arg14[%c0_58, %c0_59] : memref<32x32xbf16, #tpu.memory_space<vmem>>, vector<32x32xbf16>
    %cst_60 = arith.constant dense<0.000000e+00> : vector<8x32xf32>
    %133 = tpu.matmul %131, %132, %cst_60 {dimension_numbers = #tpu.dot_dimension_numbers<[1], [0], [0], [1], [0, 0, 1, 1], [], []>} : vector<8x32xbf16>, vector<32x32xbf16>, vector<8x32xf32> -> vector<8x32xf32>
    %c0_61 = arith.constant 0 : index
    %c0_62 = arith.constant 0 : index
    %134 = vector.load %arg15[%c0_61, %c0_62] : memref<1x32xf32, #tpu.memory_space<vmem>>, vector<1x32xf32>
    %135 = vector.broadcast %134 : vector<1x32xf32> to vector<8x32xf32>
    %136 = arith.addf %133, %135 : vector<8x32xf32>
    %c0_63 = arith.constant 0 : index
    %c0_64 = arith.constant 0 : index
    %137 = vector.load %arg16[%c0_63, %c0_64] : memref<32x32xbf16, #tpu.memory_space<vmem>>, vector<32x32xbf16>
    %cst_65 = arith.constant dense<0.000000e+00> : vector<8x32xf32>
    %138 = tpu.matmul %3, %137, %cst_65 {dimension_numbers = #tpu.dot_dimension_numbers<[1], [0], [0], [1], [0, 0, 1, 1], [], []>} : vector<8x32xbf16>, vector<32x32xbf16>, vector<8x32xf32> -> vector<8x32xf32>
    %c0_66 = arith.constant 0 : index
    %c0_67 = arith.constant 0 : index
    %139 = vector.load %arg17[%c0_66, %c0_67] : memref<1x32xf32, #tpu.memory_space<vmem>>, vector<1x32xf32>
    %140 = vector.broadcast %139 : vector<1x32xf32> to vector<8x32xf32>
    %141 = arith.addf %138, %140 : vector<8x32xf32>
    %c0_68 = arith.constant 0 : index
    %c0_69 = arith.constant 0 : index
    %142 = vector.load %arg18[%c0_68, %c0_69] : memref<32x32xbf16, #tpu.memory_space<vmem>>, vector<32x32xbf16>
    %cst_70 = arith.constant dense<0.000000e+00> : vector<8x32xf32>
    %143 = tpu.matmul %3, %142, %cst_70 {dimension_numbers = #tpu.dot_dimension_numbers<[1], [0], [0], [1], [0, 0, 1, 1], [], []>} : vector<8x32xbf16>, vector<32x32xbf16>, vector<8x32xf32> -> vector<8x32xf32>
    %c0_71 = arith.constant 0 : index
    %c0_72 = arith.constant 0 : index
    %144 = vector.load %arg19[%c0_71, %c0_72] : memref<1x32xf32, #tpu.memory_space<vmem>>, vector<1x32xf32>
    %145 = vector.broadcast %144 : vector<1x32xf32> to vector<8x32xf32>
    %146 = arith.addf %143, %145 : vector<8x32xf32>
    %147 = arith.truncf %136 : vector<8x32xf32> to vector<8x32xbf16>
    %148 = arith.truncf %141 : vector<8x32xf32> to vector<8x32xbf16>
    %149 = arith.truncf %146 : vector<8x32xf32> to vector<8x32xbf16>
    %150 = vector.extract_strided_slice %147 {offsets = [0, 0], sizes = [8, 8], strides = [1, 1]} : vector<8x32xbf16> to vector<8x8xbf16>
    %151 = vector.extract_strided_slice %148 {offsets = [0, 0], sizes = [8, 8], strides = [1, 1]} : vector<8x32xbf16> to vector<8x8xbf16>
    %152 = vector.extract_strided_slice %149 {offsets = [0, 0], sizes = [8, 8], strides = [1, 1]} : vector<8x32xbf16> to vector<8x8xbf16>
    "tpu.trace_start"() <{level = 10 : i32, message = "qd,kd->qk"}> : () -> ()
    %cst_73 = arith.constant dense<0.000000e+00> : vector<8x8xf32>
    %153 = tpu.matmul %150, %151, %cst_73 {dimension_numbers = #tpu.dot_dimension_numbers<[1], [1], [0], [0], [0, 0, 1, 0], [], []>} : vector<8x8xbf16>, vector<8x8xbf16>, vector<8x8xf32> -> vector<8x8xf32>
    "tpu.trace_stop"() : () -> ()
    %cst_74 = arith.constant dense<0xFF800000> : vector<8xf32>
    %154 = vector.multi_reduction <maximumf>, %153, %cst_74 [1] : vector<8x8xf32> to vector<8xf32>
    %155 = vector.shape_cast %154 : vector<8xf32> to vector<8x1xf32>
    %156 = vector.broadcast %155 : vector<8x1xf32> to vector<8x8xf32>
    %157 = arith.subf %153, %156 : vector<8x8xf32>
    %158 = math.exp %157 : vector<8x8xf32>
    %cst_75 = arith.constant dense<0.000000e+00> : vector<8xf32>
    %159 = vector.multi_reduction <add>, %158, %cst_75 [1] : vector<8x8xf32> to vector<8xf32>
    %160 = vector.shape_cast %159 : vector<8xf32> to vector<8x1xf32>
    %161 = vector.broadcast %160 : vector<8x1xf32> to vector<8x8xf32>
    %162 = arith.divf %158, %161 : vector<8x8xf32>
    %163 = arith.truncf %162 : vector<8x8xf32> to vector<8x8xbf16>
    "tpu.trace_start"() <{level = 10 : i32, message = "qk,kd->qd"}> : () -> ()
    %cst_76 = arith.constant dense<0.000000e+00> : vector<8x8xf32>
    %164 = tpu.matmul %163, %152, %cst_76 {dimension_numbers = #tpu.dot_dimension_numbers<[1], [0], [0], [1], [0, 0, 1, 1], [], []>} : vector<8x8xbf16>, vector<8x8xbf16>, vector<8x8xf32> -> vector<8x8xf32>
    "tpu.trace_stop"() : () -> ()
    %165 = arith.truncf %164 : vector<8x8xf32> to vector<8x8xbf16>
    %c0_77 = arith.constant 0 : index
    %c0_78 = arith.constant 0 : index
    %166 = vector.load %arg32[%c0_77, %c0_78] : memref<8x32xbf16, #tpu.memory_space<vmem>>, vector<8x8xbf16>
    tpu.vector_store %arg32[%c0_77, %c0_78], %165 {strides = array<i32>} : memref<8x32xbf16, #tpu.memory_space<vmem>>, vector<8x8xbf16>,
    %167 = vector.extract_strided_slice %147 {offsets = [0, 8], sizes = [8, 8], strides = [1, 1]} : vector<8x32xbf16> to vector<8x8xbf16>
    %168 = vector.extract_strided_slice %148 {offsets = [0, 8], sizes = [8, 8], strides = [1, 1]} : vector<8x32xbf16> to vector<8x8xbf16>
    %169 = vector.extract_strided_slice %149 {offsets = [0, 8], sizes = [8, 8], strides = [1, 1]} : vector<8x32xbf16> to vector<8x8xbf16>
    "tpu.trace_start"() <{level = 10 : i32, message = "qd,kd->qk"}> : () -> ()
    %cst_79 = arith.constant dense<0.000000e+00> : vector<8x8xf32>
    %170 = tpu.matmul %167, %168, %cst_79 {dimension_numbers = #tpu.dot_dimension_numbers<[1], [1], [0], [0], [0, 0, 1, 0], [], []>} : vector<8x8xbf16>, vector<8x8xbf16>, vector<8x8xf32> -> vector<8x8xf32>
    "tpu.trace_stop"() : () -> ()
    %cst_80 = arith.constant dense<0xFF800000> : vector<8xf32>
    %171 = vector.multi_reduction <maximumf>, %170, %cst_80 [1] : vector<8x8xf32> to vector<8xf32>
    %172 = vector.shape_cast %171 : vector<8xf32> to vector<8x1xf32>
    %173 = vector.broadcast %172 : vector<8x1xf32> to vector<8x8xf32>
    %174 = arith.subf %170, %173 : vector<8x8xf32>
    %175 = math.exp %174 : vector<8x8xf32>
    %cst_81 = arith.constant dense<0.000000e+00> : vector<8xf32>
    %176 = vector.multi_reduction <add>, %175, %cst_81 [1] : vector<8x8xf32> to vector<8xf32>
    %177 = vector.shape_cast %176 : vector<8xf32> to vector<8x1xf32>
    %178 = vector.broadcast %177 : vector<8x1xf32> to vector<8x8xf32>
    %179 = arith.divf %175, %178 : vector<8x8xf32>
    %180 = arith.truncf %179 : vector<8x8xf32> to vector<8x8xbf16>
    "tpu.trace_start"() <{level = 10 : i32, message = "qk,kd->qd"}> : () -> ()
    %cst_82 = arith.constant dense<0.000000e+00> : vector<8x8xf32>
    %181 = tpu.matmul %180, %169, %cst_82 {dimension_numbers = #tpu.dot_dimension_numbers<[1], [0], [0], [1], [0, 0, 1, 1], [], []>} : vector<8x8xbf16>, vector<8x8xbf16>, vector<8x8xf32> -> vector<8x8xf32>
    "tpu.trace_stop"() : () -> ()
    %182 = arith.truncf %181 : vector<8x8xf32> to vector<8x8xbf16>
    %c0_83 = arith.constant 0 : index
    %c8_84 = arith.constant 8 : index
    %183 = vector.load %arg32[%c0_83, %c8_84] : memref<8x32xbf16, #tpu.memory_space<vmem>>, vector<8x8xbf16>
    tpu.vector_store %arg32[%c0_83, %c8_84], %182 {strides = array<i32>} : memref<8x32xbf16, #tpu.memory_space<vmem>>, vector<8x8xbf16>,
    %184 = arith.addf %162, %179 : vector<8x8xf32>
    %185 = vector.extract_strided_slice %147 {offsets = [0, 16], sizes = [8, 8], strides = [1, 1]} : vector<8x32xbf16> to vector<8x8xbf16>
    %186 = vector.extract_strided_slice %148 {offsets = [0, 16], sizes = [8, 8], strides = [1, 1]} : vector<8x32xbf16> to vector<8x8xbf16>
    %187 = vector.extract_strided_slice %149 {offsets = [0, 16], sizes = [8, 8], strides = [1, 1]} : vector<8x32xbf16> to vector<8x8xbf16>
    "tpu.trace_start"() <{level = 10 : i32, message = "qd,kd->qk"}> : () -> ()
    %cst_85 = arith.constant dense<0.000000e+00> : vector<8x8xf32>
    %188 = tpu.matmul %185, %186, %cst_85 {dimension_numbers = #tpu.dot_dimension_numbers<[1], [1], [0], [0], [0, 0, 1, 0], [], []>} : vector<8x8xbf16>, vector<8x8xbf16>, vector<8x8xf32> -> vector<8x8xf32>
    "tpu.trace_stop"() : () -> ()
    %cst_86 = arith.constant dense<0xFF800000> : vector<8xf32>
    %189 = vector.multi_reduction <maximumf>, %188, %cst_86 [1] : vector<8x8xf32> to vector<8xf32>
    %190 = vector.shape_cast %189 : vector<8xf32> to vector<8x1xf32>
    %191 = vector.broadcast %190 : vector<8x1xf32> to vector<8x8xf32>
    %192 = arith.subf %188, %191 : vector<8x8xf32>
    %193 = math.exp %192 : vector<8x8xf32>
    %cst_87 = arith.constant dense<0.000000e+00> : vector<8xf32>
    %194 = vector.multi_reduction <add>, %193, %cst_87 [1] : vector<8x8xf32> to vector<8xf32>
    %195 = vector.shape_cast %194 : vector<8xf32> to vector<8x1xf32>
    %196 = vector.broadcast %195 : vector<8x1xf32> to vector<8x8xf32>
    %197 = arith.divf %193, %196 : vector<8x8xf32>
    %198 = arith.truncf %197 : vector<8x8xf32> to vector<8x8xbf16>
    "tpu.trace_start"() <{level = 10 : i32, message = "qk,kd->qd"}> : () -> ()
    %cst_88 = arith.constant dense<0.000000e+00> : vector<8x8xf32>
    %199 = tpu.matmul %198, %187, %cst_88 {dimension_numbers = #tpu.dot_dimension_numbers<[1], [0], [0], [1], [0, 0, 1, 1], [], []>} : vector<8x8xbf16>, vector<8x8xbf16>, vector<8x8xf32> -> vector<8x8xf32>
    "tpu.trace_stop"() : () -> ()
    %200 = arith.truncf %199 : vector<8x8xf32> to vector<8x8xbf16>
    %c0_89 = arith.constant 0 : index
    %c16_90 = arith.constant 16 : index
    %201 = vector.load %arg32[%c0_89, %c16_90] : memref<8x32xbf16, #tpu.memory_space<vmem>>, vector<8x8xbf16>
    tpu.vector_store %arg32[%c0_89, %c16_90], %200 {strides = array<i32>} : memref<8x32xbf16, #tpu.memory_space<vmem>>, vector<8x8xbf16>,
    %202 = arith.addf %184, %197 : vector<8x8xf32>
    %203 = vector.extract_strided_slice %147 {offsets = [0, 24], sizes = [8, 8], strides = [1, 1]} : vector<8x32xbf16> to vector<8x8xbf16>
    %204 = vector.extract_strided_slice %148 {offsets = [0, 24], sizes = [8, 8], strides = [1, 1]} : vector<8x32xbf16> to vector<8x8xbf16>
    %205 = vector.extract_strided_slice %149 {offsets = [0, 24], sizes = [8, 8], strides = [1, 1]} : vector<8x32xbf16> to vector<8x8xbf16>
    "tpu.trace_start"() <{level = 10 : i32, message = "qd,kd->qk"}> : () -> ()
    %cst_91 = arith.constant dense<0.000000e+00> : vector<8x8xf32>
    %206 = tpu.matmul %203, %204, %cst_91 {dimension_numbers = #tpu.dot_dimension_numbers<[1], [1], [0], [0], [0, 0, 1, 0], [], []>} : vector<8x8xbf16>, vector<8x8xbf16>, vector<8x8xf32> -> vector<8x8xf32>
    "tpu.trace_stop"() : () -> ()
    %cst_92 = arith.constant dense<0xFF800000> : vector<8xf32>
    %207 = vector.multi_reduction <maximumf>, %206, %cst_92 [1] : vector<8x8xf32> to vector<8xf32>
    %208 = vector.shape_cast %207 : vector<8xf32> to vector<8x1xf32>
    %209 = vector.broadcast %208 : vector<8x1xf32> to vector<8x8xf32>
    %210 = arith.subf %206, %209 : vector<8x8xf32>
    %211 = math.exp %210 : vector<8x8xf32>
    %cst_93 = arith.constant dense<0.000000e+00> : vector<8xf32>
    %212 = vector.multi_reduction <add>, %211, %cst_93 [1] : vector<8x8xf32> to vector<8xf32>
    %213 = vector.shape_cast %212 : vector<8xf32> to vector<8x1xf32>
    %214 = vector.broadcast %213 : vector<8x1xf32> to vector<8x8xf32>
    %215 = arith.divf %211, %214 : vector<8x8xf32>
    %216 = arith.truncf %215 : vector<8x8xf32> to vector<8x8xbf16>
    "tpu.trace_start"() <{level = 10 : i32, message = "qk,kd->qd"}> : () -> ()
    %cst_94 = arith.constant dense<0.000000e+00> : vector<8x8xf32>
    %217 = tpu.matmul %216, %205, %cst_94 {dimension_numbers = #tpu.dot_dimension_numbers<[1], [0], [0], [1], [0, 0, 1, 1], [], []>} : vector<8x8xbf16>, vector<8x8xbf16>, vector<8x8xf32> -> vector<8x8xf32>
    "tpu.trace_stop"() : () -> ()
    %218 = arith.truncf %217 : vector<8x8xf32> to vector<8x8xbf16>
    %c0_95 = arith.constant 0 : index
    %c24_96 = arith.constant 24 : index
    %219 = vector.load %arg32[%c0_95, %c24_96] : memref<8x32xbf16, #tpu.memory_space<vmem>>, vector<8x8xbf16>
    tpu.vector_store %arg32[%c0_95, %c24_96], %218 {strides = array<i32>} : memref<8x32xbf16, #tpu.memory_space<vmem>>, vector<8x8xbf16>,
    %220 = arith.addf %202, %215 : vector<8x8xf32>
    %c0_97 = arith.constant 0 : index
    %c0_98 = arith.constant 0 : index
    %221 = vector.load %arg32[%c0_97, %c0_98] : memref<8x32xbf16, #tpu.memory_space<vmem>>, vector<8x32xbf16>
    %c0_99 = arith.constant 0 : index
    %c0_100 = arith.constant 0 : index
    %222 = vector.load %arg20[%c0_99, %c0_100] : memref<32x32xbf16, #tpu.memory_space<vmem>>, vector<32x32xbf16>
    %cst_101 = arith.constant dense<0.000000e+00> : vector<8x32xf32>
    %223 = tpu.matmul %221, %222, %cst_101 {dimension_numbers = #tpu.dot_dimension_numbers<[1], [0], [0], [1], [0, 0, 1, 1], [], []>} : vector<8x32xbf16>, vector<32x32xbf16>, vector<8x32xf32> -> vector<8x32xf32>
    %c0_102 = arith.constant 0 : index
    %c0_103 = arith.constant 0 : index
    %224 = vector.load %arg21[%c0_102, %c0_103] : memref<1x32xf32, #tpu.memory_space<vmem>>, vector<1x32xf32>
    %225 = vector.broadcast %224 : vector<1x32xf32> to vector<8x32xf32>
    %226 = arith.addf %223, %225 : vector<8x32xf32>
    %cst_104 = arith.constant 2.500000e-01 : f32
    %227 = vector.broadcast %cst_104 : f32 to vector<8x8xf32>
    %228 = arith.mulf %220, %227 : vector<8x8xf32>
    %229 = arith.addf %130, %226 : vector<8x32xf32>
    %c0_105 = arith.constant 0 : index
    %c0_106 = arith.constant 0 : index
    %230 = vector.load %arg22[%c0_105, %c0_106] : memref<1x32xf32, #tpu.memory_space<vmem>>, vector<1x32xf32>
    %c0_107 = arith.constant 0 : index
    %c0_108 = arith.constant 0 : index
    %231 = vector.load %arg23[%c0_107, %c0_108] : memref<1x32xf32, #tpu.memory_space<vmem>>, vector<1x32xf32>
    %cst_109 = arith.constant dense<0.000000e+00> : vector<8xf32>
    %232 = vector.multi_reduction <add>, %229, %cst_109 [1] : vector<8x32xf32> to vector<8xf32>
    %233 = vector.shape_cast %232 : vector<8xf32> to vector<8x1xf32>
    %cst_110 = arith.constant 3.200000e+01 : f32
    %234 = vector.broadcast %cst_110 : f32 to vector<8x1xf32>
    %235 = arith.divf %233, %234 : vector<8x1xf32>
    %236 = vector.broadcast %235 : vector<8x1xf32> to vector<8x32xf32>
    %237 = arith.subf %229, %236 : vector<8x32xf32>
    %238 = arith.mulf %237, %237 : vector<8x32xf32>
    %cst_111 = arith.constant dense<0.000000e+00> : vector<8xf32>
    %239 = vector.multi_reduction <add>, %238, %cst_111 [1] : vector<8x32xf32> to vector<8xf32>
    %240 = vector.shape_cast %239 : vector<8xf32> to vector<8x1xf32>
    %cst_112 = arith.constant 3.200000e+01 : f32
    %241 = vector.broadcast %cst_112 : f32 to vector<8x1xf32>
    %242 = arith.divf %240, %241 : vector<8x1xf32>
    %243 = vector.broadcast %235 : vector<8x1xf32> to vector<8x32xf32>
    %244 = arith.subf %229, %243 : vector<8x32xf32>
    %cst_113 = arith.constant 9.99999974E-6 : f32
    %245 = vector.broadcast %cst_113 : f32 to vector<8x1xf32>
    %246 = arith.addf %242, %245 : vector<8x1xf32>
    %247 = math.rsqrt %246 : vector<8x1xf32>
    %248 = vector.broadcast %247 : vector<8x1xf32> to vector<8x32xf32>
    %249 = arith.mulf %244, %248 : vector<8x32xf32>
    %250 = vector.broadcast %230 : vector<1x32xf32> to vector<8x32xf32>
    %251 = arith.mulf %249, %250 : vector<8x32xf32>
    %252 = vector.broadcast %231 : vector<1x32xf32> to vector<8x32xf32>
    %253 = arith.addf %251, %252 : vector<8x32xf32>
    %254 = arith.truncf %253 : vector<8x32xf32> to vector<8x32xbf16>
    %c0_114 = arith.constant 0 : index
    %c0_115 = arith.constant 0 : index
    %255 = vector.load %arg24[%c0_114, %c0_115] : memref<32x64xbf16, #tpu.memory_space<vmem>>, vector<32x64xbf16>
    %cst_116 = arith.constant dense<0.000000e+00> : vector<8x64xf32>
    %256 = tpu.matmul %254, %255, %cst_116 {dimension_numbers = #tpu.dot_dimension_numbers<[1], [0], [0], [1], [0, 0, 1, 1], [], []>} : vector<8x32xbf16>, vector<32x64xbf16>, vector<8x64xf32> -> vector<8x64xf32>
    %c0_117 = arith.constant 0 : index
    %c0_118 = arith.constant 0 : index
    %257 = vector.load %arg25[%c0_117, %c0_118] : memref<1x64xf32, #tpu.memory_space<vmem>>, vector<1x64xf32>
    %258 = vector.broadcast %257 : vector<1x64xf32> to vector<8x64xf32>
    %259 = arith.addf %256, %258 : vector<8x64xf32>
    %cst_119 = arith.constant 0.000000e+00 : f32
    %260 = vector.broadcast %cst_119 : f32 to vector<8x64xf32>
    %261 = arith.maximumf %259, %260 : vector<8x64xf32>
    %262 = arith.truncf %261 : vector<8x64xf32> to vector<8x64xbf16>
    %c0_120 = arith.constant 0 : index
    %c0_121 = arith.constant 0 : index
    %263 = vector.load %arg26[%c0_120, %c0_121] : memref<64x32xbf16, #tpu.memory_space<vmem>>, vector<64x32xbf16>
    %cst_122 = arith.constant dense<0.000000e+00> : vector<8x32xf32>
    %264 = tpu.matmul %262, %263, %cst_122 {dimension_numbers = #tpu.dot_dimension_numbers<[1], [0], [0], [1], [0, 0, 1, 1], [], []>} : vector<8x64xbf16>, vector<64x32xbf16>, vector<8x32xf32> -> vector<8x32xf32>
    %c0_123 = arith.constant 0 : index
    %c0_124 = arith.constant 0 : index
    %265 = vector.load %arg27[%c0_123, %c0_124] : memref<1x32xf32, #tpu.memory_space<vmem>>, vector<1x32xf32>
    %266 = vector.broadcast %265 : vector<1x32xf32> to vector<8x32xf32>
    %267 = arith.addf %264, %266 : vector<8x32xf32>
    %268 = arith.addf %253, %267 : vector<8x32xf32>
    %c0_125 = arith.constant 0 : index
    %c0_126 = arith.constant 0 : index
    %269 = vector.load %arg28[%c0_125, %c0_126] : memref<1x32xf32, #tpu.memory_space<vmem>>, vector<1x32xf32>
    %c0_127 = arith.constant 0 : index
    %c0_128 = arith.constant 0 : index
    %270 = vector.load %arg29[%c0_127, %c0_128] : memref<1x32xf32, #tpu.memory_space<vmem>>, vector<1x32xf32>
    %cst_129 = arith.constant dense<0.000000e+00> : vector<8xf32>
    %271 = vector.multi_reduction <add>, %268, %cst_129 [1] : vector<8x32xf32> to vector<8xf32>
    %272 = vector.shape_cast %271 : vector<8xf32> to vector<8x1xf32>
    %cst_130 = arith.constant 3.200000e+01 : f32
    %273 = vector.broadcast %cst_130 : f32 to vector<8x1xf32>
    %274 = arith.divf %272, %273 : vector<8x1xf32>
    %275 = vector.broadcast %274 : vector<8x1xf32> to vector<8x32xf32>
    %276 = arith.subf %268, %275 : vector<8x32xf32>
    %277 = arith.mulf %276, %276 : vector<8x32xf32>
    %cst_131 = arith.constant dense<0.000000e+00> : vector<8xf32>
    %278 = vector.multi_reduction <add>, %277, %cst_131 [1] : vector<8x32xf32> to vector<8xf32>
    %279 = vector.shape_cast %278 : vector<8xf32> to vector<8x1xf32>
    %cst_132 = arith.constant 3.200000e+01 : f32
    %280 = vector.broadcast %cst_132 : f32 to vector<8x1xf32>
    %281 = arith.divf %279, %280 : vector<8x1xf32>
    %282 = vector.broadcast %274 : vector<8x1xf32> to vector<8x32xf32>
    %283 = arith.subf %268, %282 : vector<8x32xf32>
    %cst_133 = arith.constant 9.99999974E-6 : f32
    %284 = vector.broadcast %cst_133 : f32 to vector<8x1xf32>
    %285 = arith.addf %281, %284 : vector<8x1xf32>
    %286 = math.rsqrt %285 : vector<8x1xf32>
    %287 = vector.broadcast %286 : vector<8x1xf32> to vector<8x32xf32>
    %288 = arith.mulf %283, %287 : vector<8x32xf32>
    %289 = vector.broadcast %269 : vector<1x32xf32> to vector<8x32xf32>
    %290 = arith.mulf %288, %289 : vector<8x32xf32>
    %291 = vector.broadcast %270 : vector<1x32xf32> to vector<8x32xf32>
    %292 = arith.addf %290, %291 : vector<8x32xf32>
    %c0_134 = arith.constant 0 : index
    %c0_135 = arith.constant 0 : index
    %c0_136 = arith.constant 0 : index
    %293 = vector.load %arg30[%c0_134, %c0_135, %c0_136] : memref<1x8x32xf32, #tpu.memory_space<vmem>>, vector<1x8x32xf32>
    %294 = vector.shape_cast %293 : vector<1x8x32xf32> to vector<8x32xf32>
    %295 = vector.shape_cast %292 : vector<8x32xf32> to vector<1x8x32xf32>
    tpu.vector_store %arg30[%c0_134, %c0_135, %c0_136], %295 {strides = array<i32>} : memref<1x8x32xf32, #tpu.memory_space<vmem>>, vector<1x8x32xf32>,
    %c0_137 = arith.constant 0 : index
    %c0_138 = arith.constant 0 : index
    %c0_139 = arith.constant 0 : index
    %296 = vector.load %arg31[%c0_137, %c0_138, %c0_139] : memref<1x8x8xf32, #tpu.memory_space<vmem>>, vector<1x8x8xf32>
    %297 = vector.shape_cast %296 : vector<1x8x8xf32> to vector<8x8xf32>
    %298 = vector.shape_cast %228 : vector<8x8xf32> to vector<1x8x8xf32>
    tpu.vector_store %arg31[%c0_137, %c0_138, %c0_139], %298 {strides = array<i32>} : memref<1x8x8xf32, #tpu.memory_space<vmem>>, vector<1x8x8xf32>,
    return
  }
  func.func @transform_0(%arg0: i32) -> (i32, i32, i32) {
    %c0_i32 = arith.constant 0 : i32
    %c0_i32_0 = arith.constant 0 : i32
    %c0_i32_1 = arith.constant 0 : i32
    return %arg0, %c0_i32, %c0_i32_0 : i32, i32, i32
  }
  func.func @transform_1(%arg0: i32) -> (i32, i32, i32) {
    %c0_i32 = arith.constant 0 : i32
    %c0_i32_0 = arith.constant 0 : i32
    %c0_i32_1 = arith.constant 0 : i32
    return %arg0, %c0_i32, %c0_i32_0 : i32, i32, i32
  }
  func.func @transform_2(%arg0: i32) -> (i32, i32) {
    %c0_i32 = arith.constant 0 : i32
    %c0_i32_0 = arith.constant 0 : i32
    %c0_i32_1 = arith.constant 0 : i32
    return %c0_i32, %c0_i32_0 : i32, i32
  }
  func.func @transform_3(%arg0: i32) -> (i32, i32) {
    %c0_i32 = arith.constant 0 : i32
    %c0_i32_0 = arith.constant 0 : i32
    %c0_i32_1 = arith.constant 0 : i32
    return %c0_i32, %c0_i32_0 : i32, i32
  }
  func.func @transform_4(%arg0: i32) -> (i32, i32) {
    %c0_i32 = arith.constant 0 : i32
    %c0_i32_0 = arith.constant 0 : i32
    %c0_i32_1 = arith.constant 0 : i32
    return %c0_i32, %c0_i32_0 : i32, i32
  }
  func.func @transform_5(%arg0: i32) -> (i32, i32) {
    %c0_i32 = arith.constant 0 : i32
    %c0_i32_0 = arith.constant 0 : i32
    %c0_i32_1 = arith.constant 0 : i32
    return %c0_i32, %c0_i32_0 : i32, i32
  }
  func.func @transform_6(%arg0: i32) -> (i32, i32) {
    %c0_i32 = arith.constant 0 : i32
    %c0_i32_0 = arith.constant 0 : i32
    %c0_i32_1 = arith.constant 0 : i32
    return %c0_i32, %c0_i32_0 : i32, i32
  }
  func.func @transform_7(%arg0: i32) -> (i32, i32) {
    %c0_i32 = arith.constant 0 : i32
    %c0_i32_0 = arith.constant 0 : i32
    %c0_i32_1 = arith.constant 0 : i32
    return %c0_i32, %c0_i32_0 : i32, i32
  }
  func.func @transform_8(%arg0: i32) -> (i32, i32) {
    %c0_i32 = arith.constant 0 : i32
    %c0_i32_0 = arith.constant 0 : i32
    %c0_i32_1 = arith.constant 0 : i32
    return %c0_i32, %c0_i32_0 : i32, i32
  }
  func.func @transform_9(%arg0: i32) -> (i32, i32) {
    %c0_i32 = arith.constant 0 : i32
    %c0_i32_0 = arith.constant 0 : i32
    %c0_i32_1 = arith.constant 0 : i32
    return %c0_i32, %c0_i32_0 : i32, i32
  }
  func.func @transform_10(%arg0: i32) -> (i32, i32) {
    %c0_i32 = arith.constant 0 : i32
    %c0_i32_0 = arith.constant 0 : i32
    %c0_i32_1 = arith.constant 0 : i32
    return %c0_i32, %c0_i32_0 : i32, i32
  }
  func.func @transform_11(%arg0: i32) -> (i32, i32) {
    %c0_i32 = arith.constant 0 : i32
    %c0_i32_0 = arith.constant 0 : i32
    %c0_i32_1 = arith.constant 0 : i32
    return %c0_i32, %c0_i32_0 : i32, i32
  }
  func.func @transform_12(%arg0: i32) -> (i32, i32) {
    %c0_i32 = arith.constant 0 : i32
    %c0_i32_0 = arith.constant 0 : i32
    %c0_i32_1 = arith.constant 0 : i32
    return %c0_i32, %c0_i32_0 : i32, i32
  }
  func.func @transform_13(%arg0: i32) -> (i32, i32) {
    %c0_i32 = arith.constant 0 : i32
    %c0_i32_0 = arith.constant 0 : i32
    %c0_i32_1 = arith.constant 0 : i32
    return %c0_i32, %c0_i32_0 : i32, i32
  }
  func.func @transform_14(%arg0: i32) -> (i32, i32) {
    %c0_i32 = arith.constant 0 : i32
    %c0_i32_0 = arith.constant 0 : i32
    %c0_i32_1 = arith.constant 0 : i32
    return %c0_i32, %c0_i32_0 : i32, i32
  }
  func.func @transform_15(%arg0: i32) -> (i32, i32) {
    %c0_i32 = arith.constant 0 : i32
    %c0_i32_0 = arith.constant 0 : i32
    %c0_i32_1 = arith.constant 0 : i32
    return %c0_i32, %c0_i32_0 : i32, i32
  }
  func.func @transform_16(%arg0: i32) -> (i32, i32) {
    %c0_i32 = arith.constant 0 : i32
    %c0_i32_0 = arith.constant 0 : i32
    %c0_i32_1 = arith.constant 0 : i32
    return %c0_i32, %c0_i32_0 : i32, i32
  }
  func.func @transform_17(%arg0: i32) -> (i32, i32) {
    %c0_i32 = arith.constant 0 : i32
    %c0_i32_0 = arith.constant 0 : i32
    %c0_i32_1 = arith.constant 0 : i32
    return %c0_i32, %c0_i32_0 : i32, i32
  }
  func.func @transform_18(%arg0: i32) -> (i32, i32) {
    %c0_i32 = arith.constant 0 : i32
    %c0_i32_0 = arith.constant 0 : i32
    %c0_i32_1 = arith.constant 0 : i32
    return %c0_i32, %c0_i32_0 : i32, i32
  }
  func.func @transform_19(%arg0: i32) -> (i32, i32) {
    %c0_i32 = arith.constant 0 : i32
    %c0_i32_0 = arith.constant 0 : i32
    %c0_i32_1 = arith.constant 0 : i32
    return %c0_i32, %c0_i32_0 : i32, i32
  }
  func.func @transform_20(%arg0: i32) -> (i32, i32) {
    %c0_i32 = arith.constant 0 : i32
    %c0_i32_0 = arith.constant 0 : i32
    %c0_i32_1 = arith.constant 0 : i32
    return %c0_i32, %c0_i32_0 : i32, i32
  }
  func.func @transform_21(%arg0: i32) -> (i32, i32) {
    %c0_i32 = arith.constant 0 : i32
    %c0_i32_0 = arith.constant 0 : i32
    %c0_i32_1 = arith.constant 0 : i32
    return %c0_i32, %c0_i32_0 : i32, i32
  }
  func.func @transform_22(%arg0: i32) -> (i32, i32) {
    %c0_i32 = arith.constant 0 : i32
    %c0_i32_0 = arith.constant 0 : i32
    %c0_i32_1 = arith.constant 0 : i32
    return %c0_i32, %c0_i32_0 : i32, i32
  }
  func.func @transform_23(%arg0: i32) -> (i32, i32) {
    %c0_i32 = arith.constant 0 : i32
    %c0_i32_0 = arith.constant 0 : i32
    %c0_i32_1 = arith.constant 0 : i32
    return %c0_i32, %c0_i32_0 : i32, i32
  }
  func.func @transform_24(%arg0: i32) -> (i32, i32) {
    %c0_i32 = arith.constant 0 : i32
    %c0_i32_0 = arith.constant 0 : i32
    %c0_i32_1 = arith.constant 0 : i32
    return %c0_i32, %c0_i32_0 : i32, i32
  }
  func.func @transform_25(%arg0: i32) -> (i32, i32) {
    %c0_i32 = arith.constant 0 : i32
    %c0_i32_0 = arith.constant 0 : i32
    %c0_i32_1 = arith.constant 0 : i32
    return %c0_i32, %c0_i32_0 : i32, i32
  }
  func.func @transform_26(%arg0: i32) -> (i32, i32) {
    %c0_i32 = arith.constant 0 : i32
    %c0_i32_0 = arith.constant 0 : i32
    %c0_i32_1 = arith.constant 0 : i32
    return %c0_i32, %c0_i32_0 : i32, i32
  }
  func.func @transform_27(%arg0: i32) -> (i32, i32) {
    %c0_i32 = arith.constant 0 : i32
    %c0_i32_0 = arith.constant 0 : i32
    %c0_i32_1 = arith.constant 0 : i32
    return %c0_i32, %c0_i32_0 : i32, i32
  }
  func.func @transform_28(%arg0: i32) -> (i32, i32) {
    %c0_i32 = arith.constant 0 : i32
    %c0_i32_0 = arith.constant 0 : i32
    %c0_i32_1 = arith.constant 0 : i32
    return %c0_i32, %c0_i32_0 : i32, i32
  }
  func.func @transform_29(%arg0: i32) -> (i32, i32, i32) {
    %c0_i32 = arith.constant 0 : i32
    %c0_i32_0 = arith.constant 0 : i32
    %c0_i32_1 = arith.constant 0 : i32
    return %arg0, %c0_i32, %c0_i32_0 : i32, i32, i32
  }
  func.func @transform_30(%arg0: i32) -> (i32, i32, i32) {
    %c0_i32 = arith.constant 0 : i32
    %c0_i32_0 = arith.constant 0 : i32
    %c0_i32_1 = arith.constant 0 : i32
    return %arg0, %c0_i32, %c0_i32_0 : i32, i32, i32
  }
}

</mosaic_0001>

<llo_original>
// kernel: tpu_custom_call.1
$region0: #{tpu_custom_call.1}
  #allocation0 [shape = 'u32[]', space=smem, size = 0x4, offset = 0x4, fixed_abs, tag = 'smem constant byte address 0x4 - core index']
  #allocation1 [shape = 'u32[144,128]{1,0:T(1,128)}', space=vmem, size = 0x12000, scoped, tag = 'internal scratch']
  #allocation2 [shape = 'bf16[8,32]{1,0:T(8,128)(2,1)}', space=vmem, size = 0x800, scoped, tag = 'scratch operand']
  %s0 = inlined_call_operand.smem [shape: u32[31], index: -1, kind: input, shape index: {}]
  %s1 = sld [smem:[%s0]]
  %s2 = scalar_lea.smem %s0, 1
  %s3 = sld [smem:[%s2]]
  %s4 = scalar_lea.smem %s0, 2
  %s5 = sld [smem:[%s4]]
  %s6 = scalar_lea.smem %s0, 3
  %s7 = sld [smem:[%s6]]
  %s8 = scalar_lea.smem %s0, 4
  %s9 = sld [smem:[%s8]]
  %s10 = scalar_lea.smem %s0, 5
  %s11 = sld [smem:[%s10]]
  %s12 = scalar_lea.smem %s0, 6
  %s13 = sld [smem:[%s12]]
  %s14 = scalar_lea.smem %s0, 7
  %s15 = sld [smem:[%s14]]
  %s16 = scalar_lea.smem %s0, 8
  %s17 = sld [smem:[%s16]]
  %s18 = scalar_lea.smem %s0, 9
  %s19 = sld [smem:[%s18]]
  %s20 = scalar_lea.smem %s0, 10
  %s21 = sld [smem:[%s20]]
  %s22 = scalar_lea.smem %s0, 11
  %s23 = sld [smem:[%s22]]
  %s24 = scalar_lea.smem %s0, 12
  %s25 = sld [smem:[%s24]]
  %s26 = scalar_lea.smem %s0, 13
  %s27 = sld [smem:[%s26]]
  %s28 = scalar_lea.smem %s0, 14
  %s29 = sld [smem:[%s28]]
  %s30 = scalar_lea.smem %s0, 15
  %s31 = sld [smem:[%s30]]
  %s32 = scalar_lea.smem %s0, 16
  %s33 = sld [smem:[%s32]]
  %s34 = scalar_lea.smem %s0, 17
  %s35 = sld [smem:[%s34]]
  %s36 = scalar_lea.smem %s0, 18
  %s37 = sld [smem:[%s36]]
  %s38 = scalar_lea.smem %s0, 19
  %s39 = sld [smem:[%s38]]
  %s40 = scalar_lea.smem %s0, 20
  %s41 = sld [smem:[%s40]]
  %s42 = scalar_lea.smem %s0, 21
  %s43 = sld [smem:[%s42]]
  %s44 = scalar_lea.smem %s0, 22
  %s45 = sld [smem:[%s44]]
  %s46 = scalar_lea.smem %s0, 23
  %s47 = sld [smem:[%s46]]
  %s48 = scalar_lea.smem %s0, 24
  %s49 = sld [smem:[%s48]]
  %s50 = scalar_lea.smem %s0, 25
  %s51 = sld [smem:[%s50]]
  %s52 = scalar_lea.smem %s0, 26
  %s53 = sld [smem:[%s52]]
  %s54 = scalar_lea.smem %s0, 27
  %s55 = sld [smem:[%s54]]
  %s56 = scalar_lea.smem %s0, 28
  %s57 = sld [smem:[%s56]]
  %s58 = scalar_lea.smem %s0, 29
  %s59 = sld [smem:[%s58]]
  %s60 = scalar_lea.smem %s0, 30
  %s61 = sld [smem:[%s60]]
  %62 = xla_tuple %s59, %s61
  %s63 = sld [smem:[#allocation0]]
  $region225: #{tpu_custom_call.1} parent=0
    _
  %s65 = ssub.s32 1, %s63
  %s66 = scalar_select 0, %s65, %s63
  $region1: #{tpu_custom_call.1} parent=0
    #allocation3 [shape = 'u8[4096]{0}', space=vmem, size = 0x1000, scoped, tag = 'input window, operand 1']
    #allocation4 [shape = 's32[2]{0}', space=sflag, size = 0x8, scoped, tag = 'scoped memory for tpu_custom_call.1']
    #allocation5 [shape = 's32[2]{0}', space=sflag, size = 0x8, scoped, tag = 'scoped memory for tpu_custom_call.1']
    #allocation6 [shape = 'u8[4096]{0}', space=vmem, size = 0x1000, scoped, tag = 'input window, operand 2, single buffered']
    #allocation7 [shape = 's32[1]{0}', space=sflag, size = 0x4, scoped, tag = 'scoped memory for tpu_custom_call.1']
    #allocation8 [shape = 'u8[512]{0}', space=vmem, size = 0x400, scoped, tag = 'input window, operand 4, single buffered']
    #allocation9 [shape = 'u8[512]{0}', space=vmem, size = 0x400, scoped, tag = 'input window, operand 6, single buffered']
    #allocation10 [shape = 's32[1]{0}', space=sflag, size = 0x4, scoped, tag = 'scoped memory for tpu_custom_call.1']
    #allocation11 [shape = 'u8[8192]{0}', space=vmem, size = 0x2000, scoped, tag = 'input window, operand 7, single buffered']
    #allocation12 [shape = 'u8[512]{0}', space=vmem, size = 0x400, scoped, tag = 'input window, operand 8, single buffered']
    #allocation13 [shape = 's32[1]{0}', space=sflag, size = 0x4, scoped, tag = 'scoped memory for tpu_custom_call.1']
    #allocation14 [shape = 'u8[512]{0}', space=vmem, size = 0x400, scoped, tag = 'input window, operand 10, single buffered']
    #allocation15 [shape = 'u8[512]{0}', space=vmem, size = 0x400, scoped, tag = 'input window, operand 11, single buffered']
    #allocation16 [shape = 's32[1]{0}', space=sflag, size = 0x4, scoped, tag = 'scoped memory for tpu_custom_call.1']
    #allocation17 [shape = 'u8[512]{0}', space=vmem, size = 0x400, scoped, tag = 'input window, operand 12, single buffered']
    #allocation18 [shape = 'u8[8192]{0}', space=vmem, size = 0x2000, scoped, tag = 'input window, operand 13, single buffered']
    #allocation19 [shape = 's32[1]{0}', space=sflag, size = 0x4, scoped, tag = 'scoped memory for tpu_custom_call.1']
    #allocation20 [shape = 'u8[512]{0}', space=vmem, size = 0x400, scoped, tag = 'input window, operand 14, single buffered']
    #allocation21 [shape = 'u8[8192]{0}', space=vmem, size = 0x2000, scoped, tag = 'input window, operand 15, single buffered']
    #allocation22 [shape = 's32[1]{0}', space=sflag, size = 0x4, scoped, tag = 'scoped memory for tpu_custom_call.1']
    #allocation23 [shape = 'u8[512]{0}', space=vmem, size = 0x400, scoped, tag = 'input window, operand 16, single buffered']
    #allocation24 [shape = 'u8[8192]{0}', space=vmem, size = 0x2000, scoped, tag = 'input window, operand 17, single buffered']
    #allocation25 [shape = 's32[1]{0}', space=sflag, size = 0x4, scoped, tag = 'scoped memory for tpu_custom_call.1']
    #allocation26 [shape = 'u8[512]{0}', space=vmem, size = 0x400, scoped, tag = 'input window, operand 18, single buffered']
    #allocation27 [shape = 'u8[8192]{0}', space=vmem, size = 0x2000, scoped, tag = 'input window, operand 19, single buffered']
    #allocation28 [shape = 's32[1]{0}', space=sflag, size = 0x4, scoped, tag = 'scoped memory for tpu_custom_call.1']
    #allocation29 [shape = 'u8[8192]{0}', space=vmem, size = 0x2000, scoped, tag = 'input window, operand 23, single buffered']
    #allocation30 [shape = 'u8[8192]{0}', space=vmem, size = 0x2000, scoped, tag = 'output window, operand 0']
    #allocation31 [shape = 'u8[8192]{0}', space=vmem, size = 0x2000, scoped, tag = 'output window, operand 1']
    #allocation32 [shape = 's32[2]{0}', space=sflag, size = 0x8, scoped, tag = 'scoped memory for tpu_custom_call.1']
    %67 = vsyncpa [#allocation4], 0
    %s68 = scalar_lea.sflag [#allocation4], 1
    %69 = vsyncpa %s68, 0
    %70 = vsyncpa [#allocation7], 0
    %71 = vsyncpa [#allocation10], 0
    %72 = vsyncpa [#allocation13], 0
    %73 = vsyncpa [#allocation16], 0
    %74 = vsyncpa [#allocation19], 0
    %75 = vsyncpa [#allocation22], 0
    %76 = vsyncpa [#allocation25], 0
    %77 = vsyncpa [#allocation28], 0
    %78 = vsyncpa [#allocation5], 0
    %s79 = scalar_lea.sflag [#allocation5], 1
    %80 = vsyncpa %s79, 0
    %81 = vsyncpa [#allocation32], 0
    %s82 = scalar_lea.sflag [#allocation32], 1
    %83 = vsyncpa %s82, 0
    loop: start=0, step=1, limit=4
    $region2: #{tpu_custom_call.1} parent=1 // loop_pre_header
      _
    $region3: #{tpu_custom_call.1} parent=1 // loop_header
      %s85 = sphi 0, %s89
      %p86 = scmp.ge.s32.totalorder %s85, 4
      %s95 = sphi 0, %s97
      %s98 = sphi 0, %s95
      %s99 = sphi 0, %s98
      %s115 = sphi 0, %s99
      %s121 = sphi 0, %s123
      %s124 = sphi 0, %s121
      %s125 = sphi 0, %s124
      %s141 = sphi 0, %s125
      %s145 = sphi 0, %s145
      %s147 = sphi 0, %s145
      %s148 = sphi 0, %s147
      %s162 = sphi 0, %s148
      %s166 = sphi 0, %s166
      %s168 = sphi 0, %s166
      %s169 = sphi 0, %s168
      %s183 = sphi 0, %s169
      %s187 = sphi 0, %s187
      %s189 = sphi 0, %s187
      %s190 = sphi 0, %s189
      %s204 = sphi 0, %s190
      %s208 = sphi 0, %s208
      %s210 = sphi 0, %s208
      %s211 = sphi 0, %s210
      %s225 = sphi 0, %s211
      %s229 = sphi 0, %s229
      %s231 = sphi 0, %s229
      %s232 = sphi 0, %s231
      %s246 = sphi 0, %s232
      %s250 = sphi 0, %s250
      %s252 = sphi 0, %s250
      %s253 = sphi 0, %s252
      %s267 = sphi 0, %s253
      %s271 = sphi 0, %s271
      %s273 = sphi 0, %s271
      %s274 = sphi 0, %s273
      %s288 = sphi 0, %s274
      %s292 = sphi 0, %s292
      %s294 = sphi 0, %s292
      %s295 = sphi 0, %s294
      %s309 = sphi 0, %s295
      %s313 = sphi 0, %s313
      %s315 = sphi 0, %s313
      %s316 = sphi 0, %s315
      %s330 = sphi 0, %s316
      %s334 = sphi 0, %s334
      %s336 = sphi 0, %s334
      %s337 = sphi 0, %s336
      %s351 = sphi 0, %s337
      %s355 = sphi 0, %s355
      %s357 = sphi 0, %s355
      %s358 = sphi 0, %s357
      %s372 = sphi 0, %s358
      %s376 = sphi 0, %s376
      %s378 = sphi 0, %s376
      %s379 = sphi 0, %s378
      %s393 = sphi 0, %s379
      %s397 = sphi 0, %s397
      %s399 = sphi 0, %s397
      %s400 = sphi 0, %s399
      %s414 = sphi 0, %s400
      %s418 = sphi 0, %s418
      %s420 = sphi 0, %s418
      %s421 = sphi 0, %s420
      %s435 = sphi 0, %s421
      %s439 = sphi 0, %s439
      %s441 = sphi 0, %s439
      %s442 = sphi 0, %s441
      %s456 = sphi 0, %s442
      %s460 = sphi 0, %s460
      %s462 = sphi 0, %s460
      %s463 = sphi 0, %s462
      %s477 = sphi 0, %s463
      %s481 = sphi 0, %s481
      %s483 = sphi 0, %s481
      %s484 = sphi 0, %s483
      %s498 = sphi 0, %s484
      %s502 = sphi 0, %s502
      %s504 = sphi 0, %s502
      %s505 = sphi 0, %s504
      %s519 = sphi 0, %s505
      %s523 = sphi 0, %s523
      %s525 = sphi 0, %s523
      %s526 = sphi 0, %s525
      %s540 = sphi 0, %s526
      %s544 = sphi 0, %s544
      %s546 = sphi 0, %s544
      %s547 = sphi 0, %s546
      %s561 = sphi 0, %s547
      %s565 = sphi 0, %s565
      %s567 = sphi 0, %s565
      %s568 = sphi 0, %s567
      %s582 = sphi 0, %s568
      %s586 = sphi 0, %s586
      %s588 = sphi 0, %s586
      %s589 = sphi 0, %s588
      %s603 = sphi 0, %s589
      %s607 = sphi 0, %s607
      %s609 = sphi 0, %s607
      %s610 = sphi 0, %s609
      %s624 = sphi 0, %s610
      %s628 = sphi 0, %s628
      %s630 = sphi 0, %s628
      %s631 = sphi 0, %s630
      %s645 = sphi 0, %s631
      %s649 = sphi 0, %s649
      %s651 = sphi 0, %s649
      %s652 = sphi 0, %s651
      %s666 = sphi 0, %s652
      %s670 = sphi 0, %s670
      %s672 = sphi 0, %s670
      %s673 = sphi 0, %s672
      %s687 = sphi 0, %s673
      %s691 = sphi 0, %s691
      %s693 = sphi 0, %s691
      %s694 = sphi 0, %s693
      %s708 = sphi 0, %s694
      %s714 = sphi 0, %s716
      %s717 = sphi 0, %s714
      %s718 = sphi 0, %s717
      %s734 = sphi 0, %s718
      %s740 = sphi 0, %s742
      %s743 = sphi 0, %s740
      %s744 = sphi 0, %s743
      %s760 = sphi 0, %s744
    $region4: #{tpu_custom_call.1} parent=1 // loop_header_branch
      %88 = sbr.rel (%p86) target = $region8
    $region5: #{tpu_custom_call.1} parent=1 // loop_body
      %s90 = ssub.s32 %s85, 1
      %s91 = ssub.s32 %s85, 2
      %s92 = sadd.s32 %s85, 1
      %s93 = ssub.s32 %s85, %s92
      %p94 = scmp.eq.s32.totalorder %s93, 0
      %s96 = sadd.s32 %s95, 1
      %s97 = scalar_select %p94, %s95, %s96
      %p100 = pneg %p94
      %p101 = scmp.eq.s32.totalorder %s85, 1
      %p102 = por %p100, %p101
      %p103 = scmp.ne.s32.totalorder %s95, %s98
      %p104 = scmp.eq.s32.totalorder %s85, 0
      %p105 = por %p103, %p104
      %p106 = scmp.ne.s32.totalorder %s95, %s98
      %p107 = scmp.eq.s32.totalorder %s90, 1
      %p108 = por %p106, %p107
      %p109 = scmp.ne.s32.totalorder %s98, %s99
      %p110 = scmp.eq.s32.totalorder %s90, 0
      %p111 = por %p109, %p110
      %p112 = scmp.ne.s32.totalorder %s98, %s99
      %p113 = scmp.eq.s32.totalorder %s91, 1
      %p114 = por %p112, %p113
      %p116 = scmp.ne.s32.totalorder %s99, %s115
      %p117 = scmp.eq.s32.totalorder %s91, 0
      %p118 = por %p116, %p117
      %s119 = ssub.s32 %s85, %s92
      %p120 = scmp.eq.s32.totalorder %s119, 0
      %s122 = sadd.s32 %s121, 1
      %s123 = scalar_select %p120, %s121, %s122
      %p126 = pneg %p120
      %p127 = scmp.eq.s32.totalorder %s85, 1
      %p128 = por %p126, %p127
      %p129 = scmp.ne.s32.totalorder %s121, %s124
      %p130 = scmp.eq.s32.totalorder %s85, 0
      %p131 = por %p129, %p130
      %p132 = scmp.ne.s32.totalorder %s121, %s124
      %p133 = scmp.eq.s32.totalorder %s90, 1
      %p134 = por %p132, %p133
      %p135 = scmp.ne.s32.totalorder %s124, %s125
      %p136 = scmp.eq.s32.totalorder %s90, 0
      %p137 = por %p135, %p136
      %p138 = scmp.ne.s32.totalorder %s124, %s125
      %p139 = scmp.eq.s32.totalorder %s91, 1
      %p140 = por %p138, %p139
      %p142 = scmp.ne.s32.totalorder %s125, %s141
      %p143 = scmp.eq.s32.totalorder %s91, 0
      %p144 = por %p142, %p143
      %s146 = sadd.s32 %s145, 1
      %p149 = scmp.eq.s32.totalorder %s85, 1
      %p150 = scmp.ne.s32.totalorder %s145, %s147
      %p151 = scmp.eq.s32.totalorder %s85, 0
      %p152 = por %p150, %p151
      %p153 = scmp.ne.s32.totalorder %s145, %s147
      %p154 = scmp.eq.s32.totalorder %s90, 1
      %p155 = por %p153, %p154
      %p156 = scmp.ne.s32.totalorder %s147, %s148
      %p157 = scmp.eq.s32.totalorder %s90, 0
      %p158 = por %p156, %p157
      %p159 = scmp.ne.s32.totalorder %s147, %s148
      %p160 = scmp.eq.s32.totalorder %s91, 1
      %p161 = por %p159, %p160
      %p163 = scmp.ne.s32.totalorder %s148, %s162
      %p164 = scmp.eq.s32.totalorder %s91, 0
      %p165 = por %p163, %p164
      %s167 = sadd.s32 %s166, 1
      %p170 = scmp.eq.s32.totalorder %s85, 1
      %p171 = scmp.ne.s32.totalorder %s166, %s168
      %p172 = scmp.eq.s32.totalorder %s85, 0
      %p173 = por %p171, %p172
      %p174 = scmp.ne.s32.totalorder %s166, %s168
      %p175 = scmp.eq.s32.totalorder %s90, 1
      %p176 = por %p174, %p175
      %p177 = scmp.ne.s32.totalorder %s168, %s169
      %p178 = scmp.eq.s32.totalorder %s90, 0
      %p179 = por %p177, %p178
      %p180 = scmp.ne.s32.totalorder %s168, %s169
      %p181 = scmp.eq.s32.totalorder %s91, 1
      %p182 = por %p180, %p181
      %p184 = scmp.ne.s32.totalorder %s169, %s183
      %p185 = scmp.eq.s32.totalorder %s91, 0
      %p186 = por %p184, %p185
      %s188 = sadd.s32 %s187, 1
      %p191 = scmp.eq.s32.totalorder %s85, 1
      %p192 = scmp.ne.s32.totalorder %s187, %s189
      %p193 = scmp.eq.s32.totalorder %s85, 0
      %p194 = por %p192, %p193
      %p195 = scmp.ne.s32.totalorder %s187, %s189
      %p196 = scmp.eq.s32.totalorder %s90, 1
      %p197 = por %p195, %p196
      %p198 = scmp.ne.s32.totalorder %s189, %s190
      %p199 = scmp.eq.s32.totalorder %s90, 0
      %p200 = por %p198, %p199
      %p201 = scmp.ne.s32.totalorder %s189, %s190
      %p202 = scmp.eq.s32.totalorder %s91, 1
      %p203 = por %p201, %p202
      %p205 = scmp.ne.s32.totalorder %s190, %s204
      %p206 = scmp.eq.s32.totalorder %s91, 0
      %p207 = por %p205, %p206
      %s209 = sadd.s32 %s208, 1
      %p212 = scmp.eq.s32.totalorder %s85, 1
      %p213 = scmp.ne.s32.totalorder %s208, %s210
      %p214 = scmp.eq.s32.totalorder %s85, 0
      %p215 = por %p213, %p214
      %p216 = scmp.ne.s32.totalorder %s208, %s210
      %p217 = scmp.eq.s32.totalorder %s90, 1
      %p218 = por %p216, %p217
      %p219 = scmp.ne.s32.totalorder %s210, %s211
      %p220 = scmp.eq.s32.totalorder %s90, 0
      %p221 = por %p219, %p220
      %p222 = scmp.ne.s32.totalorder %s210, %s211
      %p223 = scmp.eq.s32.totalorder %s91, 1
      %p224 = por %p222, %p223
      %p226 = scmp.ne.s32.totalorder %s211, %s225
      %p227 = scmp.eq.s32.totalorder %s91, 0
      %p228 = por %p226, %p227
      %s230 = sadd.s32 %s229, 1
      %p233 = scmp.eq.s32.totalorder %s85, 1
      %p234 = scmp.ne.s32.totalorder %s229, %s231
      %p235 = scmp.eq.s32.totalorder %s85, 0
      %p236 = por %p234, %p235
      %p237 = scmp.ne.s32.totalorder %s229, %s231
      %p238 = scmp.eq.s32.totalorder %s90, 1
      %p239 = por %p237, %p238
      %p240 = scmp.ne.s32.totalorder %s231, %s232
      %p241 = scmp.eq.s32.totalorder %s90, 0
      %p242 = por %p240, %p241
      %p243 = scmp.ne.s32.totalorder %s231, %s232
      %p244 = scmp.eq.s32.totalorder %s91, 1
      %p245 = por %p243, %p244
      %p247 = scmp.ne.s32.totalorder %s232, %s246
      %p248 = scmp.eq.s32.totalorder %s91, 0
      %p249 = por %p247, %p248
      %s251 = sadd.s32 %s250, 1
      %p254 = scmp.eq.s32.totalorder %s85, 1
      %p255 = scmp.ne.s32.totalorder %s250, %s252
      %p256 = scmp.eq.s32.totalorder %s85, 0
      %p257 = por %p255, %p256
      %p258 = scmp.ne.s32.totalorder %s250, %s252
      %p259 = scmp.eq.s32.totalorder %s90, 1
      %p260 = por %p258, %p259
      %p261 = scmp.ne.s32.totalorder %s252, %s253
      %p262 = scmp.eq.s32.totalorder %s90, 0
      %p263 = por %p261, %p262
      %p264 = scmp.ne.s32.totalorder %s252, %s253
      %p265 = scmp.eq.s32.totalorder %s91, 1
      %p266 = por %p264, %p265
      %p268 = scmp.ne.s32.totalorder %s253, %s267
      %p269 = scmp.eq.s32.totalorder %s91, 0
      %p270 = por %p268, %p269
      %s272 = sadd.s32 %s271, 1
      %p275 = scmp.eq.s32.totalorder %s85, 1
      %p276 = scmp.ne.s32.totalorder %s271, %s273
      %p277 = scmp.eq.s32.totalorder %s85, 0
      %p278 = por %p276, %p277
      %p279 = scmp.ne.s32.totalorder %s271, %s273
      %p280 = scmp.eq.s32.totalorder %s90, 1
      %p281 = por %p279, %p280
      %p282 = scmp.ne.s32.totalorder %s273, %s274
      %p283 = scmp.eq.s32.totalorder %s90, 0
      %p284 = por %p282, %p283
      %p285 = scmp.ne.s32.totalorder %s273, %s274
      %p286 = scmp.eq.s32.totalorder %s91, 1
      %p287 = por %p285, %p286
      %p289 = scmp.ne.s32.totalorder %s274, %s288
      %p290 = scmp.eq.s32.totalorder %s91, 0
      %p291 = por %p289, %p290
      %s293 = sadd.s32 %s292, 1
      %p296 = scmp.eq.s32.totalorder %s85, 1
      %p297 = scmp.ne.s32.totalorder %s292, %s294
      %p298 = scmp.eq.s32.totalorder %s85, 0
      %p299 = por %p297, %p298
      %p300 = scmp.ne.s32.totalorder %s292, %s294
      %p301 = scmp.eq.s32.totalorder %s90, 1
      %p302 = por %p300, %p301
      %p303 = scmp.ne.s32.totalorder %s294, %s295
      %p304 = scmp.eq.s32.totalorder %s90, 0
      %p305 = por %p303, %p304
      %p306 = scmp.ne.s32.totalorder %s294, %s295
      %p307 = scmp.eq.s32.totalorder %s91, 1
      %p308 = por %p306, %p307
      %p310 = scmp.ne.s32.totalorder %s295, %s309
      %p311 = scmp.eq.s32.totalorder %s91, 0
      %p312 = por %p310, %p311
      %s314 = sadd.s32 %s313, 1
      %p317 = scmp.eq.s32.totalorder %s85, 1
      %p318 = scmp.ne.s32.totalorder %s313, %s315
      %p319 = scmp.eq.s32.totalorder %s85, 0
      %p320 = por %p318, %p319
      %p321 = scmp.ne.s32.totalorder %s313, %s315
      %p322 = scmp.eq.s32.totalorder %s90, 1
      %p323 = por %p321, %p322
      %p324 = scmp.ne.s32.totalorder %s315, %s316
      %p325 = scmp.eq.s32.totalorder %s90, 0
      %p326 = por %p324, %p325
      %p327 = scmp.ne.s32.totalorder %s315, %s316
      %p328 = scmp.eq.s32.totalorder %s91, 1
      %p329 = por %p327, %p328
      %p331 = scmp.ne.s32.totalorder %s316, %s330
      %p332 = scmp.eq.s32.totalorder %s91, 0
      %p333 = por %p331, %p332
      %s335 = sadd.s32 %s334, 1
      %p338 = scmp.eq.s32.totalorder %s85, 1
      %p339 = scmp.ne.s32.totalorder %s334, %s336
      %p340 = scmp.eq.s32.totalorder %s85, 0
      %p341 = por %p339, %p340
      %p342 = scmp.ne.s32.totalorder %s334, %s336
      %p343 = scmp.eq.s32.totalorder %s90, 1
      %p344 = por %p342, %p343
      %p345 = scmp.ne.s32.totalorder %s336, %s337
      %p346 = scmp.eq.s32.totalorder %s90, 0
      %p347 = por %p345, %p346
      %p348 = scmp.ne.s32.totalorder %s336, %s337
      %p349 = scmp.eq.s32.totalorder %s91, 1
      %p350 = por %p348, %p349
      %p352 = scmp.ne.s32.totalorder %s337, %s351
      %p353 = scmp.eq.s32.totalorder %s91, 0
      %p354 = por %p352, %p353
      %s356 = sadd.s32 %s355, 1
      %p359 = scmp.eq.s32.totalorder %s85, 1
      %p360 = scmp.ne.s32.totalorder %s355, %s357
      %p361 = scmp.eq.s32.totalorder %s85, 0
      %p362 = por %p360, %p361
      %p363 = scmp.ne.s32.totalorder %s355, %s357
      %p364 = scmp.eq.s32.totalorder %s90, 1
      %p365 = por %p363, %p364
      %p366 = scmp.ne.s32.totalorder %s357, %s358
      %p367 = scmp.eq.s32.totalorder %s90, 0
      %p368 = por %p366, %p367
      %p369 = scmp.ne.s32.totalorder %s357, %s358
      %p370 = scmp.eq.s32.totalorder %s91, 1
      %p371 = por %p369, %p370
      %p373 = scmp.ne.s32.totalorder %s358, %s372
      %p374 = scmp.eq.s32.totalorder %s91, 0
      %p375 = por %p373, %p374
      %s377 = sadd.s32 %s376, 1
      %p380 = scmp.eq.s32.totalorder %s85, 1
      %p381 = scmp.ne.s32.totalorder %s376, %s378
      %p382 = scmp.eq.s32.totalorder %s85, 0
      %p383 = por %p381, %p382
      %p384 = scmp.ne.s32.totalorder %s376, %s378
      %p385 = scmp.eq.s32.totalorder %s90, 1
      %p386 = por %p384, %p385
      %p387 = scmp.ne.s32.totalorder %s378, %s379
      %p388 = scmp.eq.s32.totalorder %s90, 0
      %p389 = por %p387, %p388
      %p390 = scmp.ne.s32.totalorder %s378, %s379
      %p391 = scmp.eq.s32.totalorder %s91, 1
      %p392 = por %p390, %p391
      %p394 = scmp.ne.s32.totalorder %s379, %s393
      %p395 = scmp.eq.s32.totalorder %s91, 0
      %p396 = por %p394, %p395
      %s398 = sadd.s32 %s397, 1
      %p401 = scmp.eq.s32.totalorder %s85, 1
      %p402 = scmp.ne.s32.totalorder %s397, %s399
      %p403 = scmp.eq.s32.totalorder %s85, 0
      %p404 = por %p402, %p403
      %p405 = scmp.ne.s32.totalorder %s397, %s399
      %p406 = scmp.eq.s32.totalorder %s90, 1
      %p407 = por %p405, %p406
      %p408 = scmp.ne.s32.totalorder %s399, %s400
      %p409 = scmp.eq.s32.totalorder %s90, 0
      %p410 = por %p408, %p409
      %p411 = scmp.ne.s32.totalorder %s399, %s400
      %p412 = scmp.eq.s32.totalorder %s91, 1
      %p413 = por %p411, %p412
      %p415 = scmp.ne.s32.totalorder %s400, %s414
      %p416 = scmp.eq.s32.totalorder %s91, 0
      %p417 = por %p415, %p416
      %s419 = sadd.s32 %s418, 1
      %p422 = scmp.eq.s32.totalorder %s85, 1
      %p423 = scmp.ne.s32.totalorder %s418, %s420
      %p424 = scmp.eq.s32.totalorder %s85, 0
      %p425 = por %p423, %p424
      %p426 = scmp.ne.s32.totalorder %s418, %s420
      %p427 = scmp.eq.s32.totalorder %s90, 1
      %p428 = por %p426, %p427
      %p429 = scmp.ne.s32.totalorder %s420, %s421
      %p430 = scmp.eq.s32.totalorder %s90, 0
      %p431 = por %p429, %p430
      %p432 = scmp.ne.s32.totalorder %s420, %s421
      %p433 = scmp.eq.s32.totalorder %s91, 1
      %p434 = por %p432, %p433
      %p436 = scmp.ne.s32.totalorder %s421, %s435
      %p437 = scmp.eq.s32.totalorder %s91, 0
      %p438 = por %p436, %p437
      %s440 = sadd.s32 %s439, 1
      %p443 = scmp.eq.s32.totalorder %s85, 1
      %p444 = scmp.ne.s32.totalorder %s439, %s441
      %p445 = scmp.eq.s32.totalorder %s85, 0
      %p446 = por %p444, %p445
      %p447 = scmp.ne.s32.totalorder %s439, %s441
      %p448 = scmp.eq.s32.totalorder %s90, 1
      %p449 = por %p447, %p448
      %p450 = scmp.ne.s32.totalorder %s441, %s442
      %p451 = scmp.eq.s32.totalorder %s90, 0
      %p452 = por %p450, %p451
      %p453 = scmp.ne.s32.totalorder %s441, %s442
      %p454 = scmp.eq.s32.totalorder %s91, 1
      %p455 = por %p453, %p454
      %p457 = scmp.ne.s32.totalorder %s442, %s456
      %p458 = scmp.eq.s32.totalorder %s91, 0
      %p459 = por %p457, %p458
      %s461 = sadd.s32 %s460, 1
      %p464 = scmp.eq.s32.totalorder %s85, 1
      %p465 = scmp.ne.s32.totalorder %s460, %s462
      %p466 = scmp.eq.s32.totalorder %s85, 0
      %p467 = por %p465, %p466
      %p468 = scmp.ne.s32.totalorder %s460, %s462
      %p469 = scmp.eq.s32.totalorder %s90, 1
      %p470 = por %p468, %p469
      %p471 = scmp.ne.s32.totalorder %s462, %s463
      %p472 = scmp.eq.s32.totalorder %s90, 0
      %p473 = por %p471, %p472
      %p474 = scmp.ne.s32.totalorder %s462, %s463
      %p475 = scmp.eq.s32.totalorder %s91, 1
      %p476 = por %p474, %p475
      %p478 = scmp.ne.s32.totalorder %s463, %s477
      %p479 = scmp.eq.s32.totalorder %s91, 0
      %p480 = por %p478, %p479
      %s482 = sadd.s32 %s481, 1
      %p485 = scmp.eq.s32.totalorder %s85, 1
      %p486 = scmp.ne.s32.totalorder %s481, %s483
      %p487 = scmp.eq.s32.totalorder %s85, 0
      %p488 = por %p486, %p487
      %p489 = scmp.ne.s32.totalorder %s481, %s483
      %p490 = scmp.eq.s32.totalorder %s90, 1
      %p491 = por %p489, %p490
      %p492 = scmp.ne.s32.totalorder %s483, %s484
      %p493 = scmp.eq.s32.totalorder %s90, 0
      %p494 = por %p492, %p493
      %p495 = scmp.ne.s32.totalorder %s483, %s484
      %p496 = scmp.eq.s32.totalorder %s91, 1
      %p497 = por %p495, %p496
      %p499 = scmp.ne.s32.totalorder %s484, %s498
      %p500 = scmp.eq.s32.totalorder %s91, 0
      %p501 = por %p499, %p500
      %s503 = sadd.s32 %s502, 1
      %p506 = scmp.eq.s32.totalorder %s85, 1
      %p507 = scmp.ne.s32.totalorder %s502, %s504
      %p508 = scmp.eq.s32.totalorder %s85, 0
      %p509 = por %p507, %p508
      %p510 = scmp.ne.s32.totalorder %s502, %s504
      %p511 = scmp.eq.s32.totalorder %s90, 1
      %p512 = por %p510, %p511
      %p513 = scmp.ne.s32.totalorder %s504, %s505
      %p514 = scmp.eq.s32.totalorder %s90, 0
      %p515 = por %p513, %p514
      %p516 = scmp.ne.s32.totalorder %s504, %s505
      %p517 = scmp.eq.s32.totalorder %s91, 1
      %p518 = por %p516, %p517
      %p520 = scmp.ne.s32.totalorder %s505, %s519
      %p521 = scmp.eq.s32.totalorder %s91, 0
      %p522 = por %p520, %p521
      %s524 = sadd.s32 %s523, 1
      %p527 = scmp.eq.s32.totalorder %s85, 1
      %p528 = scmp.ne.s32.totalorder %s523, %s525
      %p529 = scmp.eq.s32.totalorder %s85, 0
      %p530 = por %p528, %p529
      %p531 = scmp.ne.s32.totalorder %s523, %s525
      %p532 = scmp.eq.s32.totalorder %s90, 1
      %p533 = por %p531, %p532
      %p534 = scmp.ne.s32.totalorder %s525, %s526
      %p535 = scmp.eq.s32.totalorder %s90, 0
      %p536 = por %p534, %p535
      %p537 = scmp.ne.s32.totalorder %s525, %s526
      %p538 = scmp.eq.s32.totalorder %s91, 1
      %p539 = por %p537, %p538
      %p541 = scmp.ne.s32.totalorder %s526, %s540
      %p542 = scmp.eq.s32.totalorder %s91, 0
      %p543 = por %p541, %p542
      %s545 = sadd.s32 %s544, 1
      %p548 = scmp.eq.s32.totalorder %s85, 1
      %p549 = scmp.ne.s32.totalorder %s544, %s546
      %p550 = scmp.eq.s32.totalorder %s85, 0
      %p551 = por %p549, %p550
      %p552 = scmp.ne.s32.totalorder %s544, %s546
      %p553 = scmp.eq.s32.totalorder %s90, 1
      %p554 = por %p552, %p553
      %p555 = scmp.ne.s32.totalorder %s546, %s547
      %p556 = scmp.eq.s32.totalorder %s90, 0
      %p557 = por %p555, %p556
      %p558 = scmp.ne.s32.totalorder %s546, %s547
      %p559 = scmp.eq.s32.totalorder %s91, 1
      %p560 = por %p558, %p559
      %p562 = scmp.ne.s32.totalorder %s547, %s561
      %p563 = scmp.eq.s32.totalorder %s91, 0
      %p564 = por %p562, %p563
      %s566 = sadd.s32 %s565, 1
      %p569 = scmp.eq.s32.totalorder %s85, 1
      %p570 = scmp.ne.s32.totalorder %s565, %s567
      %p571 = scmp.eq.s32.totalorder %s85, 0
      %p572 = por %p570, %p571
      %p573 = scmp.ne.s32.totalorder %s565, %s567
      %p574 = scmp.eq.s32.totalorder %s90, 1
      %p575 = por %p573, %p574
      %p576 = scmp.ne.s32.totalorder %s567, %s568
      %p577 = scmp.eq.s32.totalorder %s90, 0
      %p578 = por %p576, %p577
      %p579 = scmp.ne.s32.totalorder %s567, %s568
      %p580 = scmp.eq.s32.totalorder %s91, 1
      %p581 = por %p579, %p580
      %p583 = scmp.ne.s32.totalorder %s568, %s582
      %p584 = scmp.eq.s32.totalorder %s91, 0
      %p585 = por %p583, %p584
      %s587 = sadd.s32 %s586, 1
      %p590 = scmp.eq.s32.totalorder %s85, 1
      %p591 = scmp.ne.s32.totalorder %s586, %s588
      %p592 = scmp.eq.s32.totalorder %s85, 0
      %p593 = por %p591, %p592
      %p594 = scmp.ne.s32.totalorder %s586, %s588
      %p595 = scmp.eq.s32.totalorder %s90, 1
      %p596 = por %p594, %p595
      %p597 = scmp.ne.s32.totalorder %s588, %s589
      %p598 = scmp.eq.s32.totalorder %s90, 0
      %p599 = por %p597, %p598
      %p600 = scmp.ne.s32.totalorder %s588, %s589
      %p601 = scmp.eq.s32.totalorder %s91, 1
      %p602 = por %p600, %p601
      %p604 = scmp.ne.s32.totalorder %s589, %s603
      %p605 = scmp.eq.s32.totalorder %s91, 0
      %p606 = por %p604, %p605
      %s608 = sadd.s32 %s607, 1
      %p611 = scmp.eq.s32.totalorder %s85, 1
      %p612 = scmp.ne.s32.totalorder %s607, %s609
      %p613 = scmp.eq.s32.totalorder %s85, 0
      %p614 = por %p612, %p613
      %p615 = scmp.ne.s32.totalorder %s607, %s609
      %p616 = scmp.eq.s32.totalorder %s90, 1
      %p617 = por %p615, %p616
      %p618 = scmp.ne.s32.totalorder %s609, %s610
      %p619 = scmp.eq.s32.totalorder %s90, 0
      %p620 = por %p618, %p619
      %p621 = scmp.ne.s32.totalorder %s609, %s610
      %p622 = scmp.eq.s32.totalorder %s91, 1
      %p623 = por %p621, %p622
      %p625 = scmp.ne.s32.totalorder %s610, %s624
      %p626 = scmp.eq.s32.totalorder %s91, 0
      %p627 = por %p625, %p626
      %s629 = sadd.s32 %s628, 1
      %p632 = scmp.eq.s32.totalorder %s85, 1
      %p633 = scmp.ne.s32.totalorder %s628, %s630
      %p634 = scmp.eq.s32.totalorder %s85, 0
      %p635 = por %p633, %p634
      %p636 = scmp.ne.s32.totalorder %s628, %s630
      %p637 = scmp.eq.s32.totalorder %s90, 1
      %p638 = por %p636, %p637
      %p639 = scmp.ne.s32.totalorder %s630, %s631
      %p640 = scmp.eq.s32.totalorder %s90, 0
      %p641 = por %p639, %p640
      %p642 = scmp.ne.s32.totalorder %s630, %s631
      %p643 = scmp.eq.s32.totalorder %s91, 1
      %p644 = por %p642, %p643
      %p646 = scmp.ne.s32.totalorder %s631, %s645
      %p647 = scmp.eq.s32.totalorder %s91, 0
      %p648 = por %p646, %p647
      %s650 = sadd.s32 %s649, 1
      %p653 = scmp.eq.s32.totalorder %s85, 1
      %p654 = scmp.ne.s32.totalorder %s649, %s651
      %p655 = scmp.eq.s32.totalorder %s85, 0
      %p656 = por %p654, %p655
      %p657 = scmp.ne.s32.totalorder %s649, %s651
      %p658 = scmp.eq.s32.totalorder %s90, 1
      %p659 = por %p657, %p658
      %p660 = scmp.ne.s32.totalorder %s651, %s652
      %p661 = scmp.eq.s32.totalorder %s90, 0
      %p662 = por %p660, %p661
      %p663 = scmp.ne.s32.totalorder %s651, %s652
      %p664 = scmp.eq.s32.totalorder %s91, 1
      %p665 = por %p663, %p664
      %p667 = scmp.ne.s32.totalorder %s652, %s666
      %p668 = scmp.eq.s32.totalorder %s91, 0
      %p669 = por %p667, %p668
      %s671 = sadd.s32 %s670, 1
      %p674 = scmp.eq.s32.totalorder %s85, 1
      %p675 = scmp.ne.s32.totalorder %s670, %s672
      %p676 = scmp.eq.s32.totalorder %s85, 0
      %p677 = por %p675, %p676
      %p678 = scmp.ne.s32.totalorder %s670, %s672
      %p679 = scmp.eq.s32.totalorder %s90, 1
      %p680 = por %p678, %p679
      %p681 = scmp.ne.s32.totalorder %s672, %s673
      %p682 = scmp.eq.s32.totalorder %s90, 0
      %p683 = por %p681, %p682
      %p684 = scmp.ne.s32.totalorder %s672, %s673
      %p685 = scmp.eq.s32.totalorder %s91, 1
      %p686 = por %p684, %p685
      %p688 = scmp.ne.s32.totalorder %s673, %s687
      %p689 = scmp.eq.s32.totalorder %s91, 0
      %p690 = por %p688, %p689
      %s692 = sadd.s32 %s691, 1
      %p695 = scmp.eq.s32.totalorder %s85, 1
      %p696 = scmp.ne.s32.totalorder %s691, %s693
      %p697 = scmp.eq.s32.totalorder %s85, 0
      %p698 = por %p696, %p697
      %p699 = scmp.ne.s32.totalorder %s691, %s693
      %p700 = scmp.eq.s32.totalorder %s90, 1
      %p701 = por %p699, %p700
      %p702 = scmp.ne.s32.totalorder %s693, %s694
      %p703 = scmp.eq.s32.totalorder %s90, 0
      %p704 = por %p702, %p703
      %p705 = scmp.ne.s32.totalorder %s693, %s694
      %p706 = scmp.eq.s32.totalorder %s91, 1
      %p707 = por %p705, %p706
      %p709 = scmp.ne.s32.totalorder %s694, %s708
      %p710 = scmp.eq.s32.totalorder %s91, 0
      %p711 = por %p709, %p710
      %s712 = ssub.s32 %s85, %s92
      %p713 = scmp.eq.s32.totalorder %s712, 0
      %s715 = sadd.s32 %s714, 1
      %s716 = scalar_select %p713, %s714, %s715
      %p719 = pneg %p713
      %p720 = scmp.eq.s32.totalorder %s85, 1
      %p721 = por %p719, %p720
      %p722 = scmp.ne.s32.totalorder %s714, %s717
      %p723 = scmp.eq.s32.totalorder %s85, 0
      %p724 = por %p722, %p723
      %p725 = scmp.ne.s32.totalorder %s714, %s717
      %p726 = scmp.eq.s32.totalorder %s90, 1
      %p727 = por %p725, %p726
      %p728 = scmp.ne.s32.totalorder %s717, %s718
      %p729 = scmp.eq.s32.totalorder %s90, 0
      %p730 = por %p728, %p729
      %p731 = scmp.ne.s32.totalorder %s717, %s718
      %p732 = scmp.eq.s32.totalorder %s91, 1
      %p733 = por %p731, %p732
      %p735 = scmp.ne.s32.totalorder %s718, %s734
      %p736 = scmp.eq.s32.totalorder %s91, 0
      %p737 = por %p735, %p736
      %s738 = ssub.s32 %s85, %s92
      %p739 = scmp.eq.s32.totalorder %s738, 0
      %s741 = sadd.s32 %s740, 1
      %s742 = scalar_select %p739, %s740, %s741
      %p745 = pneg %p739
      %p746 = scmp.eq.s32.totalorder %s85, 1
      %p747 = por %p745, %p746
      %p748 = scmp.ne.s32.totalorder %s740, %s743
      %p749 = scmp.eq.s32.totalorder %s85, 0
      %p750 = por %p748, %p749
      %p751 = scmp.ne.s32.totalorder %s740, %s743
      %p752 = scmp.eq.s32.totalorder %s90, 1
      %p753 = por %p751, %p752
      %p754 = scmp.ne.s32.totalorder %s743, %s744
      %p755 = scmp.eq.s32.totalorder %s90, 0
      %p756 = por %p754, %p755
      %p757 = scmp.ne.s32.totalorder %s743, %s744
      %p758 = scmp.eq.s32.totalorder %s91, 1
      %p759 = por %p757, %p758
      %p761 = scmp.ne.s32.totalorder %s744, %s760
      %p762 = scmp.eq.s32.totalorder %s91, 0
      %p763 = por %p761, %p762
      %p764 = scmp.le.s32.totalorder 1, %s85
      %p765 = scmp.lt.s32.totalorder %s85, 3
      %p766 = pnand %p764, %p765
      %p767 = pneg %p766
      // Predicated region
      $region9: #{tpu_custom_call.1} parent=5 // pred_check
        _
      $region10: #{tpu_custom_call.1} parent=5 // pred_check_branch
        %769 = sbr.rel (%p766) target = $region12
      $region11: #{tpu_custom_call.1} parent=5 // pred_region
        %s770 = ssub.s32 %s85, 1
        // Predicated region
        $region13: #{tpu_custom_call.1} parent=11 // pred_check
          %p771 = pneg %p158
        $region14: #{tpu_custom_call.1} parent=11 // pred_check_branch
          %773 = sbr.rel (%p771) target = $region16
        $region15: #{tpu_custom_call.1} parent=11 // pred_region
          %s775 = ssub.s32 128, 128
          %776 = vsyncadd [#allocation7], %s775
          %s778 = sshll.u32 [#allocation6], 4
          %s779 = int_to_ptr.vmem [resolvable:$true] %s778
          %781 = dma.hbm_to_vmem [thread:$0]  %s5, 128, %s779, [#allocation7]
        $region16: #{tpu_custom_call.1} parent=11 // pred_fallthru
          _
        // Predicated region
        $region17: #{tpu_custom_call.1} parent=11 // pred_check
          %p782 = pneg %p179
        $region18: #{tpu_custom_call.1} parent=11 // pred_check_branch
          %784 = sbr.rel (%p782) target = $region20
        $region19: #{tpu_custom_call.1} parent=11 // pred_region
          _
        $region20: #{tpu_custom_call.1} parent=11 // pred_fallthru
          _
        // Predicated region
        $region21: #{tpu_custom_call.1} parent=11 // pred_check
          %p785 = pneg %p200
        $region22: #{tpu_custom_call.1} parent=11 // pred_check_branch
          %787 = sbr.rel (%p785) target = $region24
        $region23: #{tpu_custom_call.1} parent=11 // pred_region
          %s789 = ssub.s32 16, 16
          %790 = vsyncadd [#allocation7], %s789
          %s792 = sshll.u32 [#allocation8], 4
          %s793 = int_to_ptr.vmem [resolvable:$true] %s792
          %795 = dma.hbm_to_vmem [thread:$0]  %s9, 16, %s793, [#allocation7]
        $region24: #{tpu_custom_call.1} parent=11 // pred_fallthru
          _
        // Predicated region
        $region25: #{tpu_custom_call.1} parent=11 // pred_check
          %p796 = pneg %p221
        $region26: #{tpu_custom_call.1} parent=11 // pred_check_branch
          %798 = sbr.rel (%p796) target = $region28
        $region27: #{tpu_custom_call.1} parent=11 // pred_region
          _
        $region28: #{tpu_custom_call.1} parent=11 // pred_fallthru
          _
        // Predicated region
        $region29: #{tpu_custom_call.1} parent=11 // pred_check
          %p799 = pneg %p242
        $region30: #{tpu_custom_call.1} parent=11 // pred_check_branch
          %801 = sbr.rel (%p799) target = $region32
        $region31: #{tpu_custom_call.1} parent=11 // pred_region
          %s803 = ssub.s32 16, 16
          %804 = vsyncadd [#allocation10], %s803
          %s806 = sshll.u32 [#allocation9], 4
          %s807 = int_to_ptr.vmem [resolvable:$true] %s806
          %809 = dma.hbm_to_vmem [thread:$0]  %s13, 16, %s807, [#allocation10]
        $region32: #{tpu_custom_call.1} parent=11 // pred_fallthru
          _
        // Predicated region
        $region33: #{tpu_custom_call.1} parent=11 // pred_check
          %p810 = pneg %p263
        $region34: #{tpu_custom_call.1} parent=11 // pred_check_branch
          %812 = sbr.rel (%p810) target = $region36
        $region35: #{tpu_custom_call.1} parent=11 // pred_region
          %s814 = ssub.s32 256, 256
          %815 = vsyncadd [#allocation10], %s814
          %s816 = sshll.u32 [#allocation11], 4
          %s817 = int_to_ptr.vmem [resolvable:$true] %s816
          %822 = dma.hbm_to_vmem [thread:$0]  %s15, 256, %s817, [#allocation10], 64, 64, 4
        $region36: #{tpu_custom_call.1} parent=11 // pred_fallthru
          _
        // Predicated region
        $region37: #{tpu_custom_call.1} parent=11 // pred_check
          %p823 = pneg %p284
        $region38: #{tpu_custom_call.1} parent=11 // pred_check_branch
          %825 = sbr.rel (%p823) target = $region40
        $region39: #{tpu_custom_call.1} parent=11 // pred_region
          %s827 = ssub.s32 16, 16
          %828 = vsyncadd [#allocation13], %s827
          %s830 = sshll.u32 [#allocation12], 4
          %s831 = int_to_ptr.vmem [resolvable:$true] %s830
          %833 = dma.hbm_to_vmem [thread:$0]  %s17, 16, %s831, [#allocation13]
        $region40: #{tpu_custom_call.1} parent=11 // pred_fallthru
          _
        // Predicated region
        $region41: #{tpu_custom_call.1} parent=11 // pred_check
          %p834 = pneg %p305
        $region42: #{tpu_custom_call.1} parent=11 // pred_check_branch
          %836 = sbr.rel (%p834) target = $region44
        $region43: #{tpu_custom_call.1} parent=11 // pred_region
          _
        $region44: #{tpu_custom_call.1} parent=11 // pred_fallthru
          _
        // Predicated region
        $region45: #{tpu_custom_call.1} parent=11 // pred_check
          %p837 = pneg %p326
        $region46: #{tpu_custom_call.1} parent=11 // pred_check_branch
          %839 = sbr.rel (%p837) target = $region48
        $region47: #{tpu_custom_call.1} parent=11 // pred_region
          %s841 = ssub.s32 16, 16
          %842 = vsyncadd [#allocation13], %s841
          %s844 = sshll.u32 [#allocation14], 4
          %s845 = int_to_ptr.vmem [resolvable:$true] %s844
          %847 = dma.hbm_to_vmem [thread:$0]  %s21, 16, %s845, [#allocation13]
        $region48: #{tpu_custom_call.1} parent=11 // pred_fallthru
          _
        // Predicated region
        $region49: #{tpu_custom_call.1} parent=11 // pred_check
          %p848 = pneg %p347
        $region50: #{tpu_custom_call.1} parent=11 // pred_check_branch
          %850 = sbr.rel (%p848) target = $region52
        $region51: #{tpu_custom_call.1} parent=11 // pred_region
          %s852 = ssub.s32 16, 16
          %853 = vsyncadd [#allocation16], %s852
          %s855 = sshll.u32 [#allocation15], 4
          %s856 = int_to_ptr.vmem [resolvable:$true] %s855
          %858 = dma.hbm_to_vmem [thread:$0]  %s23, 16, %s856, [#allocation16]
        $region52: #{tpu_custom_call.1} parent=11 // pred_fallthru
          _
        // Predicated region
        $region53: #{tpu_custom_call.1} parent=11 // pred_check
          %p859 = pneg %p368
        $region54: #{tpu_custom_call.1} parent=11 // pred_check_branch
          %861 = sbr.rel (%p859) target = $region56
        $region55: #{tpu_custom_call.1} parent=11 // pred_region
          %s863 = ssub.s32 16, 16
          %864 = vsyncadd [#allocation16], %s863
          %s866 = sshll.u32 [#allocation17], 4
          %s867 = int_to_ptr.vmem [resolvable:$true] %s866
          %869 = dma.hbm_to_vmem [thread:$0]  %s25, 16, %s867, [#allocation16]
        $region56: #{tpu_custom_call.1} parent=11 // pred_fallthru
          _
        // Predicated region
        $region57: #{tpu_custom_call.1} parent=11 // pred_check
          %p870 = pneg %p389
        $region58: #{tpu_custom_call.1} parent=11 // pred_check_branch
          %872 = sbr.rel (%p870) target = $region60
        $region59: #{tpu_custom_call.1} parent=11 // pred_region
          %s874 = ssub.s32 256, 256
          %875 = vsyncadd [#allocation19], %s874
          %s876 = sshll.u32 [#allocation18], 4
          %s877 = int_to_ptr.vmem [resolvable:$true] %s876
          %882 = dma.hbm_to_vmem [thread:$0]  %s27, 256, %s877, [#allocation19], 64, 64, 4
        $region60: #{tpu_custom_call.1} parent=11 // pred_fallthru
          _
        // Predicated region
        $region61: #{tpu_custom_call.1} parent=11 // pred_check
          %p883 = pneg %p410
        $region62: #{tpu_custom_call.1} parent=11 // pred_check_branch
          %885 = sbr.rel (%p883) target = $region64
        $region63: #{tpu_custom_call.1} parent=11 // pred_region
          %s887 = ssub.s32 16, 16
          %888 = vsyncadd [#allocation19], %s887
          %s890 = sshll.u32 [#allocation20], 4
          %s891 = int_to_ptr.vmem [resolvable:$true] %s890
          %893 = dma.hbm_to_vmem [thread:$0]  %s29, 16, %s891, [#allocation19]
        $region64: #{tpu_custom_call.1} parent=11 // pred_fallthru
          _
        // Predicated region
        $region65: #{tpu_custom_call.1} parent=11 // pred_check
          %p894 = pneg %p431
        $region66: #{tpu_custom_call.1} parent=11 // pred_check_branch
          %896 = sbr.rel (%p894) target = $region68
        $region67: #{tpu_custom_call.1} parent=11 // pred_region
          %s898 = ssub.s32 256, 256
          %899 = vsyncadd [#allocation22], %s898
          %s900 = sshll.u32 [#allocation21], 4
          %s901 = int_to_ptr.vmem [resolvable:$true] %s900
          %906 = dma.hbm_to_vmem [thread:$0]  %s31, 256, %s901, [#allocation22], 64, 64, 4
        $region68: #{tpu_custom_call.1} parent=11 // pred_fallthru
          _
        // Predicated region
        $region69: #{tpu_custom_call.1} parent=11 // pred_check
          %p907 = pneg %p452
        $region70: #{tpu_custom_call.1} parent=11 // pred_check_branch
          %909 = sbr.rel (%p907) target = $region72
        $region71: #{tpu_custom_call.1} parent=11 // pred_region
          %s911 = ssub.s32 16, 16
          %912 = vsyncadd [#allocation22], %s911
          %s914 = sshll.u32 [#allocation23], 4
          %s915 = int_to_ptr.vmem [resolvable:$true] %s914
          %917 = dma.hbm_to_vmem [thread:$0]  %s33, 16, %s915, [#allocation22]
        $region72: #{tpu_custom_call.1} parent=11 // pred_fallthru
          _
        // Predicated region
        $region73: #{tpu_custom_call.1} parent=11 // pred_check
          %p918 = pneg %p473
        $region74: #{tpu_custom_call.1} parent=11 // pred_check_branch
          %920 = sbr.rel (%p918) target = $region76
        $region75: #{tpu_custom_call.1} parent=11 // pred_region
          %s922 = ssub.s32 256, 256
          %923 = vsyncadd [#allocation25], %s922
          %s924 = sshll.u32 [#allocation24], 4
          %s925 = int_to_ptr.vmem [resolvable:$true] %s924
          %930 = dma.hbm_to_vmem [thread:$0]  %s35, 256, %s925, [#allocation25], 64, 64, 4
        $region76: #{tpu_custom_call.1} parent=11 // pred_fallthru
          _
        // Predicated region
        $region77: #{tpu_custom_call.1} parent=11 // pred_check
          %p931 = pneg %p494
        $region78: #{tpu_custom_call.1} parent=11 // pred_check_branch
          %933 = sbr.rel (%p931) target = $region80
        $region79: #{tpu_custom_call.1} parent=11 // pred_region
          %s935 = ssub.s32 16, 16
          %936 = vsyncadd [#allocation25], %s935
          %s938 = sshll.u32 [#allocation26], 4
          %s939 = int_to_ptr.vmem [resolvable:$true] %s938
          %941 = dma.hbm_to_vmem [thread:$0]  %s37, 16, %s939, [#allocation25]
        $region80: #{tpu_custom_call.1} parent=11 // pred_fallthru
          _
        // Predicated region
        $region81: #{tpu_custom_call.1} parent=11 // pred_check
          %p942 = pneg %p515
        $region82: #{tpu_custom_call.1} parent=11 // pred_check_branch
          %944 = sbr.rel (%p942) target = $region84
        $region83: #{tpu_custom_call.1} parent=11 // pred_region
          %s946 = ssub.s32 256, 256
          %947 = vsyncadd [#allocation28], %s946
          %s948 = sshll.u32 [#allocation27], 4
          %s949 = int_to_ptr.vmem [resolvable:$true] %s948
          %954 = dma.hbm_to_vmem [thread:$0]  %s39, 256, %s949, [#allocation28], 64, 64, 4
        $region84: #{tpu_custom_call.1} parent=11 // pred_fallthru
          _
        // Predicated region
        $region85: #{tpu_custom_call.1} parent=11 // pred_check
          %p955 = pneg %p536
        $region86: #{tpu_custom_call.1} parent=11 // pred_check_branch
          %957 = sbr.rel (%p955) target = $region88
        $region87: #{tpu_custom_call.1} parent=11 // pred_region
          _
        $region88: #{tpu_custom_call.1} parent=11 // pred_fallthru
          _
        // Predicated region
        $region89: #{tpu_custom_call.1} parent=11 // pred_check
          %p958 = pneg %p557
        $region90: #{tpu_custom_call.1} parent=11 // pred_check_branch
          %960 = sbr.rel (%p958) target = $region92
        $region91: #{tpu_custom_call.1} parent=11 // pred_region
          _
        $region92: #{tpu_custom_call.1} parent=11 // pred_fallthru
          _
        // Predicated region
        $region93: #{tpu_custom_call.1} parent=11 // pred_check
          %p961 = pneg %p578
        $region94: #{tpu_custom_call.1} parent=11 // pred_check_branch
          %963 = sbr.rel (%p961) target = $region96
        $region95: #{tpu_custom_call.1} parent=11 // pred_region
          _
        $region96: #{tpu_custom_call.1} parent=11 // pred_fallthru
          _
        // Predicated region
        $region97: #{tpu_custom_call.1} parent=11 // pred_check
          %p964 = pneg %p599
        $region98: #{tpu_custom_call.1} parent=11 // pred_check_branch
          %966 = sbr.rel (%p964) target = $region100
        $region99: #{tpu_custom_call.1} parent=11 // pred_region
          %s968 = ssub.s32 256, 256
          %969 = vsyncadd [#allocation28], %s968
          %s970 = sshll.u32 [#allocation29], 4
          %s971 = int_to_ptr.vmem [resolvable:$true] %s970
          %976 = dma.hbm_to_vmem [thread:$0]  %s47, 256, %s971, [#allocation28], 64, 64, 4
        $region100: #{tpu_custom_call.1} parent=11 // pred_fallthru
          _
        // Predicated region
        $region101: #{tpu_custom_call.1} parent=11 // pred_check
          %p977 = pneg %p620
        $region102: #{tpu_custom_call.1} parent=11 // pred_check_branch
          %979 = sbr.rel (%p977) target = $region104
        $region103: #{tpu_custom_call.1} parent=11 // pred_region
          _
        $region104: #{tpu_custom_call.1} parent=11 // pred_fallthru
          _
        // Predicated region
        $region105: #{tpu_custom_call.1} parent=11 // pred_check
          %p980 = pneg %p641
        $region106: #{tpu_custom_call.1} parent=11 // pred_check_branch
          %982 = sbr.rel (%p980) target = $region108
        $region107: #{tpu_custom_call.1} parent=11 // pred_region
          _
        $region108: #{tpu_custom_call.1} parent=11 // pred_fallthru
          _
        // Predicated region
        $region109: #{tpu_custom_call.1} parent=11 // pred_check
          %p983 = pneg %p662
        $region110: #{tpu_custom_call.1} parent=11 // pred_check_branch
          %985 = sbr.rel (%p983) target = $region112
        $region111: #{tpu_custom_call.1} parent=11 // pred_region
          _
        $region112: #{tpu_custom_call.1} parent=11 // pred_fallthru
          _
        // Predicated region
        $region113: #{tpu_custom_call.1} parent=11 // pred_check
          %p986 = pneg %p683
        $region114: #{tpu_custom_call.1} parent=11 // pred_check_branch
          %988 = sbr.rel (%p986) target = $region116
        $region115: #{tpu_custom_call.1} parent=11 // pred_region
          _
        $region116: #{tpu_custom_call.1} parent=11 // pred_fallthru
          _
        // Predicated region
        $region117: #{tpu_custom_call.1} parent=11 // pred_check
          %p989 = pneg %p704
        $region118: #{tpu_custom_call.1} parent=11 // pred_check_branch
          %991 = sbr.rel (%p989) target = $region120
        $region119: #{tpu_custom_call.1} parent=11 // pred_region
          _
        $region120: #{tpu_custom_call.1} parent=11 // pred_fallthru
          _
      $region12: #{tpu_custom_call.1} parent=5 // pred_fallthru
        _
      %p992 = scmp.lt.s32.totalorder %s85, 2
      // Predicated region
      $region121: #{tpu_custom_call.1} parent=5 // pred_check
        %p993 = pneg %p992
      $region122: #{tpu_custom_call.1} parent=5 // pred_check_branch
        %995 = sbr.rel (%p993) target = $region124
      $region123: #{tpu_custom_call.1} parent=5 // pred_region
        // Predicated region
        $region125: #{tpu_custom_call.1} parent=123 // pred_check
          %p996 = pneg %p105
        $region126: #{tpu_custom_call.1} parent=123 // pred_check_branch
          %998 = sbr.rel (%p996) target = $region128
        $region127: #{tpu_custom_call.1} parent=123 // pred_region
          %p999 = scmp.lt.s32.totalorder %s85, 1
          %s1000 = scalar_select %p999, %s85, 1
          %s1001 = smul.addr %s1000, 8
          %s1002 = scalar_lea.vmem %s1, %s1001
        $region128: #{tpu_custom_call.1} parent=123 // pred_fallthru
          _
        // Predicated region
        $region129: #{tpu_custom_call.1} parent=123 // pred_check
          %p1003 = pneg %p131
        $region130: #{tpu_custom_call.1} parent=123 // pred_check_branch
          %1005 = sbr.rel (%p1003) target = $region132
        $region131: #{tpu_custom_call.1} parent=123 // pred_region
          %s1006 = sand.u32 %s121, 1
          %s1007 = scalar_lea.sflag [#allocation4], %s1006
          %s1008 = sand.u32 %s121, 1
          %s1009 = smul.addr %s1008, 4
          %s1010 = scalar_lea.vmem [#allocation3], %s1009
          %s1012 = ssub.s32 64, 64
          %1013 = vsyncadd %s1007, %s1012
          %s1014 = smul.addr %s85, 64
          %s1015 = scalar_lea.hbm %s3, %s1014
          %s1017 = sshll.u32 %s1010, 4
          %s1018 = int_to_ptr.vmem [resolvable:$true] %s1017
          %1020 = dma.hbm_to_vmem [thread:$0]  %s1015, 64, %s1018, %s1007
        $region132: #{tpu_custom_call.1} parent=123 // pred_fallthru
          _
      $region124: #{tpu_custom_call.1} parent=5 // pred_fallthru
        _
      %p1021 = scmp.le.s32.totalorder 1, %s85
      %p1022 = scmp.lt.s32.totalorder %s85, 3
      %p1023 = pnand %p1021, %p1022
      %p1024 = pneg %p1023
      // Predicated region
      $region133: #{tpu_custom_call.1} parent=5 // pred_check
        _
      $region134: #{tpu_custom_call.1} parent=5 // pred_check_branch
        %1026 = sbr.rel (%p1023) target = $region136
      $region135: #{tpu_custom_call.1} parent=5 // pred_region
        %s1027 = ssub.s32 %s85, 1
        %s1028 = sand.u32 %s124, 1
        %s1029 = scalar_lea.sflag [#allocation4], %s1028
        %s1030 = sand.u32 %s124, 1
        %s1031 = smul.addr %s1030, 4
        %s1032 = scalar_lea.vmem [#allocation3], %s1031
        // Predicated region
        $region137: #{tpu_custom_call.1} parent=135 // pred_check
          %p1033 = pneg %p137
        $region138: #{tpu_custom_call.1} parent=135 // pred_check_branch
          %1035 = sbr.rel (%p1033) target = $region140
        $region139: #{tpu_custom_call.1} parent=135 // pred_region
          %1036 = dma.done %s1029, 64
        $region140: #{tpu_custom_call.1} parent=135 // pred_fallthru
          _
        // Predicated region
        $region141: #{tpu_custom_call.1} parent=135 // pred_check
          %p1037 = pneg %p158
        $region142: #{tpu_custom_call.1} parent=135 // pred_check_branch
          %1039 = sbr.rel (%p1037) target = $region144
        $region143: #{tpu_custom_call.1} parent=135 // pred_region
          %1040 = dma.done [#allocation7], 128
        $region144: #{tpu_custom_call.1} parent=135 // pred_fallthru
          _
        // Predicated region
        $region145: #{tpu_custom_call.1} parent=135 // pred_check
          %p1041 = pneg %p200
        $region146: #{tpu_custom_call.1} parent=135 // pred_check_branch
          %1043 = sbr.rel (%p1041) target = $region148
        $region147: #{tpu_custom_call.1} parent=135 // pred_region
          %1044 = dma.done [#allocation7], 16
        $region148: #{tpu_custom_call.1} parent=135 // pred_fallthru
          _
        // Predicated region
        $region149: #{tpu_custom_call.1} parent=135 // pred_check
          %p1045 = pneg %p242
        $region150: #{tpu_custom_call.1} parent=135 // pred_check_branch
          %1047 = sbr.rel (%p1045) target = $region152
        $region151: #{tpu_custom_call.1} parent=135 // pred_region
          %1048 = dma.done [#allocation10], 16
        $region152: #{tpu_custom_call.1} parent=135 // pred_fallthru
          _
        // Predicated region
        $region153: #{tpu_custom_call.1} parent=135 // pred_check
          %p1049 = pneg %p263
        $region154: #{tpu_custom_call.1} parent=135 // pred_check_branch
          %1051 = sbr.rel (%p1049) target = $region156
        $region155: #{tpu_custom_call.1} parent=135 // pred_region
          %1052 = dma.done [#allocation10], 256
        $region156: #{tpu_custom_call.1} parent=135 // pred_fallthru
          _
        // Predicated region
        $region157: #{tpu_custom_call.1} parent=135 // pred_check
          %p1053 = pneg %p284
        $region158: #{tpu_custom_call.1} parent=135 // pred_check_branch
          %1055 = sbr.rel (%p1053) target = $region160
        $region159: #{tpu_custom_call.1} parent=135 // pred_region
          %1056 = dma.done [#allocation13], 16
        $region160: #{tpu_custom_call.1} parent=135 // pred_fallthru
          _
        // Predicated region
        $region161: #{tpu_custom_call.1} parent=135 // pred_check
          %p1057 = pneg %p326
        $region162: #{tpu_custom_call.1} parent=135 // pred_check_branch
          %1059 = sbr.rel (%p1057) target = $region164
        $region163: #{tpu_custom_call.1} parent=135 // pred_region
          %1060 = dma.done [#allocation13], 16
        $region164: #{tpu_custom_call.1} parent=135 // pred_fallthru
          _
        // Predicated region
        $region165: #{tpu_custom_call.1} parent=135 // pred_check
          %p1061 = pneg %p347
        $region166: #{tpu_custom_call.1} parent=135 // pred_check_branch
          %1063 = sbr.rel (%p1061) target = $region168
        $region167: #{tpu_custom_call.1} parent=135 // pred_region
          %1064 = dma.done [#allocation16], 16
        $region168: #{tpu_custom_call.1} parent=135 // pred_fallthru
          _
        // Predicated region
        $region169: #{tpu_custom_call.1} parent=135 // pred_check
          %p1065 = pneg %p368
        $region170: #{tpu_custom_call.1} parent=135 // pred_check_branch
          %1067 = sbr.rel (%p1065) target = $region172
        $region171: #{tpu_custom_call.1} parent=135 // pred_region
          %1068 = dma.done [#allocation16], 16
        $region172: #{tpu_custom_call.1} parent=135 // pred_fallthru
          _
        // Predicated region
        $region173: #{tpu_custom_call.1} parent=135 // pred_check
          %p1069 = pneg %p389
        $region174: #{tpu_custom_call.1} parent=135 // pred_check_branch
          %1071 = sbr.rel (%p1069) target = $region176
        $region175: #{tpu_custom_call.1} parent=135 // pred_region
          %1072 = dma.done [#allocation19], 256
        $region176: #{tpu_custom_call.1} parent=135 // pred_fallthru
          _
        // Predicated region
        $region177: #{tpu_custom_call.1} parent=135 // pred_check
          %p1073 = pneg %p410
        $region178: #{tpu_custom_call.1} parent=135 // pred_check_branch
          %1075 = sbr.rel (%p1073) target = $region180
        $region179: #{tpu_custom_call.1} parent=135 // pred_region
          %1076 = dma.done [#allocation19], 16
        $region180: #{tpu_custom_call.1} parent=135 // pred_fallthru
          _
        // Predicated region
        $region181: #{tpu_custom_call.1} parent=135 // pred_check
          %p1077 = pneg %p431
        $region182: #{tpu_custom_call.1} parent=135 // pred_check_branch
          %1079 = sbr.rel (%p1077) target = $region184
        $region183: #{tpu_custom_call.1} parent=135 // pred_region
          %1080 = dma.done [#allocation22], 256
        $region184: #{tpu_custom_call.1} parent=135 // pred_fallthru
          _
        // Predicated region
        $region185: #{tpu_custom_call.1} parent=135 // pred_check
          %p1081 = pneg %p452
        $region186: #{tpu_custom_call.1} parent=135 // pred_check_branch
          %1083 = sbr.rel (%p1081) target = $region188
        $region187: #{tpu_custom_call.1} parent=135 // pred_region
          %1084 = dma.done [#allocation22], 16
        $region188: #{tpu_custom_call.1} parent=135 // pred_fallthru
          _
        // Predicated region
        $region189: #{tpu_custom_call.1} parent=135 // pred_check
          %p1085 = pneg %p473
        $region190: #{tpu_custom_call.1} parent=135 // pred_check_branch
          %1087 = sbr.rel (%p1085) target = $region192
        $region191: #{tpu_custom_call.1} parent=135 // pred_region
          %1088 = dma.done [#allocation25], 256
        $region192: #{tpu_custom_call.1} parent=135 // pred_fallthru
          _
        // Predicated region
        $region193: #{tpu_custom_call.1} parent=135 // pred_check
          %p1089 = pneg %p494
        $region194: #{tpu_custom_call.1} parent=135 // pred_check_branch
          %1091 = sbr.rel (%p1089) target = $region196
        $region195: #{tpu_custom_call.1} parent=135 // pred_region
          %1092 = dma.done [#allocation25], 16
        $region196: #{tpu_custom_call.1} parent=135 // pred_fallthru
          _
        // Predicated region
        $region197: #{tpu_custom_call.1} parent=135 // pred_check
          %p1093 = pneg %p515
        $region198: #{tpu_custom_call.1} parent=135 // pred_check_branch
          %1095 = sbr.rel (%p1093) target = $region200
        $region199: #{tpu_custom_call.1} parent=135 // pred_region
          %1096 = dma.done [#allocation28], 256
        $region200: #{tpu_custom_call.1} parent=135 // pred_fallthru
          _
        // Predicated region
        $region201: #{tpu_custom_call.1} parent=135 // pred_check
          %p1097 = pneg %p599
        $region202: #{tpu_custom_call.1} parent=135 // pred_check_branch
          %1099 = sbr.rel (%p1097) target = $region204
        $region203: #{tpu_custom_call.1} parent=135 // pred_region
          %1100 = dma.done [#allocation28], 256
        $region204: #{tpu_custom_call.1} parent=135 // pred_fallthru
          _
        %p1101 = scmp.lt.s32.totalorder %s90, 1
        %s1102 = scalar_select %p1101, %s90, 1
        %s1103 = smul.addr %s1102, 8
        %s1104 = scalar_lea.vmem %s1, %s1103
        %p1105 = pneg %p111
        %p1106 = pneg %p108
        %s1107 = sand.u32 %s124, 1
        %s1108 = scalar_lea.sflag [#allocation4], %s1107
        %s1109 = sand.u32 %s124, 1
        %s1110 = smul.addr %s1109, 4
        %s1111 = scalar_lea.vmem [#allocation3], %s1110
        %p1112 = pneg %p137
        %p1113 = pneg %p134
        %p1114 = pneg %p158
        %p1115 = pneg %p155
        %p1116 = pneg %p179
        %p1117 = pneg %p176
        %p1118 = pneg %p200
        %p1119 = pneg %p197
        %p1120 = pneg %p221
        %p1121 = pneg %p218
        %p1122 = pneg %p242
        %p1123 = pneg %p239
        %p1124 = pneg %p263
        %p1125 = pneg %p260
        %p1126 = pneg %p284
        %p1127 = pneg %p281
        %p1128 = pneg %p305
        %p1129 = pneg %p302
        %p1130 = pneg %p326
        %p1131 = pneg %p323
        %p1132 = pneg %p347
        %p1133 = pneg %p344
        %p1134 = pneg %p368
        %p1135 = pneg %p365
        %p1136 = pneg %p389
        %p1137 = pneg %p386
        %p1138 = pneg %p410
        %p1139 = pneg %p407
        %p1140 = pneg %p431
        %p1141 = pneg %p428
        %p1142 = pneg %p452
        %p1143 = pneg %p449
        %p1144 = pneg %p473
        %p1145 = pneg %p470
        %p1146 = pneg %p494
        %p1147 = pneg %p491
        %p1148 = pneg %p515
        %p1149 = pneg %p512
        %p1150 = pneg %p536
        %p1151 = pneg %p533
        %p1152 = pneg %p557
        %p1153 = pneg %p554
        %p1154 = pneg %p578
        %p1155 = pneg %p575
        %p1156 = pneg %p599
        %p1157 = pneg %p596
        %p1158 = pneg %p620
        %p1159 = pneg %p617
        %p1160 = pneg %p641
        %p1161 = pneg %p638
        %p1162 = pneg %p662
        %p1163 = pneg %p659
        %p1164 = pneg %p683
        %p1165 = pneg %p680
        %p1166 = pneg %p704
        %p1167 = pneg %p701
        %p1168 = pneg %p730
        %p1169 = pneg %p727
        %s1170 = sand.u32 %s717, 1
        %s1171 = scalar_lea.sflag [#allocation5], %s1170
        %s1172 = sand.u32 %s717, 1
        %s1173 = smul.addr %s1172, 8
        %s1174 = scalar_lea.vmem [#allocation30], %s1173
        %p1175 = pneg %p756
        %p1176 = pneg %p753
        %s1177 = sand.u32 %s743, 1
        %s1178 = scalar_lea.sflag [#allocation32], %s1177
        %s1179 = sand.u32 %s743, 1
        %s1180 = smul.addr %s1179, 8
        %s1181 = scalar_lea.vmem [#allocation31], %s1180
        %p1182 = scmp.lt.s32.totalorder %s90, 1
        %s1183 = scalar_select %p1182, %s90, 1
        %s1184 = smul.addr %s1183, 8
        %s1185 = scalar_lea.vmem %s1, %s1184
        %v1187 = vld [vmem:[%s1185] sm:$0xff]
        %v1188 = vld [vmem:[%s1032] sm:$0xf]
        %v1189 = vpack.c.bf16 %v1187, %v1187
        %v1190 = vld [vmem:[#allocation6] sm:$0xff]
        %v1191 = vld [vmem:[%s7] sm:$0xf]
        %v1192 = vld [vmem:[%s7 + $0x4] sm:$0xf]
        %v1193 = vld [vmem:[%s7 + $0x8] sm:$0xf]
        %v1194 = vld [vmem:[%s7 + $0xc] sm:$0xf]
        %v1195 = vld [vmem:[#allocation8] sm:$0x1]
        %v1197 = vlaneseq
        %v1198 = vshrl.u32 %v1197, 7
        %v1199 = vsub.s32 0, %v1198
        %v1200 = vrot.slane %v1195, %v1199
        %v1206 = vunpack.c.l.b16 %v1191
        %v1207 = vunpack.c.l.b16 %v1192
        %v1208 = vunpack.c.l.b16 %v1193
        %v1209 = vunpack.c.l.b16 %v1194
        %v1210 = vpack.c.b16 %v1207, %v1206
        %v1211 = vpack.c.b16 %v1209, %v1208
        %vm1214 = vcmask 261120
        %v1216 = vsel %vm1214, %v1189, 0
        %1218 = vmatprep.subr.bf16.mxu0 0
        %1219 = vmatpush1.bf16.msra.mxu0 0
        %1220 = vmatprep.subr.bf16.mxu0 0
        %1221 = vmatpush1.bf16.msra.mxu0 0
        %1222 = vmatprep.subr.bf16.mxu0 0
        %1223 = vmatpush1.bf16.msra.mxu0 0
        %1224 = vmatprep.subr.bf16.mxu0 0
        %1225 = vmatpush1.bf16.msra.mxu0 0
        %1226 = vmatprep.subr.bf16.mxu0 0
        %1227 = vmatpush1.bf16.msra.mxu0 0
        %1228 = vmatprep.subr.bf16.mxu0 0
        %1229 = vmatpush1.bf16.msra.mxu0 0
        %1230 = vmatprep.subr.bf16.mxu0 0
        %1231 = vmatpush1.bf16.msra.mxu0 %v1211
        %1232 = vmatprep.subr.bf16.mxu0 0
        %1233 = vmatpush1.bf16.msra.mxu0 %v1210
        %1234 = vmatprep.subr.bf16.mxu0 0
        %1235 = vmatpush2.bf16.msra.mxu0 0
        %1236 = vmatprep.subr.bf16.mxu0 0
        %1237 = vmatpush2.bf16.msra.mxu0 0
        %1238 = vmatprep.subr.bf16.mxu0 0
        %1239 = vmatpush2.bf16.msra.mxu0 0
        %1240 = vmatprep.subr.bf16.mxu0 0
        %1241 = vmatpush2.bf16.msra.mxu0 0
        %1242 = vmatprep.subr.bf16.mxu0 0
        %1243 = vmatpush2.bf16.msra.mxu0 0
        %1244 = vmatprep.subr.bf16.mxu0 0
        %1245 = vmatpush2.bf16.msra.mxu0 0
        %1246 = vmatprep.subr.bf16.mxu0 0
        %1247 = vmatpush2.bf16.msra.mxu0 0
        %1248 = vmatprep.subr.bf16.mxu0 0
        %1249 = vmatpush2.bf16.msra.mxu0 0
        %1250 = vmatprep.mubr.bf16.mxu0 0
        %1251 = vmatmul.mubr.bf16.gmra.mxu0 %v1216
        %v1252 = vpop.f32.mrf.mxu0
        %v1253 = vadd.f32 %v1200, %v1252
        %v1254 = vpop.f32.mrf.mxu0
        %v1255 = vpop.f32.mrf.mxu0
        %v1256 = vpop.f32.mrf.mxu0
        %1257 = vdwg.mxu0
        %v1258 = vld [vmem:[%s11] sm:$0xf]
        %v1259 = vld [vmem:[%s11 + $0x4] sm:$0xf]
        %v1260 = vld [vmem:[%s11 + $0x8] sm:$0xf]
        %v1261 = vld [vmem:[%s11 + $0xc] sm:$0xf]
        %v1262 = vld [vmem:[#allocation9] sm:$0x1]
        %v1264 = vlaneseq
        %v1265 = vshrl.u32 %v1264, 7
        %v1266 = vsub.s32 0, %v1265
        %v1267 = vrot.slane %v1262, %v1266
        %v1273 = vunpack.c.l.b16 %v1258
        %v1274 = vunpack.c.l.b16 %v1259
        %v1275 = vunpack.c.l.b16 %v1260
        %v1276 = vunpack.c.l.b16 %v1261
        %v1277 = vpack.c.b16 %v1274, %v1273
        %v1278 = vpack.c.b16 %v1276, %v1275
        %1281 = vmatprep.subr.bf16.mxu0 0
        %1282 = vmatpush1.bf16.msra.mxu0 0
        %1283 = vmatprep.subr.bf16.mxu0 0
        %1284 = vmatpush1.bf16.msra.mxu0 0
        %1285 = vmatprep.subr.bf16.mxu0 0
        %1286 = vmatpush1.bf16.msra.mxu0 0
        %1287 = vmatprep.subr.bf16.mxu0 0
        %1288 = vmatpush1.bf16.msra.mxu0 0
        %1289 = vmatprep.subr.bf16.mxu0 0
        %1290 = vmatpush1.bf16.msra.mxu0 0
        %1291 = vmatprep.subr.bf16.mxu0 0
        %1292 = vmatpush1.bf16.msra.mxu0 0
        %1293 = vmatprep.subr.bf16.mxu0 0
        %1294 = vmatpush1.bf16.msra.mxu0 %v1278
        %1295 = vmatprep.subr.bf16.mxu0 0
        %1296 = vmatpush1.bf16.msra.mxu0 %v1277
        %1297 = vmatprep.subr.bf16.mxu0 0
        %1298 = vmatpush2.bf16.msra.mxu0 0
        %1299 = vmatprep.subr.bf16.mxu0 0
        %1300 = vmatpush2.bf16.msra.mxu0 0
        %1301 = vmatprep.subr.bf16.mxu0 0
        %1302 = vmatpush2.bf16.msra.mxu0 0
        %1303 = vmatprep.subr.bf16.mxu0 0
        %1304 = vmatpush2.bf16.msra.mxu0 0
        %1305 = vmatprep.subr.bf16.mxu0 0
        %1306 = vmatpush2.bf16.msra.mxu0 0
        %1307 = vmatprep.subr.bf16.mxu0 0
        %1308 = vmatpush2.bf16.msra.mxu0 0
        %1309 = vmatprep.subr.bf16.mxu0 0
        %1310 = vmatpush2.bf16.msra.mxu0 0
        %1311 = vmatprep.subr.bf16.mxu0 0
        %1312 = vmatpush2.bf16.msra.mxu0 0
        %1313 = vmatprep.mubr.bf16.mxu0 0
        %1314 = vmatmul.mubr.bf16.gmra.mxu0 %v1216
        %v1315 = vpop.f32.mrf.mxu0
        %v1316 = vadd.f32 %v1267, %v1315
        %v1317 = vpop.f32.mrf.mxu0
        %v1318 = vpop.f32.mrf.mxu0
        %v1319 = vpop.f32.mrf.mxu0
        %1320 = vdwg.mxu0
        %v1321 = vld [vmem:[#allocation11] sm:$0xf]
        %v1322 = vld [vmem:[#allocation11 + $0x4] sm:$0xf]
        %v1323 = vld [vmem:[#allocation11 + $0x8] sm:$0xf]
        %v1324 = vld [vmem:[#allocation11 + $0xc] sm:$0xf]
        %v1325 = vld [vmem:[#allocation12] sm:$0x1]
        %v1327 = vlaneseq
        %v1328 = vshrl.u32 %v1327, 7
        %v1329 = vsub.s32 0, %v1328
        %v1330 = vrot.slane %v1325, %v1329
        %v1336 = vunpack.c.l.b16 %v1321
        %v1337 = vunpack.c.l.b16 %v1322
        %v1338 = vunpack.c.l.b16 %v1323
        %v1339 = vunpack.c.l.b16 %v1324
        %v1340 = vpack.c.b16 %v1337, %v1336
        %v1341 = vpack.c.b16 %v1339, %v1338
        %1344 = vmatprep.subr.bf16.mxu0 0
        %1345 = vmatpush1.bf16.msra.mxu0 0
        %1346 = vmatprep.subr.bf16.mxu0 0
        %1347 = vmatpush1.bf16.msra.mxu0 0
        %1348 = vmatprep.subr.bf16.mxu0 0
        %1349 = vmatpush1.bf16.msra.mxu0 0
        %1350 = vmatprep.subr.bf16.mxu0 0
        %1351 = vmatpush1.bf16.msra.mxu0 0
        %1352 = vmatprep.subr.bf16.mxu0 0
        %1353 = vmatpush1.bf16.msra.mxu0 0
        %1354 = vmatprep.subr.bf16.mxu0 0
        %1355 = vmatpush1.bf16.msra.mxu0 0
        %1356 = vmatprep.subr.bf16.mxu0 0
        %1357 = vmatpush1.bf16.msra.mxu0 %v1341
        %1358 = vmatprep.subr.bf16.mxu0 0
        %1359 = vmatpush1.bf16.msra.mxu0 %v1340
        %1360 = vmatprep.subr.bf16.mxu0 0
        %1361 = vmatpush2.bf16.msra.mxu0 0
        %1362 = vmatprep.subr.bf16.mxu0 0
        %1363 = vmatpush2.bf16.msra.mxu0 0
        %1364 = vmatprep.subr.bf16.mxu0 0
        %1365 = vmatpush2.bf16.msra.mxu0 0
        %1366 = vmatprep.subr.bf16.mxu0 0
        %1367 = vmatpush2.bf16.msra.mxu0 0
        %1368 = vmatprep.subr.bf16.mxu0 0
        %1369 = vmatpush2.bf16.msra.mxu0 0
        %1370 = vmatprep.subr.bf16.mxu0 0
        %1371 = vmatpush2.bf16.msra.mxu0 0
        %1372 = vmatprep.subr.bf16.mxu0 0
        %1373 = vmatpush2.bf16.msra.mxu0 0
        %1374 = vmatprep.subr.bf16.mxu0 0
        %1375 = vmatpush2.bf16.msra.mxu0 0
        %1376 = vmatprep.mubr.bf16.mxu0 0
        %1377 = vmatmul.mubr.bf16.gmra.mxu0 %v1216
        %v1378 = vpop.f32.mrf.mxu0
        %v1379 = vadd.f32 %v1330, %v1378
        %v1380 = vpop.f32.mrf.mxu0
        %v1381 = vpop.f32.mrf.mxu0
        %v1382 = vpop.f32.mrf.mxu0
        %1383 = vdwg.mxu0
        %v1384 = vpack.c.bf16 %v1253, %v1253
        %v1385 = vpack.c.bf16 %v1316, %v1316
        %v1386 = vpack.c.bf16 %v1379, %v1379
        %vm1387 = vcmask 64512
        %v1389 = vsel %vm1387, %v1384, 0
        %v1392 = vsel %vm1387, %v1385, 0
        %1394 = vmatprep.subr.bf16.mxu0 0
        %1395 = vmatpush1.bf16.xpose.msra.mxu0 0
        %1396 = vmatprep.subr.bf16.mxu0 0
        %1397 = vmatpush1.bf16.xpose.msra.mxu0 0
        %1398 = vmatprep.subr.bf16.mxu0 0
        %1399 = vmatpush1.bf16.xpose.msra.mxu0 0
        %1400 = vmatprep.subr.bf16.mxu0 0
        %1401 = vmatpush1.bf16.xpose.msra.mxu0 0
        %1402 = vmatprep.subr.bf16.mxu0 0
        %1403 = vmatpush1.bf16.xpose.msra.mxu0 0
        %1404 = vmatprep.subr.bf16.mxu0 0
        %1405 = vmatpush1.bf16.xpose.msra.mxu0 0
        %1406 = vmatprep.subr.bf16.mxu0 0
        %1407 = vmatpush1.bf16.xpose.msra.mxu0 0
        %1408 = vmatprep.subr.bf16.mxu0 0
        %1409 = vmatpush1.bf16.xpose.msra.mxu0 %v1392
        %1410 = vmatprep.subr.bf16.mxu0 0
        %1411 = vmatpush2.bf16.xpose.msra.mxu0 0
        %1412 = vmatprep.subr.bf16.mxu0 0
        %1413 = vmatpush2.bf16.xpose.msra.mxu0 0
        %1414 = vmatprep.subr.bf16.mxu0 0
        %1415 = vmatpush2.bf16.xpose.msra.mxu0 0
        %1416 = vmatprep.subr.bf16.mxu0 0
        %1417 = vmatpush2.bf16.xpose.msra.mxu0 0
        %1418 = vmatprep.subr.bf16.mxu0 0
        %1419 = vmatpush2.bf16.xpose.msra.mxu0 0
        %1420 = vmatprep.subr.bf16.mxu0 0
        %1421 = vmatpush2.bf16.xpose.msra.mxu0 0
        %1422 = vmatprep.subr.bf16.mxu0 0
        %1423 = vmatpush2.bf16.xpose.msra.mxu0 0
        %1424 = vmatprep.subr.bf16.mxu0 0
        %1425 = vmatpush2.bf16.xpose.msra.mxu0 0
        %1426 = vmatprep.mubr.bf16.mxu0 0
        %1427 = vmatmul.mubr.bf16.gmra.mxu0 %v1389
        %v1428 = vpop.f32.mrf.mxu0
        %v1429 = vadd.f32 %v1190, %v1428
        %v1430 = vpop.f32.mrf.mxu0
        %v1431 = vpop.f32.mrf.mxu0
        %v1432 = vpop.f32.mrf.mxu0
        %1433 = vdwg.mxu0
        %v1434 = vsel %vm1387, %v1429, -inf
        %1435 = vmax.xlane.f32.xlu0 %v1434
        %v1436 = vpop.xlane.xlu0 %1435
        %v1437 = vsub.f32 %v1429, %v1436
        %v1438 = vmul.f32 %v1437, 1.442695
        %v1439 = vpow.pop %v1438
        %v1440 = vsel %vm1387, %v1439, 0.0
        %1441 = vadd.xlane.f32.xlu0 %v1440
        %v1442 = vpop.xlane.xlu0 %1441
        %v1443 = vrcp.pop %v1442
        %v1444 = vmul.f32 %v1439, %v1443
        %v1445 = vpack.c.bf16 %v1444, %v1444
        %v1447 = vsel %vm1387, %v1445, 0
        %vm1449 = vcmask 1043456
        %v1451 = vsel %vm1449, %v1386, 0
        %1453 = vmatprep.subr.bf16.mxu0 0
        %1454 = vmatpush1.bf16.msra.mxu0 0
        %1455 = vmatprep.subr.bf16.mxu0 0
        %1456 = vmatpush1.bf16.msra.mxu0 0
        %1457 = vmatprep.subr.bf16.mxu0 0
        %1458 = vmatpush1.bf16.msra.mxu0 0
        %1459 = vmatprep.subr.bf16.mxu0 0
        %1460 = vmatpush1.bf16.msra.mxu0 0
        %1461 = vmatprep.subr.bf16.mxu0 0
        %1462 = vmatpush1.bf16.msra.mxu0 0
        %1463 = vmatprep.subr.bf16.mxu0 0
        %1464 = vmatpush1.bf16.msra.mxu0 0
        %1465 = vmatprep.subr.bf16.mxu0 0
        %1466 = vmatpush1.bf16.msra.mxu0 0
        %1467 = vmatprep.subr.bf16.mxu0 0
        %1468 = vmatpush1.bf16.msra.mxu0 %v1451
        %1469 = vmatprep.subr.bf16.mxu0 0
        %1470 = vmatpush2.bf16.msra.mxu0 0
        %1471 = vmatprep.subr.bf16.mxu0 0
        %1472 = vmatpush2.bf16.msra.mxu0 0
        %1473 = vmatprep.subr.bf16.mxu0 0
        %1474 = vmatpush2.bf16.msra.mxu0 0
        %1475 = vmatprep.subr.bf16.mxu0 0
        %1476 = vmatpush2.bf16.msra.mxu0 0
        %1477 = vmatprep.subr.bf16.mxu0 0
        %1478 = vmatpush2.bf16.msra.mxu0 0
        %1479 = vmatprep.subr.bf16.mxu0 0
        %1480 = vmatpush2.bf16.msra.mxu0 0
        %1481 = vmatprep.subr.bf16.mxu0 0
        %1482 = vmatpush2.bf16.msra.mxu0 0
        %1483 = vmatprep.subr.bf16.mxu0 0
        %1484 = vmatpush2.bf16.msra.mxu0 0
        %1485 = vmatprep.mubr.bf16.mxu0 0
        %1486 = vmatmul.mubr.bf16.gmra.mxu0 %v1447
        %v1487 = vpop.f32.mrf.mxu0
        %v1488 = vadd.f32 0.0, %v1487
        %v1489 = vpop.f32.mrf.mxu0
        %v1490 = vpop.f32.mrf.mxu0
        %v1491 = vpop.f32.mrf.mxu0
        %1492 = vdwg.mxu0
        %v1493 = vpack.c.bf16 %v1488, %v1488
        %vm1494 = vcmask 60416
        %1495 = vst.msk [vmem:[#allocation2] sm:$0xf] %vm1494, %v1493
        %1497 = vrot.lane.b32.xlu0 %v1384, 120
        %v1498 = vpop.permute.xlu0 %1497
        %1500 = vrot.lane.b32.xlu0 %v1385, 120
        %v1501 = vpop.permute.xlu0 %1500
        %v1503 = vsel %vm1387, %v1498, 0
        %v1506 = vsel %vm1387, %v1501, 0
        %1508 = vmatprep.subr.bf16.mxu0 0
        %1509 = vmatpush1.bf16.xpose.msra.mxu0 0
        %1510 = vmatprep.subr.bf16.mxu0 0
        %1511 = vmatpush1.bf16.xpose.msra.mxu0 0
        %1512 = vmatprep.subr.bf16.mxu0 0
        %1513 = vmatpush1.bf16.xpose.msra.mxu0 0
        %1514 = vmatprep.subr.bf16.mxu0 0
        %1515 = vmatpush1.bf16.xpose.msra.mxu0 0
        %1516 = vmatprep.subr.bf16.mxu0 0
        %1517 = vmatpush1.bf16.xpose.msra.mxu0 0
        %1518 = vmatprep.subr.bf16.mxu0 0
        %1519 = vmatpush1.bf16.xpose.msra.mxu0 0
        %1520 = vmatprep.subr.bf16.mxu0 0
        %1521 = vmatpush1.bf16.xpose.msra.mxu0 0
        %1522 = vmatprep.subr.bf16.mxu0 0
        %1523 = vmatpush1.bf16.xpose.msra.mxu0 %v1506
        %1524 = vmatprep.subr.bf16.mxu0 0
        %1525 = vmatpush2.bf16.xpose.msra.mxu0 0
        %1526 = vmatprep.subr.bf16.mxu0 0
        %1527 = vmatpush2.bf16.xpose.msra.mxu0 0
        %1528 = vmatprep.subr.bf16.mxu0 0
        %1529 = vmatpush2.bf16.xpose.msra.mxu0 0
        %1530 = vmatprep.subr.bf16.mxu0 0
        %1531 = vmatpush2.bf16.xpose.msra.mxu0 0
        %1532 = vmatprep.subr.bf16.mxu0 0
        %1533 = vmatpush2.bf16.xpose.msra.mxu0 0
        %1534 = vmatprep.subr.bf16.mxu0 0
        %1535 = vmatpush2.bf16.xpose.msra.mxu0 0
        %1536 = vmatprep.subr.bf16.mxu0 0
        %1537 = vmatpush2.bf16.xpose.msra.mxu0 0
        %1538 = vmatprep.subr.bf16.mxu0 0
        %1539 = vmatpush2.bf16.xpose.msra.mxu0 0
        %1540 = vmatprep.mubr.bf16.mxu0 0
        %1541 = vmatmul.mubr.bf16.gmra.mxu0 %v1503
        %v1542 = vpop.f32.mrf.mxu0
        %v1543 = vadd.f32 %v1190, %v1542
        %v1544 = vpop.f32.mrf.mxu0
        %v1545 = vpop.f32.mrf.mxu0
        %v1546 = vpop.f32.mrf.mxu0
        %1547 = vdwg.mxu0
        %v1548 = vsel %vm1387, %v1543, -inf
        %1549 = vmax.xlane.f32.xlu0 %v1548
        %v1550 = vpop.xlane.xlu0 %1549
        %v1551 = vsub.f32 %v1543, %v1550
        %v1552 = vmul.f32 %v1551, 1.442695
        %v1553 = vpow.pop %v1552
        %v1554 = vsel %vm1387, %v1553, 0.0
        %1555 = vadd.xlane.f32.xlu0 %v1554
        %v1556 = vpop.xlane.xlu0 %1555
        %v1557 = vrcp.pop %v1556
        %v1558 = vmul.f32 %v1553, %v1557
        %v1559 = vpack.c.bf16 %v1558, %v1558
        %1561 = vrot.lane.b32.xlu0 %v1386, 120
        %v1562 = vpop.permute.xlu0 %1561
        %v1564 = vsel %vm1387, %v1559, 0
        %v1567 = vsel %vm1449, %v1562, 0
        %1569 = vmatprep.subr.bf16.mxu0 0
        %1570 = vmatpush1.bf16.msra.mxu0 0
        %1571 = vmatprep.subr.bf16.mxu0 0
        %1572 = vmatpush1.bf16.msra.mxu0 0
        %1573 = vmatprep.subr.bf16.mxu0 0
        %1574 = vmatpush1.bf16.msra.mxu0 0
        %1575 = vmatprep.subr.bf16.mxu0 0
        %1576 = vmatpush1.bf16.msra.mxu0 0
        %1577 = vmatprep.subr.bf16.mxu0 0
        %1578 = vmatpush1.bf16.msra.mxu0 0
        %1579 = vmatprep.subr.bf16.mxu0 0
        %1580 = vmatpush1.bf16.msra.mxu0 0
        %1581 = vmatprep.subr.bf16.mxu0 0
        %1582 = vmatpush1.bf16.msra.mxu0 0
        %1583 = vmatprep.subr.bf16.mxu0 0
        %1584 = vmatpush1.bf16.msra.mxu0 %v1567
        %1585 = vmatprep.subr.bf16.mxu0 0
        %1586 = vmatpush2.bf16.msra.mxu0 0
        %1587 = vmatprep.subr.bf16.mxu0 0
        %1588 = vmatpush2.bf16.msra.mxu0 0
        %1589 = vmatprep.subr.bf16.mxu0 0
        %1590 = vmatpush2.bf16.msra.mxu0 0
        %1591 = vmatprep.subr.bf16.mxu0 0
        %1592 = vmatpush2.bf16.msra.mxu0 0
        %1593 = vmatprep.subr.bf16.mxu0 0
        %1594 = vmatpush2.bf16.msra.mxu0 0
        %1595 = vmatprep.subr.bf16.mxu0 0
        %1596 = vmatpush2.bf16.msra.mxu0 0
        %1597 = vmatprep.subr.bf16.mxu0 0
        %1598 = vmatpush2.bf16.msra.mxu0 0
        %1599 = vmatprep.subr.bf16.mxu0 0
        %1600 = vmatpush2.bf16.msra.mxu0 0
        %1601 = vmatprep.mubr.bf16.mxu0 0
        %1602 = vmatmul.mubr.bf16.gmra.mxu0 %v1564
        %v1603 = vpop.f32.mrf.mxu0
        %v1604 = vadd.f32 0.0, %v1603
        %v1605 = vpop.f32.mrf.mxu0
        %v1606 = vpop.f32.mrf.mxu0
        %v1607 = vpop.f32.mrf.mxu0
        %1608 = vdwg.mxu0
        %v1609 = vpack.c.bf16 %v1604, %v1604
        %v1611 = vunpack.c.l.b16 %v1609
        %v1612 = vpack.c.b16 %v1611, %v1611
        %1613 = vrot.lane.b32.xlu0 %v1612, 8
        %v1614 = vpop.permute.xlu0 %1613
        %vm1616 = vcmask 126016
        %1617 = vst.msk [vmem:[#allocation2] sm:$0xf] %vm1616, %v1614
        %1618 = vrot.lane.b32.xlu0 %v1384, 112
        %v1619 = vpop.permute.xlu0 %1618
        %1620 = vrot.lane.b32.xlu0 %v1385, 112
        %v1621 = vpop.permute.xlu0 %1620
        %v1623 = vsel %vm1387, %v1619, 0
        %v1626 = vsel %vm1387, %v1621, 0
        %1628 = vmatprep.subr.bf16.mxu0 0
        %1629 = vmatpush1.bf16.xpose.msra.mxu0 0
        %1630 = vmatprep.subr.bf16.mxu0 0
        %1631 = vmatpush1.bf16.xpose.msra.mxu0 0
        %1632 = vmatprep.subr.bf16.mxu0 0
        %1633 = vmatpush1.bf16.xpose.msra.mxu0 0
        %1634 = vmatprep.subr.bf16.mxu0 0
        %1635 = vmatpush1.bf16.xpose.msra.mxu0 0
        %1636 = vmatprep.subr.bf16.mxu0 0
        %1637 = vmatpush1.bf16.xpose.msra.mxu0 0
        %1638 = vmatprep.subr.bf16.mxu0 0
        %1639 = vmatpush1.bf16.xpose.msra.mxu0 0
        %1640 = vmatprep.subr.bf16.mxu0 0
        %1641 = vmatpush1.bf16.xpose.msra.mxu0 0
        %1642 = vmatprep.subr.bf16.mxu0 0
        %1643 = vmatpush1.bf16.xpose.msra.mxu0 %v1626
        %1644 = vmatprep.subr.bf16.mxu0 0
        %1645 = vmatpush2.bf16.xpose.msra.mxu0 0
        %1646 = vmatprep.subr.bf16.mxu0 0
        %1647 = vmatpush2.bf16.xpose.msra.mxu0 0
        %1648 = vmatprep.subr.bf16.mxu0 0
        %1649 = vmatpush2.bf16.xpose.msra.mxu0 0
        %1650 = vmatprep.subr.bf16.mxu0 0
        %1651 = vmatpush2.bf16.xpose.msra.mxu0 0
        %1652 = vmatprep.subr.bf16.mxu0 0
        %1653 = vmatpush2.bf16.xpose.msra.mxu0 0
        %1654 = vmatprep.subr.bf16.mxu0 0
        %1655 = vmatpush2.bf16.xpose.msra.mxu0 0
        %1656 = vmatprep.subr.bf16.mxu0 0
        %1657 = vmatpush2.bf16.xpose.msra.mxu0 0
        %1658 = vmatprep.subr.bf16.mxu0 0
        %1659 = vmatpush2.bf16.xpose.msra.mxu0 0
        %1660 = vmatprep.mubr.bf16.mxu0 0
        %1661 = vmatmul.mubr.bf16.gmra.mxu0 %v1623
        %v1662 = vpop.f32.mrf.mxu0
        %v1663 = vadd.f32 %v1190, %v1662
        %v1664 = vpop.f32.mrf.mxu0
        %v1665 = vpop.f32.mrf.mxu0
        %v1666 = vpop.f32.mrf.mxu0
        %1667 = vdwg.mxu0
        %v1668 = vsel %vm1387, %v1663, -inf
        %1669 = vmax.xlane.f32.xlu0 %v1668
        %v1670 = vpop.xlane.xlu0 %1669
        %v1671 = vsub.f32 %v1663, %v1670
        %v1672 = vmul.f32 %v1671, 1.442695
        %v1673 = vpow.pop %v1672
        %v1674 = vsel %vm1387, %v1673, 0.0
        %1675 = vadd.xlane.f32.xlu0 %v1674
        %v1676 = vpop.xlane.xlu0 %1675
        %v1677 = vrcp.pop %v1676
        %v1678 = vmul.f32 %v1673, %v1677
        %v1679 = vpack.c.bf16 %v1678, %v1678
        %1680 = vrot.lane.b32.xlu0 %v1386, 112
        %v1681 = vpop.permute.xlu0 %1680
        %v1683 = vsel %vm1387, %v1679, 0
        %v1686 = vsel %vm1449, %v1681, 0
        %1688 = vmatprep.subr.bf16.mxu0 0
        %1689 = vmatpush1.bf16.msra.mxu0 0
        %1690 = vmatprep.subr.bf16.mxu0 0
        %1691 = vmatpush1.bf16.msra.mxu0 0
        %1692 = vmatprep.subr.bf16.mxu0 0
        %1693 = vmatpush1.bf16.msra.mxu0 0
        %1694 = vmatprep.subr.bf16.mxu0 0
        %1695 = vmatpush1.bf16.msra.mxu0 0
        %1696 = vmatprep.subr.bf16.mxu0 0
        %1697 = vmatpush1.bf16.msra.mxu0 0
        %1698 = vmatprep.subr.bf16.mxu0 0
        %1699 = vmatpush1.bf16.msra.mxu0 0
        %1700 = vmatprep.subr.bf16.mxu0 0
        %1701 = vmatpush1.bf16.msra.mxu0 0
        %1702 = vmatprep.subr.bf16.mxu0 0
        %1703 = vmatpush1.bf16.msra.mxu0 %v1686
        %1704 = vmatprep.subr.bf16.mxu0 0
        %1705 = vmatpush2.bf16.msra.mxu0 0
        %1706 = vmatprep.subr.bf16.mxu0 0
        %1707 = vmatpush2.bf16.msra.mxu0 0
        %1708 = vmatprep.subr.bf16.mxu0 0
        %1709 = vmatpush2.bf16.msra.mxu0 0
        %1710 = vmatprep.subr.bf16.mxu0 0
        %1711 = vmatpush2.bf16.msra.mxu0 0
        %1712 = vmatprep.subr.bf16.mxu0 0
        %1713 = vmatpush2.bf16.msra.mxu0 0
        %1714 = vmatprep.subr.bf16.mxu0 0
        %1715 = vmatpush2.bf16.msra.mxu0 0
        %1716 = vmatprep.subr.bf16.mxu0 0
        %1717 = vmatpush2.bf16.msra.mxu0 0
        %1718 = vmatprep.subr.bf16.mxu0 0
        %1719 = vmatpush2.bf16.msra.mxu0 0
        %1720 = vmatprep.mubr.bf16.mxu0 0
        %1721 = vmatmul.mubr.bf16.gmra.mxu0 %v1683
        %v1722 = vpop.f32.mrf.mxu0
        %v1723 = vadd.f32 0.0, %v1722
        %v1724 = vpop.f32.mrf.mxu0
        %v1725 = vpop.f32.mrf.mxu0
        %v1726 = vpop.f32.mrf.mxu0
        %1727 = vdwg.mxu0
        %v1728 = vpack.c.bf16 %v1723, %v1723
        %v1730 = vunpack.c.l.b16 %v1728
        %v1731 = vpack.c.b16 %v1730, %v1730
        %1732 = vrot.lane.b32.xlu0 %v1731, 16
        %v1733 = vpop.permute.xlu0 %1732
        %vm1735 = vcmask 191616
        %1736 = vst.msk [vmem:[#allocation2] sm:$0xf] %vm1735, %v1733
        %1737 = vrot.lane.b32.xlu0 %v1384, 104
        %v1738 = vpop.permute.xlu0 %1737
        %1739 = vrot.lane.b32.xlu0 %v1385, 104
        %v1740 = vpop.permute.xlu0 %1739
        %v1742 = vsel %vm1387, %v1738, 0
        %v1745 = vsel %vm1387, %v1740, 0
        %1747 = vmatprep.subr.bf16.mxu0 0
        %1748 = vmatpush1.bf16.xpose.msra.mxu0 0
        %1749 = vmatprep.subr.bf16.mxu0 0
        %1750 = vmatpush1.bf16.xpose.msra.mxu0 0
        %1751 = vmatprep.subr.bf16.mxu0 0
        %1752 = vmatpush1.bf16.xpose.msra.mxu0 0
        %1753 = vmatprep.subr.bf16.mxu0 0
        %1754 = vmatpush1.bf16.xpose.msra.mxu0 0
        %1755 = vmatprep.subr.bf16.mxu0 0
        %1756 = vmatpush1.bf16.xpose.msra.mxu0 0
        %1757 = vmatprep.subr.bf16.mxu0 0
        %1758 = vmatpush1.bf16.xpose.msra.mxu0 0
        %1759 = vmatprep.subr.bf16.mxu0 0
        %1760 = vmatpush1.bf16.xpose.msra.mxu0 0
        %1761 = vmatprep.subr.bf16.mxu0 0
        %1762 = vmatpush1.bf16.xpose.msra.mxu0 %v1745
        %1763 = vmatprep.subr.bf16.mxu0 0
        %1764 = vmatpush2.bf16.xpose.msra.mxu0 0
        %1765 = vmatprep.subr.bf16.mxu0 0
        %1766 = vmatpush2.bf16.xpose.msra.mxu0 0
        %1767 = vmatprep.subr.bf16.mxu0 0
        %1768 = vmatpush2.bf16.xpose.msra.mxu0 0
        %1769 = vmatprep.subr.bf16.mxu0 0
        %1770 = vmatpush2.bf16.xpose.msra.mxu0 0
        %1771 = vmatprep.subr.bf16.mxu0 0
        %1772 = vmatpush2.bf16.xpose.msra.mxu0 0
        %1773 = vmatprep.subr.bf16.mxu0 0
        %1774 = vmatpush2.bf16.xpose.msra.mxu0 0
        %1775 = vmatprep.subr.bf16.mxu0 0
        %1776 = vmatpush2.bf16.xpose.msra.mxu0 0
        %1777 = vmatprep.subr.bf16.mxu0 0
        %1778 = vmatpush2.bf16.xpose.msra.mxu0 0
        %1779 = vmatprep.mubr.bf16.mxu0 0
        %1780 = vmatmul.mubr.bf16.gmra.mxu0 %v1742
        %v1781 = vpop.f32.mrf.mxu0
        %v1782 = vadd.f32 %v1190, %v1781
        %v1783 = vpop.f32.mrf.mxu0
        %v1784 = vpop.f32.mrf.mxu0
        %v1785 = vpop.f32.mrf.mxu0
        %1786 = vdwg.mxu0
        %v1787 = vsel %vm1387, %v1782, -inf
        %1788 = vmax.xlane.f32.xlu0 %v1787
        %v1789 = vpop.xlane.xlu0 %1788
        %v1790 = vsub.f32 %v1782, %v1789
        %v1791 = vmul.f32 %v1790, 1.442695
        %v1792 = vpow.pop %v1791
        %v1793 = vsel %vm1387, %v1792, 0.0
        %1794 = vadd.xlane.f32.xlu0 %v1793
        %v1795 = vpop.xlane.xlu0 %1794
        %v1796 = vrcp.pop %v1795
        %v1797 = vmul.f32 %v1792, %v1796
        %v1798 = vpack.c.bf16 %v1797, %v1797
        %1799 = vrot.lane.b32.xlu0 %v1386, 104
        %v1800 = vpop.permute.xlu0 %1799
        %v1802 = vsel %vm1387, %v1798, 0
        %v1805 = vsel %vm1449, %v1800, 0
        %1807 = vmatprep.subr.bf16.mxu0 0
        %1808 = vmatpush1.bf16.msra.mxu0 0
        %1809 = vmatprep.subr.bf16.mxu0 0
        %1810 = vmatpush1.bf16.msra.mxu0 0
        %1811 = vmatprep.subr.bf16.mxu0 0
        %1812 = vmatpush1.bf16.msra.mxu0 0
        %1813 = vmatprep.subr.bf16.mxu0 0
        %1814 = vmatpush1.bf16.msra.mxu0 0
        %1815 = vmatprep.subr.bf16.mxu0 0
        %1816 = vmatpush1.bf16.msra.mxu0 0
        %1817 = vmatprep.subr.bf16.mxu0 0
        %1818 = vmatpush1.bf16.msra.mxu0 0
        %1819 = vmatprep.subr.bf16.mxu0 0
        %1820 = vmatpush1.bf16.msra.mxu0 0
        %1821 = vmatprep.subr.bf16.mxu0 0
        %1822 = vmatpush1.bf16.msra.mxu0 %v1805
        %1823 = vmatprep.subr.bf16.mxu0 0
        %1824 = vmatpush2.bf16.msra.mxu0 0
        %1825 = vmatprep.subr.bf16.mxu0 0
        %1826 = vmatpush2.bf16.msra.mxu0 0
        %1827 = vmatprep.subr.bf16.mxu0 0
        %1828 = vmatpush2.bf16.msra.mxu0 0
        %1829 = vmatprep.subr.bf16.mxu0 0
        %1830 = vmatpush2.bf16.msra.mxu0 0
        %1831 = vmatprep.subr.bf16.mxu0 0
        %1832 = vmatpush2.bf16.msra.mxu0 0
        %1833 = vmatprep.subr.bf16.mxu0 0
        %1834 = vmatpush2.bf16.msra.mxu0 0
        %1835 = vmatprep.subr.bf16.mxu0 0
        %1836 = vmatpush2.bf16.msra.mxu0 0
        %1837 = vmatprep.subr.bf16.mxu0 0
        %1838 = vmatpush2.bf16.msra.mxu0 0
        %1839 = vmatprep.mubr.bf16.mxu0 0
        %1840 = vmatmul.mubr.bf16.gmra.mxu0 %v1802
        %v1841 = vpop.f32.mrf.mxu0
        %v1842 = vadd.f32 0.0, %v1841
        %v1843 = vpop.f32.mrf.mxu0
        %v1844 = vpop.f32.mrf.mxu0
        %v1845 = vpop.f32.mrf.mxu0
        %1846 = vdwg.mxu0
        %v1847 = vpack.c.bf16 %v1842, %v1842
        %v1849 = vunpack.c.l.b16 %v1847
        %v1850 = vpack.c.b16 %v1849, %v1849
        %1851 = vrot.lane.b32.xlu0 %v1850, 24
        %v1852 = vpop.permute.xlu0 %1851
        %vm1854 = vcmask 257216
        %1855 = vst.msk [vmem:[#allocation2] sm:$0xf] %vm1854, %v1852
        %v1856 = vld [vmem:[#allocation2] sm:$0xf]
        %v1857 = vld [vmem:[%s19] sm:$0xf]
        %v1858 = vld [vmem:[%s19 + $0x4] sm:$0xf]
        %v1859 = vld [vmem:[%s19 + $0x8] sm:$0xf]
        %v1860 = vld [vmem:[%s19 + $0xc] sm:$0xf]
        %v1861 = vld [vmem:[#allocation14] sm:$0x1]
        %v1863 = vlaneseq
        %v1864 = vshrl.u32 %v1863, 7
        %v1865 = vsub.s32 0, %v1864
        %v1866 = vrot.slane %v1861, %v1865
        %v1872 = vunpack.c.l.b16 %v1857
        %v1873 = vunpack.c.l.b16 %v1858
        %v1874 = vunpack.c.l.b16 %v1859
        %v1875 = vunpack.c.l.b16 %v1860
        %v1876 = vpack.c.b16 %v1873, %v1872
        %v1877 = vpack.c.b16 %v1875, %v1874
        %v1881 = vsel %vm1214, %v1856, 0
        %1883 = vmatprep.subr.bf16.mxu0 0
        %1884 = vmatpush1.bf16.msra.mxu0 0
        %1885 = vmatprep.subr.bf16.mxu0 0
        %1886 = vmatpush1.bf16.msra.mxu0 0
        %1887 = vmatprep.subr.bf16.mxu0 0
        %1888 = vmatpush1.bf16.msra.mxu0 0
        %1889 = vmatprep.subr.bf16.mxu0 0
        %1890 = vmatpush1.bf16.msra.mxu0 0
        %1891 = vmatprep.subr.bf16.mxu0 0
        %1892 = vmatpush1.bf16.msra.mxu0 0
        %1893 = vmatprep.subr.bf16.mxu0 0
        %1894 = vmatpush1.bf16.msra.mxu0 0
        %1895 = vmatprep.subr.bf16.mxu0 0
        %1896 = vmatpush1.bf16.msra.mxu0 %v1877
        %1897 = vmatprep.subr.bf16.mxu0 0
        %1898 = vmatpush1.bf16.msra.mxu0 %v1876
        %1899 = vmatprep.subr.bf16.mxu0 0
        %1900 = vmatpush2.bf16.msra.mxu0 0
        %1901 = vmatprep.subr.bf16.mxu0 0
        %1902 = vmatpush2.bf16.msra.mxu0 0
        %1903 = vmatprep.subr.bf16.mxu0 0
        %1904 = vmatpush2.bf16.msra.mxu0 0
        %1905 = vmatprep.subr.bf16.mxu0 0
        %1906 = vmatpush2.bf16.msra.mxu0 0
        %1907 = vmatprep.subr.bf16.mxu0 0
        %1908 = vmatpush2.bf16.msra.mxu0 0
        %1909 = vmatprep.subr.bf16.mxu0 0
        %1910 = vmatpush2.bf16.msra.mxu0 0
        %1911 = vmatprep.subr.bf16.mxu0 0
        %1912 = vmatpush2.bf16.msra.mxu0 0
        %1913 = vmatprep.subr.bf16.mxu0 0
        %1914 = vmatpush2.bf16.msra.mxu0 0
        %1915 = vmatprep.mubr.bf16.mxu0 0
        %1916 = vmatmul.mubr.bf16.gmra.mxu0 %v1881
        %v1917 = vpop.f32.mrf.mxu0
        %v1918 = vadd.f32 %v1866, %v1917
        %v1919 = vpop.f32.mrf.mxu0
        %v1920 = vpop.f32.mrf.mxu0
        %v1921 = vpop.f32.mrf.mxu0
        %1922 = vdwg.mxu0
        %v1923 = vadd.f32 %v1187, %v1918
        %v1924 = vld [vmem:[#allocation15] sm:$0x1]
        %v1925 = vld [vmem:[#allocation17] sm:$0x1]
        %v1926 = vsel %vm1214, %v1923, 0.0
        %1927 = vadd.xlane.f32.xlu0 %v1926
        %v1928 = vpop.xlane.xlu0 %1927
        %v1929 = vrcp.pop 32.0
        %v1930 = vmul.f32 %v1928, %v1929
        %v1931 = vsub.f32 %v1923, %v1930
        %v1932 = vmul.f32 %v1931, %v1931
        %v1933 = vsel %vm1214, %v1932, 0.0
        %1934 = vadd.xlane.f32.xlu0 %v1933
        %v1935 = vpop.xlane.xlu0 %1934
        %v1936 = vmul.f32 %v1935, %v1929
        %v1937 = vadd.f32 %v1936, 1e-05
        %v1938 = vrsqrt.pop %v1937
        %v1939 = vmul.f32 %v1931, %v1938
        %v1941 = vlaneseq
        %v1942 = vshrl.u32 %v1941, 7
        %v1943 = vsub.s32 0, %v1942
        %v1944 = vrot.slane %v1924, %v1943
        %v1946 = vmul.f32 %v1939, %v1944
        %v1948 = vlaneseq
        %v1949 = vshrl.u32 %v1948, 7
        %v1950 = vsub.s32 0, %v1949
        %v1951 = vrot.slane %v1925, %v1950
        %v1953 = vadd.f32 %v1946, %v1951
        %v1954 = vpack.c.bf16 %v1953, %v1953
        %v1955 = vld [vmem:[#allocation18] sm:$0xf]
        %v1956 = vld [vmem:[#allocation18 + $0x4] sm:$0xf]
        %v1957 = vld [vmem:[#allocation18 + $0x8] sm:$0xf]
        %v1958 = vld [vmem:[#allocation18 + $0xc] sm:$0xf]
        %v1959 = vld [vmem:[#allocation20] sm:$0x1]
        %v1961 = vlaneseq
        %v1962 = vshrl.u32 %v1961, 7
        %v1963 = vsub.s32 0, %v1962
        %v1964 = vrot.slane %v1959, %v1963
        %v1970 = vunpack.c.l.b16 %v1955
        %v1971 = vunpack.c.l.b16 %v1956
        %v1972 = vunpack.c.l.b16 %v1957
        %v1973 = vunpack.c.l.b16 %v1958
        %v1974 = vpack.c.b16 %v1971, %v1970
        %v1975 = vpack.c.b16 %v1973, %v1972
        %v1979 = vsel %vm1214, %v1954, 0
        %1981 = vmatprep.subr.bf16.mxu0 0
        %1982 = vmatpush1.bf16.msra.mxu0 0
        %1983 = vmatprep.subr.bf16.mxu0 0
        %1984 = vmatpush1.bf16.msra.mxu0 0
        %1985 = vmatprep.subr.bf16.mxu0 0
        %1986 = vmatpush1.bf16.msra.mxu0 0
        %1987 = vmatprep.subr.bf16.mxu0 0
        %1988 = vmatpush1.bf16.msra.mxu0 0
        %1989 = vmatprep.subr.bf16.mxu0 0
        %1990 = vmatpush1.bf16.msra.mxu0 0
        %1991 = vmatprep.subr.bf16.mxu0 0
        %1992 = vmatpush1.bf16.msra.mxu0 0
        %1993 = vmatprep.subr.bf16.mxu0 0
        %1994 = vmatpush1.bf16.msra.mxu0 %v1975
        %1995 = vmatprep.subr.bf16.mxu0 0
        %1996 = vmatpush1.bf16.msra.mxu0 %v1974
        %1997 = vmatprep.subr.bf16.mxu0 0
        %1998 = vmatpush2.bf16.msra.mxu0 0
        %1999 = vmatprep.subr.bf16.mxu0 0
        %2000 = vmatpush2.bf16.msra.mxu0 0
        %2001 = vmatprep.subr.bf16.mxu0 0
        %2002 = vmatpush2.bf16.msra.mxu0 0
        %2003 = vmatprep.subr.bf16.mxu0 0
        %2004 = vmatpush2.bf16.msra.mxu0 0
        %2005 = vmatprep.subr.bf16.mxu0 0
        %2006 = vmatpush2.bf16.msra.mxu0 0
        %2007 = vmatprep.subr.bf16.mxu0 0
        %2008 = vmatpush2.bf16.msra.mxu0 0
        %2009 = vmatprep.subr.bf16.mxu0 0
        %2010 = vmatpush2.bf16.msra.mxu0 0
        %2011 = vmatprep.subr.bf16.mxu0 0
        %2012 = vmatpush2.bf16.msra.mxu0 0
        %2013 = vmatprep.mubr.bf16.mxu0 0
        %2014 = vmatmul.mubr.bf16.gmra.mxu0 %v1979
        %v2015 = vpop.f32.mrf.mxu0
        %v2016 = vadd.f32 %v1964, %v2015
        %v2017 = vpop.f32.mrf.mxu0
        %v2018 = vpop.f32.mrf.mxu0
        %v2019 = vpop.f32.mrf.mxu0
        %2020 = vdwg.mxu0
        %v2021 = vld [vmem:[#allocation21] sm:$0xf]
        %v2022 = vld [vmem:[#allocation21 + $0x4] sm:$0xf]
        %v2023 = vld [vmem:[#allocation21 + $0x8] sm:$0xf]
        %v2024 = vld [vmem:[#allocation21 + $0xc] sm:$0xf]
        %v2025 = vld [vmem:[#allocation23] sm:$0x1]
        %v2027 = vlaneseq
        %v2028 = vshrl.u32 %v2027, 7
        %v2029 = vsub.s32 0, %v2028
        %v2030 = vrot.slane %v2025, %v2029
        %v2036 = vunpack.c.l.b16 %v2021
        %v2037 = vunpack.c.l.b16 %v2022
        %v2038 = vunpack.c.l.b16 %v2023
        %v2039 = vunpack.c.l.b16 %v2024
        %v2040 = vpack.c.b16 %v2037, %v2036
        %v2041 = vpack.c.b16 %v2039, %v2038
        %v2045 = vsel %vm1214, %v1188, 0
        %2047 = vmatprep.subr.bf16.mxu0 0
        %2048 = vmatpush1.bf16.msra.mxu0 0
        %2049 = vmatprep.subr.bf16.mxu0 0
        %2050 = vmatpush1.bf16.msra.mxu0 0
        %2051 = vmatprep.subr.bf16.mxu0 0
        %2052 = vmatpush1.bf16.msra.mxu0 0
        %2053 = vmatprep.subr.bf16.mxu0 0
        %2054 = vmatpush1.bf16.msra.mxu0 0
        %2055 = vmatprep.subr.bf16.mxu0 0
        %2056 = vmatpush1.bf16.msra.mxu0 0
        %2057 = vmatprep.subr.bf16.mxu0 0
        %2058 = vmatpush1.bf16.msra.mxu0 0
        %2059 = vmatprep.subr.bf16.mxu0 0
        %2060 = vmatpush1.bf16.msra.mxu0 %v2041
        %2061 = vmatprep.subr.bf16.mxu0 0
        %2062 = vmatpush1.bf16.msra.mxu0 %v2040
        %2063 = vmatprep.subr.bf16.mxu0 0
        %2064 = vmatpush2.bf16.msra.mxu0 0
        %2065 = vmatprep.subr.bf16.mxu0 0
        %2066 = vmatpush2.bf16.msra.mxu0 0
        %2067 = vmatprep.subr.bf16.mxu0 0
        %2068 = vmatpush2.bf16.msra.mxu0 0
        %2069 = vmatprep.subr.bf16.mxu0 0
        %2070 = vmatpush2.bf16.msra.mxu0 0
        %2071 = vmatprep.subr.bf16.mxu0 0
        %2072 = vmatpush2.bf16.msra.mxu0 0
        %2073 = vmatprep.subr.bf16.mxu0 0
        %2074 = vmatpush2.bf16.msra.mxu0 0
        %2075 = vmatprep.subr.bf16.mxu0 0
        %2076 = vmatpush2.bf16.msra.mxu0 0
        %2077 = vmatprep.subr.bf16.mxu0 0
        %2078 = vmatpush2.bf16.msra.mxu0 0
        %2079 = vmatprep.mubr.bf16.mxu0 0
        %2080 = vmatmul.mubr.bf16.gmra.mxu0 %v2045
        %v2081 = vpop.f32.mrf.mxu0
        %v2082 = vadd.f32 %v2030, %v2081
        %v2083 = vpop.f32.mrf.mxu0
        %v2084 = vpop.f32.mrf.mxu0
        %v2085 = vpop.f32.mrf.mxu0
        %2086 = vdwg.mxu0
        %v2087 = vld [vmem:[#allocation24] sm:$0xf]
        %v2088 = vld [vmem:[#allocation24 + $0x4] sm:$0xf]
        %v2089 = vld [vmem:[#allocation24 + $0x8] sm:$0xf]
        %v2090 = vld [vmem:[#allocation24 + $0xc] sm:$0xf]
        %v2091 = vld [vmem:[#allocation26] sm:$0x1]
        %v2093 = vlaneseq
        %v2094 = vshrl.u32 %v2093, 7
        %v2095 = vsub.s32 0, %v2094
        %v2096 = vrot.slane %v2091, %v2095
        %v2102 = vunpack.c.l.b16 %v2087
        %v2103 = vunpack.c.l.b16 %v2088
        %v2104 = vunpack.c.l.b16 %v2089
        %v2105 = vunpack.c.l.b16 %v2090
        %v2106 = vpack.c.b16 %v2103, %v2102
        %v2107 = vpack.c.b16 %v2105, %v2104
        %2110 = vmatprep.subr.bf16.mxu0 0
        %2111 = vmatpush1.bf16.msra.mxu0 0
        %2112 = vmatprep.subr.bf16.mxu0 0
        %2113 = vmatpush1.bf16.msra.mxu0 0
        %2114 = vmatprep.subr.bf16.mxu0 0
        %2115 = vmatpush1.bf16.msra.mxu0 0
        %2116 = vmatprep.subr.bf16.mxu0 0
        %2117 = vmatpush1.bf16.msra.mxu0 0
        %2118 = vmatprep.subr.bf16.mxu0 0
        %2119 = vmatpush1.bf16.msra.mxu0 0
        %2120 = vmatprep.subr.bf16.mxu0 0
        %2121 = vmatpush1.bf16.msra.mxu0 0
        %2122 = vmatprep.subr.bf16.mxu0 0
        %2123 = vmatpush1.bf16.msra.mxu0 %v2107
        %2124 = vmatprep.subr.bf16.mxu0 0
        %2125 = vmatpush1.bf16.msra.mxu0 %v2106
        %2126 = vmatprep.subr.bf16.mxu0 0
        %2127 = vmatpush2.bf16.msra.mxu0 0
        %2128 = vmatprep.subr.bf16.mxu0 0
        %2129 = vmatpush2.bf16.msra.mxu0 0
        %2130 = vmatprep.subr.bf16.mxu0 0
        %2131 = vmatpush2.bf16.msra.mxu0 0
        %2132 = vmatprep.subr.bf16.mxu0 0
        %2133 = vmatpush2.bf16.msra.mxu0 0
        %2134 = vmatprep.subr.bf16.mxu0 0
        %2135 = vmatpush2.bf16.msra.mxu0 0
        %2136 = vmatprep.subr.bf16.mxu0 0
        %2137 = vmatpush2.bf16.msra.mxu0 0
        %2138 = vmatprep.subr.bf16.mxu0 0
        %2139 = vmatpush2.bf16.msra.mxu0 0
        %2140 = vmatprep.subr.bf16.mxu0 0
        %2141 = vmatpush2.bf16.msra.mxu0 0
        %2142 = vmatprep.mubr.bf16.mxu0 0
        %2143 = vmatmul.mubr.bf16.gmra.mxu0 %v2045
        %v2144 = vpop.f32.mrf.mxu0
        %v2145 = vadd.f32 %v2096, %v2144
        %v2146 = vpop.f32.mrf.mxu0
        %v2147 = vpop.f32.mrf.mxu0
        %v2148 = vpop.f32.mrf.mxu0
        %2149 = vdwg.mxu0
        %v2150 = vpack.c.bf16 %v2016, %v2016
        %v2151 = vpack.c.bf16 %v2082, %v2082
        %v2152 = vpack.c.bf16 %v2145, %v2145
        %v2154 = vsel %vm1387, %v2150, 0
        %v2157 = vsel %vm1387, %v2151, 0
        %2159 = vmatprep.subr.bf16.mxu0 0
        %2160 = vmatpush1.bf16.xpose.msra.mxu0 0
        %2161 = vmatprep.subr.bf16.mxu0 0
        %2162 = vmatpush1.bf16.xpose.msra.mxu0 0
        %2163 = vmatprep.subr.bf16.mxu0 0
        %2164 = vmatpush1.bf16.xpose.msra.mxu0 0
        %2165 = vmatprep.subr.bf16.mxu0 0
        %2166 = vmatpush1.bf16.xpose.msra.mxu0 0
        %2167 = vmatprep.subr.bf16.mxu0 0
        %2168 = vmatpush1.bf16.xpose.msra.mxu0 0
        %2169 = vmatprep.subr.bf16.mxu0 0
        %2170 = vmatpush1.bf16.xpose.msra.mxu0 0
        %2171 = vmatprep.subr.bf16.mxu0 0
        %2172 = vmatpush1.bf16.xpose.msra.mxu0 0
        %2173 = vmatprep.subr.bf16.mxu0 0
        %2174 = vmatpush1.bf16.xpose.msra.mxu0 %v2157
        %2175 = vmatprep.subr.bf16.mxu0 0
        %2176 = vmatpush2.bf16.xpose.msra.mxu0 0
        %2177 = vmatprep.subr.bf16.mxu0 0
        %2178 = vmatpush2.bf16.xpose.msra.mxu0 0
        %2179 = vmatprep.subr.bf16.mxu0 0
        %2180 = vmatpush2.bf16.xpose.msra.mxu0 0
        %2181 = vmatprep.subr.bf16.mxu0 0
        %2182 = vmatpush2.bf16.xpose.msra.mxu0 0
        %2183 = vmatprep.subr.bf16.mxu0 0
        %2184 = vmatpush2.bf16.xpose.msra.mxu0 0
        %2185 = vmatprep.subr.bf16.mxu0 0
        %2186 = vmatpush2.bf16.xpose.msra.mxu0 0
        %2187 = vmatprep.subr.bf16.mxu0 0
        %2188 = vmatpush2.bf16.xpose.msra.mxu0 0
        %2189 = vmatprep.subr.bf16.mxu0 0
        %2190 = vmatpush2.bf16.xpose.msra.mxu0 0
        %2191 = vmatprep.mubr.bf16.mxu0 0
        %2192 = vmatmul.mubr.bf16.gmra.mxu0 %v2154
        %v2193 = vpop.f32.mrf.mxu0
        %v2194 = vadd.f32 0.0, %v2193
        %v2195 = vpop.f32.mrf.mxu0
        %v2196 = vpop.f32.mrf.mxu0
        %v2197 = vpop.f32.mrf.mxu0
        %2198 = vdwg.mxu0
        %v2199 = vsel %vm1387, %v2194, -inf
        %2200 = vmax.xlane.f32.xlu0 %v2199
        %v2201 = vpop.xlane.xlu0 %2200
        %v2202 = vsub.f32 %v2194, %v2201
        %v2203 = vmul.f32 %v2202, 1.442695
        %v2204 = vpow.pop %v2203
        %v2205 = vsel %vm1387, %v2204, 0.0
        %2206 = vadd.xlane.f32.xlu0 %v2205
        %v2207 = vpop.xlane.xlu0 %2206
        %v2208 = vrcp.pop %v2207
        %v2209 = vmul.f32 %v2204, %v2208
        %v2210 = vpack.c.bf16 %v2209, %v2209
        %v2212 = vsel %vm1387, %v2210, 0
        %v2215 = vsel %vm1449, %v2152, 0
        %2217 = vmatprep.subr.bf16.mxu0 0
        %2218 = vmatpush1.bf16.msra.mxu0 0
        %2219 = vmatprep.subr.bf16.mxu0 0
        %2220 = vmatpush1.bf16.msra.mxu0 0
        %2221 = vmatprep.subr.bf16.mxu0 0
        %2222 = vmatpush1.bf16.msra.mxu0 0
        %2223 = vmatprep.subr.bf16.mxu0 0
        %2224 = vmatpush1.bf16.msra.mxu0 0
        %2225 = vmatprep.subr.bf16.mxu0 0
        %2226 = vmatpush1.bf16.msra.mxu0 0
        %2227 = vmatprep.subr.bf16.mxu0 0
        %2228 = vmatpush1.bf16.msra.mxu0 0
        %2229 = vmatprep.subr.bf16.mxu0 0
        %2230 = vmatpush1.bf16.msra.mxu0 0
        %2231 = vmatprep.subr.bf16.mxu0 0
        %2232 = vmatpush1.bf16.msra.mxu0 %v2215
        %2233 = vmatprep.subr.bf16.mxu0 0
        %2234 = vmatpush2.bf16.msra.mxu0 0
        %2235 = vmatprep.subr.bf16.mxu0 0
        %2236 = vmatpush2.bf16.msra.mxu0 0
        %2237 = vmatprep.subr.bf16.mxu0 0
        %2238 = vmatpush2.bf16.msra.mxu0 0
        %2239 = vmatprep.subr.bf16.mxu0 0
        %2240 = vmatpush2.bf16.msra.mxu0 0
        %2241 = vmatprep.subr.bf16.mxu0 0
        %2242 = vmatpush2.bf16.msra.mxu0 0
        %2243 = vmatprep.subr.bf16.mxu0 0
        %2244 = vmatpush2.bf16.msra.mxu0 0
        %2245 = vmatprep.subr.bf16.mxu0 0
        %2246 = vmatpush2.bf16.msra.mxu0 0
        %2247 = vmatprep.subr.bf16.mxu0 0
        %2248 = vmatpush2.bf16.msra.mxu0 0
        %2249 = vmatprep.mubr.bf16.mxu0 0
        %2250 = vmatmul.mubr.bf16.gmra.mxu0 %v2212
        %v2251 = vpop.f32.mrf.mxu0
        %v2252 = vadd.f32 0.0, %v2251
        %v2253 = vpop.f32.mrf.mxu0
        %v2254 = vpop.f32.mrf.mxu0
        %v2255 = vpop.f32.mrf.mxu0
        %2256 = vdwg.mxu0
        %v2257 = vpack.c.bf16 %v2252, %v2252
        %2258 = vst.msk [vmem:[#allocation2] sm:$0xf] %vm1494, %v2257
        %2260 = vrot.lane.b32.xlu0 %v2150, 120
        %v2261 = vpop.permute.xlu0 %2260
        %2263 = vrot.lane.b32.xlu0 %v2151, 120
        %v2264 = vpop.permute.xlu0 %2263
        %v2266 = vsel %vm1387, %v2261, 0
        %v2269 = vsel %vm1387, %v2264, 0
        %2271 = vmatprep.subr.bf16.mxu0 0
        %2272 = vmatpush1.bf16.xpose.msra.mxu0 0
        %2273 = vmatprep.subr.bf16.mxu0 0
        %2274 = vmatpush1.bf16.xpose.msra.mxu0 0
        %2275 = vmatprep.subr.bf16.mxu0 0
        %2276 = vmatpush1.bf16.xpose.msra.mxu0 0
        %2277 = vmatprep.subr.bf16.mxu0 0
        %2278 = vmatpush1.bf16.xpose.msra.mxu0 0
        %2279 = vmatprep.subr.bf16.mxu0 0
        %2280 = vmatpush1.bf16.xpose.msra.mxu0 0
        %2281 = vmatprep.subr.bf16.mxu0 0
        %2282 = vmatpush1.bf16.xpose.msra.mxu0 0
        %2283 = vmatprep.subr.bf16.mxu0 0
        %2284 = vmatpush1.bf16.xpose.msra.mxu0 0
        %2285 = vmatprep.subr.bf16.mxu0 0
        %2286 = vmatpush1.bf16.xpose.msra.mxu0 %v2269
        %2287 = vmatprep.subr.bf16.mxu0 0
        %2288 = vmatpush2.bf16.xpose.msra.mxu0 0
        %2289 = vmatprep.subr.bf16.mxu0 0
        %2290 = vmatpush2.bf16.xpose.msra.mxu0 0
        %2291 = vmatprep.subr.bf16.mxu0 0
        %2292 = vmatpush2.bf16.xpose.msra.mxu0 0
        %2293 = vmatprep.subr.bf16.mxu0 0
        %2294 = vmatpush2.bf16.xpose.msra.mxu0 0
        %2295 = vmatprep.subr.bf16.mxu0 0
        %2296 = vmatpush2.bf16.xpose.msra.mxu0 0
        %2297 = vmatprep.subr.bf16.mxu0 0
        %2298 = vmatpush2.bf16.xpose.msra.mxu0 0
        %2299 = vmatprep.subr.bf16.mxu0 0
        %2300 = vmatpush2.bf16.xpose.msra.mxu0 0
        %2301 = vmatprep.subr.bf16.mxu0 0
        %2302 = vmatpush2.bf16.xpose.msra.mxu0 0
        %2303 = vmatprep.mubr.bf16.mxu0 0
        %2304 = vmatmul.mubr.bf16.gmra.mxu0 %v2266
        %v2305 = vpop.f32.mrf.mxu0
        %v2306 = vadd.f32 0.0, %v2305
        %v2307 = vpop.f32.mrf.mxu0
        %v2308 = vpop.f32.mrf.mxu0
        %v2309 = vpop.f32.mrf.mxu0
        %2310 = vdwg.mxu0
        %v2311 = vsel %vm1387, %v2306, -inf
        %2312 = vmax.xlane.f32.xlu0 %v2311
        %v2313 = vpop.xlane.xlu0 %2312
        %v2314 = vsub.f32 %v2306, %v2313
        %v2315 = vmul.f32 %v2314, 1.442695
        %v2316 = vpow.pop %v2315
        %v2317 = vsel %vm1387, %v2316, 0.0
        %2318 = vadd.xlane.f32.xlu0 %v2317
        %v2319 = vpop.xlane.xlu0 %2318
        %v2320 = vrcp.pop %v2319
        %v2321 = vmul.f32 %v2316, %v2320
        %v2322 = vpack.c.bf16 %v2321, %v2321
        %2324 = vrot.lane.b32.xlu0 %v2152, 120
        %v2325 = vpop.permute.xlu0 %2324
        %v2327 = vsel %vm1387, %v2322, 0
        %v2330 = vsel %vm1449, %v2325, 0
        %2332 = vmatprep.subr.bf16.mxu0 0
        %2333 = vmatpush1.bf16.msra.mxu0 0
        %2334 = vmatprep.subr.bf16.mxu0 0
        %2335 = vmatpush1.bf16.msra.mxu0 0
        %2336 = vmatprep.subr.bf16.mxu0 0
        %2337 = vmatpush1.bf16.msra.mxu0 0
        %2338 = vmatprep.subr.bf16.mxu0 0
        %2339 = vmatpush1.bf16.msra.mxu0 0
        %2340 = vmatprep.subr.bf16.mxu0 0
        %2341 = vmatpush1.bf16.msra.mxu0 0
        %2342 = vmatprep.subr.bf16.mxu0 0
        %2343 = vmatpush1.bf16.msra.mxu0 0
        %2344 = vmatprep.subr.bf16.mxu0 0
        %2345 = vmatpush1.bf16.msra.mxu0 0
        %2346 = vmatprep.subr.bf16.mxu0 0
        %2347 = vmatpush1.bf16.msra.mxu0 %v2330
        %2348 = vmatprep.subr.bf16.mxu0 0
        %2349 = vmatpush2.bf16.msra.mxu0 0
        %2350 = vmatprep.subr.bf16.mxu0 0
        %2351 = vmatpush2.bf16.msra.mxu0 0
        %2352 = vmatprep.subr.bf16.mxu0 0
        %2353 = vmatpush2.bf16.msra.mxu0 0
        %2354 = vmatprep.subr.bf16.mxu0 0
        %2355 = vmatpush2.bf16.msra.mxu0 0
        %2356 = vmatprep.subr.bf16.mxu0 0
        %2357 = vmatpush2.bf16.msra.mxu0 0
        %2358 = vmatprep.subr.bf16.mxu0 0
        %2359 = vmatpush2.bf16.msra.mxu0 0
        %2360 = vmatprep.subr.bf16.mxu0 0
        %2361 = vmatpush2.bf16.msra.mxu0 0
        %2362 = vmatprep.subr.bf16.mxu0 0
        %2363 = vmatpush2.bf16.msra.mxu0 0
        %2364 = vmatprep.mubr.bf16.mxu0 0
        %2365 = vmatmul.mubr.bf16.gmra.mxu0 %v2327
        %v2366 = vpop.f32.mrf.mxu0
        %v2367 = vadd.f32 0.0, %v2366
        %v2368 = vpop.f32.mrf.mxu0
        %v2369 = vpop.f32.mrf.mxu0
        %v2370 = vpop.f32.mrf.mxu0
        %2371 = vdwg.mxu0
        %v2372 = vpack.c.bf16 %v2367, %v2367
        %v2374 = vunpack.c.l.b16 %v2372
        %v2375 = vpack.c.b16 %v2374, %v2374
        %2376 = vrot.lane.b32.xlu0 %v2375, 8
        %v2377 = vpop.permute.xlu0 %2376
        %2379 = vst.msk [vmem:[#allocation2] sm:$0xf] %vm1616, %v2377
        %v2380 = vadd.f32 %v2209, %v2321
        %2381 = vrot.lane.b32.xlu0 %v2150, 112
        %v2382 = vpop.permute.xlu0 %2381
        %2383 = vrot.lane.b32.xlu0 %v2151, 112
        %v2384 = vpop.permute.xlu0 %2383
        %v2386 = vsel %vm1387, %v2382, 0
        %v2389 = vsel %vm1387, %v2384, 0
        %2391 = vmatprep.subr.bf16.mxu0 0
        %2392 = vmatpush1.bf16.xpose.msra.mxu0 0
        %2393 = vmatprep.subr.bf16.mxu0 0
        %2394 = vmatpush1.bf16.xpose.msra.mxu0 0
        %2395 = vmatprep.subr.bf16.mxu0 0
        %2396 = vmatpush1.bf16.xpose.msra.mxu0 0
        %2397 = vmatprep.subr.bf16.mxu0 0
        %2398 = vmatpush1.bf16.xpose.msra.mxu0 0
        %2399 = vmatprep.subr.bf16.mxu0 0
        %2400 = vmatpush1.bf16.xpose.msra.mxu0 0
        %2401 = vmatprep.subr.bf16.mxu0 0
        %2402 = vmatpush1.bf16.xpose.msra.mxu0 0
        %2403 = vmatprep.subr.bf16.mxu0 0
        %2404 = vmatpush1.bf16.xpose.msra.mxu0 0
        %2405 = vmatprep.subr.bf16.mxu0 0
        %2406 = vmatpush1.bf16.xpose.msra.mxu0 %v2389
        %2407 = vmatprep.subr.bf16.mxu0 0
        %2408 = vmatpush2.bf16.xpose.msra.mxu0 0
        %2409 = vmatprep.subr.bf16.mxu0 0
        %2410 = vmatpush2.bf16.xpose.msra.mxu0 0
        %2411 = vmatprep.subr.bf16.mxu0 0
        %2412 = vmatpush2.bf16.xpose.msra.mxu0 0
        %2413 = vmatprep.subr.bf16.mxu0 0
        %2414 = vmatpush2.bf16.xpose.msra.mxu0 0
        %2415 = vmatprep.subr.bf16.mxu0 0
        %2416 = vmatpush2.bf16.xpose.msra.mxu0 0
        %2417 = vmatprep.subr.bf16.mxu0 0
        %2418 = vmatpush2.bf16.xpose.msra.mxu0 0
        %2419 = vmatprep.subr.bf16.mxu0 0
        %2420 = vmatpush2.bf16.xpose.msra.mxu0 0
        %2421 = vmatprep.subr.bf16.mxu0 0
        %2422 = vmatpush2.bf16.xpose.msra.mxu0 0
        %2423 = vmatprep.mubr.bf16.mxu0 0
        %2424 = vmatmul.mubr.bf16.gmra.mxu0 %v2386
        %v2425 = vpop.f32.mrf.mxu0
        %v2426 = vadd.f32 0.0, %v2425
        %v2427 = vpop.f32.mrf.mxu0
        %v2428 = vpop.f32.mrf.mxu0
        %v2429 = vpop.f32.mrf.mxu0
        %2430 = vdwg.mxu0
        %v2431 = vsel %vm1387, %v2426, -inf
        %2432 = vmax.xlane.f32.xlu0 %v2431
        %v2433 = vpop.xlane.xlu0 %2432
        %v2434 = vsub.f32 %v2426, %v2433
        %v2435 = vmul.f32 %v2434, 1.442695
        %v2436 = vpow.pop %v2435
        %v2437 = vsel %vm1387, %v2436, 0.0
        %2438 = vadd.xlane.f32.xlu0 %v2437
        %v2439 = vpop.xlane.xlu0 %2438
        %v2440 = vrcp.pop %v2439
        %v2441 = vmul.f32 %v2436, %v2440
        %v2442 = vpack.c.bf16 %v2441, %v2441
        %2443 = vrot.lane.b32.xlu0 %v2152, 112
        %v2444 = vpop.permute.xlu0 %2443
        %v2446 = vsel %vm1387, %v2442, 0
        %v2449 = vsel %vm1449, %v2444, 0
        %2451 = vmatprep.subr.bf16.mxu0 0
        %2452 = vmatpush1.bf16.msra.mxu0 0
        %2453 = vmatprep.subr.bf16.mxu0 0
        %2454 = vmatpush1.bf16.msra.mxu0 0
        %2455 = vmatprep.subr.bf16.mxu0 0
        %2456 = vmatpush1.bf16.msra.mxu0 0
        %2457 = vmatprep.subr.bf16.mxu0 0
        %2458 = vmatpush1.bf16.msra.mxu0 0
        %2459 = vmatprep.subr.bf16.mxu0 0
        %2460 = vmatpush1.bf16.msra.mxu0 0
        %2461 = vmatprep.subr.bf16.mxu0 0
        %2462 = vmatpush1.bf16.msra.mxu0 0
        %2463 = vmatprep.subr.bf16.mxu0 0
        %2464 = vmatpush1.bf16.msra.mxu0 0
        %2465 = vmatprep.subr.bf16.mxu0 0
        %2466 = vmatpush1.bf16.msra.mxu0 %v2449
        %2467 = vmatprep.subr.bf16.mxu0 0
        %2468 = vmatpush2.bf16.msra.mxu0 0
        %2469 = vmatprep.subr.bf16.mxu0 0
        %2470 = vmatpush2.bf16.msra.mxu0 0
        %2471 = vmatprep.subr.bf16.mxu0 0
        %2472 = vmatpush2.bf16.msra.mxu0 0
        %2473 = vmatprep.subr.bf16.mxu0 0
        %2474 = vmatpush2.bf16.msra.mxu0 0
        %2475 = vmatprep.subr.bf16.mxu0 0
        %2476 = vmatpush2.bf16.msra.mxu0 0
        %2477 = vmatprep.subr.bf16.mxu0 0
        %2478 = vmatpush2.bf16.msra.mxu0 0
        %2479 = vmatprep.subr.bf16.mxu0 0
        %2480 = vmatpush2.bf16.msra.mxu0 0
        %2481 = vmatprep.subr.bf16.mxu0 0
        %2482 = vmatpush2.bf16.msra.mxu0 0
        %2483 = vmatprep.mubr.bf16.mxu0 0
        %2484 = vmatmul.mubr.bf16.gmra.mxu0 %v2446
        %v2485 = vpop.f32.mrf.mxu0
        %v2486 = vadd.f32 0.0, %v2485
        %v2487 = vpop.f32.mrf.mxu0
        %v2488 = vpop.f32.mrf.mxu0
        %v2489 = vpop.f32.mrf.mxu0
        %2490 = vdwg.mxu0
        %v2491 = vpack.c.bf16 %v2486, %v2486
        %v2493 = vunpack.c.l.b16 %v2491
        %v2494 = vpack.c.b16 %v2493, %v2493
        %2495 = vrot.lane.b32.xlu0 %v2494, 16
        %v2496 = vpop.permute.xlu0 %2495
        %2498 = vst.msk [vmem:[#allocation2] sm:$0xf] %vm1735, %v2496
        %v2499 = vadd.f32 %v2380, %v2441
        %2500 = vrot.lane.b32.xlu0 %v2150, 104
        %v2501 = vpop.permute.xlu0 %2500
        %2502 = vrot.lane.b32.xlu0 %v2151, 104
        %v2503 = vpop.permute.xlu0 %2502
        %v2505 = vsel %vm1387, %v2501, 0
        %v2508 = vsel %vm1387, %v2503, 0
        %2510 = vmatprep.subr.bf16.mxu0 0
        %2511 = vmatpush1.bf16.xpose.msra.mxu0 0
        %2512 = vmatprep.subr.bf16.mxu0 0
        %2513 = vmatpush1.bf16.xpose.msra.mxu0 0
        %2514 = vmatprep.subr.bf16.mxu0 0
        %2515 = vmatpush1.bf16.xpose.msra.mxu0 0
        %2516 = vmatprep.subr.bf16.mxu0 0
        %2517 = vmatpush1.bf16.xpose.msra.mxu0 0
        %2518 = vmatprep.subr.bf16.mxu0 0
        %2519 = vmatpush1.bf16.xpose.msra.mxu0 0
        %2520 = vmatprep.subr.bf16.mxu0 0
        %2521 = vmatpush1.bf16.xpose.msra.mxu0 0
        %2522 = vmatprep.subr.bf16.mxu0 0
        %2523 = vmatpush1.bf16.xpose.msra.mxu0 0
        %2524 = vmatprep.subr.bf16.mxu0 0
        %2525 = vmatpush1.bf16.xpose.msra.mxu0 %v2508
        %2526 = vmatprep.subr.bf16.mxu0 0
        %2527 = vmatpush2.bf16.xpose.msra.mxu0 0
        %2528 = vmatprep.subr.bf16.mxu0 0
        %2529 = vmatpush2.bf16.xpose.msra.mxu0 0
        %2530 = vmatprep.subr.bf16.mxu0 0
        %2531 = vmatpush2.bf16.xpose.msra.mxu0 0
        %2532 = vmatprep.subr.bf16.mxu0 0
        %2533 = vmatpush2.bf16.xpose.msra.mxu0 0
        %2534 = vmatprep.subr.bf16.mxu0 0
        %2535 = vmatpush2.bf16.xpose.msra.mxu0 0
        %2536 = vmatprep.subr.bf16.mxu0 0
        %2537 = vmatpush2.bf16.xpose.msra.mxu0 0
        %2538 = vmatprep.subr.bf16.mxu0 0
        %2539 = vmatpush2.bf16.xpose.msra.mxu0 0
        %2540 = vmatprep.subr.bf16.mxu0 0
        %2541 = vmatpush2.bf16.xpose.msra.mxu0 0
        %2542 = vmatprep.mubr.bf16.mxu0 0
        %2543 = vmatmul.mubr.bf16.gmra.mxu0 %v2505
        %v2544 = vpop.f32.mrf.mxu0
        %v2545 = vadd.f32 0.0, %v2544
        %v2546 = vpop.f32.mrf.mxu0
        %v2547 = vpop.f32.mrf.mxu0
        %v2548 = vpop.f32.mrf.mxu0
        %2549 = vdwg.mxu0
        %v2550 = vsel %vm1387, %v2545, -inf
        %2551 = vmax.xlane.f32.xlu0 %v2550
        %v2552 = vpop.xlane.xlu0 %2551
        %v2553 = vsub.f32 %v2545, %v2552
        %v2554 = vmul.f32 %v2553, 1.442695
        %v2555 = vpow.pop %v2554
        %v2556 = vsel %vm1387, %v2555, 0.0
        %2557 = vadd.xlane.f32.xlu0 %v2556
        %v2558 = vpop.xlane.xlu0 %2557
        %v2559 = vrcp.pop %v2558
        %v2560 = vmul.f32 %v2555, %v2559
        %v2561 = vpack.c.bf16 %v2560, %v2560
        %2562 = vrot.lane.b32.xlu0 %v2152, 104
        %v2563 = vpop.permute.xlu0 %2562
        %v2565 = vsel %vm1387, %v2561, 0
        %v2568 = vsel %vm1449, %v2563, 0
        %2570 = vmatprep.subr.bf16.mxu0 0
        %2571 = vmatpush1.bf16.msra.mxu0 0
        %2572 = vmatprep.subr.bf16.mxu0 0
        %2573 = vmatpush1.bf16.msra.mxu0 0
        %2574 = vmatprep.subr.bf16.mxu0 0
        %2575 = vmatpush1.bf16.msra.mxu0 0
        %2576 = vmatprep.subr.bf16.mxu0 0
        %2577 = vmatpush1.bf16.msra.mxu0 0
        %2578 = vmatprep.subr.bf16.mxu0 0
        %2579 = vmatpush1.bf16.msra.mxu0 0
        %2580 = vmatprep.subr.bf16.mxu0 0
        %2581 = vmatpush1.bf16.msra.mxu0 0
        %2582 = vmatprep.subr.bf16.mxu0 0
        %2583 = vmatpush1.bf16.msra.mxu0 0
        %2584 = vmatprep.subr.bf16.mxu0 0
        %2585 = vmatpush1.bf16.msra.mxu0 %v2568
        %2586 = vmatprep.subr.bf16.mxu0 0
        %2587 = vmatpush2.bf16.msra.mxu0 0
        %2588 = vmatprep.subr.bf16.mxu0 0
        %2589 = vmatpush2.bf16.msra.mxu0 0
        %2590 = vmatprep.subr.bf16.mxu0 0
        %2591 = vmatpush2.bf16.msra.mxu0 0
        %2592 = vmatprep.subr.bf16.mxu0 0
        %2593 = vmatpush2.bf16.msra.mxu0 0
        %2594 = vmatprep.subr.bf16.mxu0 0
        %2595 = vmatpush2.bf16.msra.mxu0 0
        %2596 = vmatprep.subr.bf16.mxu0 0
        %2597 = vmatpush2.bf16.msra.mxu0 0
        %2598 = vmatprep.subr.bf16.mxu0 0
        %2599 = vmatpush2.bf16.msra.mxu0 0
        %2600 = vmatprep.subr.bf16.mxu0 0
        %2601 = vmatpush2.bf16.msra.mxu0 0
        %2602 = vmatprep.mubr.bf16.mxu0 0
        %2603 = vmatmul.mubr.bf16.gmra.mxu0 %v2565
        %v2604 = vpop.f32.mrf.mxu0
        %v2605 = vadd.f32 0.0, %v2604
        %v2606 = vpop.f32.mrf.mxu0
        %v2607 = vpop.f32.mrf.mxu0
        %v2608 = vpop.f32.mrf.mxu0
        %2609 = vdwg.mxu0
        %v2610 = vpack.c.bf16 %v2605, %v2605
        %v2612 = vunpack.c.l.b16 %v2610
        %v2613 = vpack.c.b16 %v2612, %v2612
        %2614 = vrot.lane.b32.xlu0 %v2613, 24
        %v2615 = vpop.permute.xlu0 %2614
        %2617 = vst.msk [vmem:[#allocation2] sm:$0xf] %vm1854, %v2615
        %v2618 = vadd.f32 %v2499, %v2560
        %v2619 = vld [vmem:[#allocation2] sm:$0xf]
        %v2620 = vld [vmem:[#allocation27] sm:$0xf]
        %v2621 = vld [vmem:[#allocation27 + $0x4] sm:$0xf]
        %v2622 = vld [vmem:[#allocation27 + $0x8] sm:$0xf]
        %v2623 = vld [vmem:[#allocation27 + $0xc] sm:$0xf]
        %v2624 = vld [vmem:[%s41] sm:$0x1]
        %v2626 = vlaneseq
        %v2627 = vshrl.u32 %v2626, 7
        %v2628 = vsub.s32 0, %v2627
        %v2629 = vrot.slane %v2624, %v2628
        %v2635 = vunpack.c.l.b16 %v2620
        %v2636 = vunpack.c.l.b16 %v2621
        %v2637 = vunpack.c.l.b16 %v2622
        %v2638 = vunpack.c.l.b16 %v2623
        %v2639 = vpack.c.b16 %v2636, %v2635
        %v2640 = vpack.c.b16 %v2638, %v2637
        %v2644 = vsel %vm1214, %v2619, 0
        %2646 = vmatprep.subr.bf16.mxu0 0
        %2647 = vmatpush1.bf16.msra.mxu0 0
        %2648 = vmatprep.subr.bf16.mxu0 0
        %2649 = vmatpush1.bf16.msra.mxu0 0
        %2650 = vmatprep.subr.bf16.mxu0 0
        %2651 = vmatpush1.bf16.msra.mxu0 0
        %2652 = vmatprep.subr.bf16.mxu0 0
        %2653 = vmatpush1.bf16.msra.mxu0 0
        %2654 = vmatprep.subr.bf16.mxu0 0
        %2655 = vmatpush1.bf16.msra.mxu0 0
        %2656 = vmatprep.subr.bf16.mxu0 0
        %2657 = vmatpush1.bf16.msra.mxu0 0
        %2658 = vmatprep.subr.bf16.mxu0 0
        %2659 = vmatpush1.bf16.msra.mxu0 %v2640
        %2660 = vmatprep.subr.bf16.mxu0 0
        %2661 = vmatpush1.bf16.msra.mxu0 %v2639
        %2662 = vmatprep.subr.bf16.mxu0 0
        %2663 = vmatpush2.bf16.msra.mxu0 0
        %2664 = vmatprep.subr.bf16.mxu0 0
        %2665 = vmatpush2.bf16.msra.mxu0 0
        %2666 = vmatprep.subr.bf16.mxu0 0
        %2667 = vmatpush2.bf16.msra.mxu0 0
        %2668 = vmatprep.subr.bf16.mxu0 0
        %2669 = vmatpush2.bf16.msra.mxu0 0
        %2670 = vmatprep.subr.bf16.mxu0 0
        %2671 = vmatpush2.bf16.msra.mxu0 0
        %2672 = vmatprep.subr.bf16.mxu0 0
        %2673 = vmatpush2.bf16.msra.mxu0 0
        %2674 = vmatprep.subr.bf16.mxu0 0
        %2675 = vmatpush2.bf16.msra.mxu0 0
        %2676 = vmatprep.subr.bf16.mxu0 0
        %2677 = vmatpush2.bf16.msra.mxu0 0
        %2678 = vmatprep.mubr.bf16.mxu0 0
        %2679 = vmatmul.mubr.bf16.gmra.mxu0 %v2644
        %v2680 = vpop.f32.mrf.mxu0
        %v2681 = vadd.f32 %v2629, %v2680
        %v2682 = vpop.f32.mrf.mxu0
        %v2683 = vpop.f32.mrf.mxu0
        %v2684 = vpop.f32.mrf.mxu0
        %2685 = vdwg.mxu0
        %v2686 = vmul.f32 %v2618, 0.25
        %v2687 = vadd.f32 %v1953, %v2681
        %v2688 = vld [vmem:[%s43] sm:$0x1]
        %v2689 = vld [vmem:[%s45] sm:$0x1]
        %v2690 = vsel %vm1214, %v2687, 0.0
        %2691 = vadd.xlane.f32.xlu0 %v2690
        %v2692 = vpop.xlane.xlu0 %2691
        %v2693 = vmul.f32 %v2692, %v1929
        %v2694 = vsub.f32 %v2687, %v2693
        %v2695 = vmul.f32 %v2694, %v2694
        %v2696 = vsel %vm1214, %v2695, 0.0
        %2697 = vadd.xlane.f32.xlu0 %v2696
        %v2698 = vpop.xlane.xlu0 %2697
        %v2699 = vmul.f32 %v2698, %v1929
        %v2700 = vadd.f32 %v2699, 1e-05
        %v2701 = vrsqrt.pop %v2700
        %v2702 = vmul.f32 %v2694, %v2701
        %v2704 = vlaneseq
        %v2705 = vshrl.u32 %v2704, 7
        %v2706 = vsub.s32 0, %v2705
        %v2707 = vrot.slane %v2688, %v2706
        %v2709 = vmul.f32 %v2702, %v2707
        %v2711 = vlaneseq
        %v2712 = vshrl.u32 %v2711, 7
        %v2713 = vsub.s32 0, %v2712
        %v2714 = vrot.slane %v2689, %v2713
        %v2716 = vadd.f32 %v2709, %v2714
        %v2717 = vpack.c.bf16 %v2716, %v2716
        %v2718 = vld [vmem:[#allocation29] sm:$0xf]
        %v2719 = vld [vmem:[#allocation29 + $0x4] sm:$0xf]
        %v2720 = vld [vmem:[#allocation29 + $0x8] sm:$0xf]
        %v2721 = vld [vmem:[#allocation29 + $0xc] sm:$0xf]
        %v2722 = vld [vmem:[%s49] sm:$0x1]
        %v2724 = vlaneseq
        %v2725 = vshrl.u32 %v2724, 7
        %v2726 = vsub.s32 0, %v2725
        %v2727 = vrot.slane %v2722, %v2726
        %v2733 = vunpack.c.l.b16 %v2718
        %v2734 = vunpack.c.l.b16 %v2719
        %v2735 = vunpack.c.l.b16 %v2720
        %v2736 = vunpack.c.l.b16 %v2721
        %v2737 = vpack.c.b16 %v2734, %v2733
        %v2738 = vpack.c.b16 %v2736, %v2735
        %v2742 = vsel %vm1214, %v2717, 0
        %2744 = vmatprep.subr.bf16.mxu0 0
        %2745 = vmatpush1.bf16.msra.mxu0 0
        %2746 = vmatprep.subr.bf16.mxu0 0
        %2747 = vmatpush1.bf16.msra.mxu0 0
        %2748 = vmatprep.subr.bf16.mxu0 0
        %2749 = vmatpush1.bf16.msra.mxu0 0
        %2750 = vmatprep.subr.bf16.mxu0 0
        %2751 = vmatpush1.bf16.msra.mxu0 0
        %2752 = vmatprep.subr.bf16.mxu0 0
        %2753 = vmatpush1.bf16.msra.mxu0 0
        %2754 = vmatprep.subr.bf16.mxu0 0
        %2755 = vmatpush1.bf16.msra.mxu0 0
        %2756 = vmatprep.subr.bf16.mxu0 0
        %2757 = vmatpush1.bf16.msra.mxu0 %v2738
        %2758 = vmatprep.subr.bf16.mxu0 0
        %2759 = vmatpush1.bf16.msra.mxu0 %v2737
        %2760 = vmatprep.subr.bf16.mxu0 0
        %2761 = vmatpush2.bf16.msra.mxu0 0
        %2762 = vmatprep.subr.bf16.mxu0 0
        %2763 = vmatpush2.bf16.msra.mxu0 0
        %2764 = vmatprep.subr.bf16.mxu0 0
        %2765 = vmatpush2.bf16.msra.mxu0 0
        %2766 = vmatprep.subr.bf16.mxu0 0
        %2767 = vmatpush2.bf16.msra.mxu0 0
        %2768 = vmatprep.subr.bf16.mxu0 0
        %2769 = vmatpush2.bf16.msra.mxu0 0
        %2770 = vmatprep.subr.bf16.mxu0 0
        %2771 = vmatpush2.bf16.msra.mxu0 0
        %2772 = vmatprep.subr.bf16.mxu0 0
        %2773 = vmatpush2.bf16.msra.mxu0 0
        %2774 = vmatprep.subr.bf16.mxu0 0
        %2775 = vmatpush2.bf16.msra.mxu0 0
        %2776 = vmatprep.mubr.bf16.mxu0 0
        %2777 = vmatmul.mubr.bf16.gmra.mxu0 %v2742
        %v2778 = vpop.f32.mrf.mxu0
        %v2779 = vadd.f32 %v2727, %v2778
        %v2780 = vpop.f32.mrf.mxu0
        %v2781 = vpop.f32.mrf.mxu0
        %v2782 = vpop.f32.mrf.mxu0
        %2783 = vdwg.mxu0
        %v2784 = vmax.f32 %v2779, 0.0
        %v2785 = vpack.c.bf16 %v2784, %v2784
        %v2786 = vld [vmem:[%s51] sm:$0xf]
        %v2787 = vld [vmem:[%s51 + $0x4] sm:$0xf]
        %v2788 = vld [vmem:[%s51 + $0x8] sm:$0xf]
        %v2789 = vld [vmem:[%s51 + $0xc] sm:$0xf]
        %v2790 = vld [vmem:[%s51 + $0x10] sm:$0xf]
        %v2791 = vld [vmem:[%s51 + $0x14] sm:$0xf]
        %v2792 = vld [vmem:[%s51 + $0x18] sm:$0xf]
        %v2793 = vld [vmem:[%s51 + $0x1c] sm:$0xf]
        %v2794 = vld [vmem:[%s53] sm:$0x1]
        %v2796 = vlaneseq
        %v2797 = vshrl.u32 %v2796, 7
        %v2798 = vsub.s32 0, %v2797
        %v2799 = vrot.slane %v2794, %v2798
        %v2809 = vunpack.c.l.b16 %v2786
        %v2810 = vunpack.c.l.b16 %v2787
        %v2811 = vunpack.c.l.b16 %v2788
        %v2812 = vunpack.c.l.b16 %v2789
        %v2813 = vunpack.c.l.b16 %v2790
        %v2814 = vunpack.c.l.b16 %v2791
        %v2815 = vunpack.c.l.b16 %v2792
        %v2816 = vunpack.c.l.b16 %v2793
        %v2817 = vpack.c.b16 %v2810, %v2809
        %v2818 = vpack.c.b16 %v2812, %v2811
        %v2819 = vpack.c.b16 %v2814, %v2813
        %v2820 = vpack.c.b16 %v2816, %v2815
        %vm2825 = vcmask 523264
        %v2827 = vsel %vm2825, %v2785, 0
        %2829 = vmatprep.subr.bf16.mxu0 0
        %2830 = vmatpush1.bf16.msra.mxu0 0
        %2831 = vmatprep.subr.bf16.mxu0 0
        %2832 = vmatpush1.bf16.msra.mxu0 0
        %2833 = vmatprep.subr.bf16.mxu0 0
        %2834 = vmatpush1.bf16.msra.mxu0 0
        %2835 = vmatprep.subr.bf16.mxu0 0
        %2836 = vmatpush1.bf16.msra.mxu0 0
        %2837 = vmatprep.subr.bf16.mxu0 0
        %2838 = vmatpush1.bf16.msra.mxu0 %v2820
        %2839 = vmatprep.subr.bf16.mxu0 0
        %2840 = vmatpush1.bf16.msra.mxu0 %v2819
        %2841 = vmatprep.subr.bf16.mxu0 0
        %2842 = vmatpush1.bf16.msra.mxu0 %v2818
        %2843 = vmatprep.subr.bf16.mxu0 0
        %2844 = vmatpush1.bf16.msra.mxu0 %v2817
        %2845 = vmatprep.subr.bf16.mxu0 0
        %2846 = vmatpush2.bf16.msra.mxu0 0
        %2847 = vmatprep.subr.bf16.mxu0 0
        %2848 = vmatpush2.bf16.msra.mxu0 0
        %2849 = vmatprep.subr.bf16.mxu0 0
        %2850 = vmatpush2.bf16.msra.mxu0 0
        %2851 = vmatprep.subr.bf16.mxu0 0
        %2852 = vmatpush2.bf16.msra.mxu0 0
        %2853 = vmatprep.subr.bf16.mxu0 0
        %2854 = vmatpush2.bf16.msra.mxu0 0
        %2855 = vmatprep.subr.bf16.mxu0 0
        %2856 = vmatpush2.bf16.msra.mxu0 0
        %2857 = vmatprep.subr.bf16.mxu0 0
        %2858 = vmatpush2.bf16.msra.mxu0 0
        %2859 = vmatprep.subr.bf16.mxu0 0
        %2860 = vmatpush2.bf16.msra.mxu0 0
        %2861 = vmatprep.mubr.bf16.mxu0 0
        %2862 = vmatmul.mubr.bf16.gmra.mxu0 %v2827
        %v2863 = vpop.f32.mrf.mxu0
        %v2864 = vadd.f32 %v2799, %v2863
        %v2865 = vpop.f32.mrf.mxu0
        %v2866 = vpop.f32.mrf.mxu0
        %v2867 = vpop.f32.mrf.mxu0
        %2868 = vdwg.mxu0
        %v2869 = vadd.f32 %v2716, %v2864
        %v2870 = vld [vmem:[%s55] sm:$0x1]
        %v2871 = vld [vmem:[%s57] sm:$0x1]
        %v2872 = vsel %vm1214, %v2869, 0.0
        %2873 = vadd.xlane.f32.xlu0 %v2872
        %v2874 = vpop.xlane.xlu0 %2873
        %v2875 = vmul.f32 %v2874, %v1929
        %v2876 = vsub.f32 %v2869, %v2875
        %v2877 = vmul.f32 %v2876, %v2876
        %v2878 = vsel %vm1214, %v2877, 0.0
        %2879 = vadd.xlane.f32.xlu0 %v2878
        %v2880 = vpop.xlane.xlu0 %2879
        %v2881 = vmul.f32 %v2880, %v1929
        %v2882 = vadd.f32 %v2881, 1e-05
        %v2883 = vrsqrt.pop %v2882
        %v2884 = vmul.f32 %v2876, %v2883
        %v2886 = vlaneseq
        %v2887 = vshrl.u32 %v2886, 7
        %v2888 = vsub.s32 0, %v2887
        %v2889 = vrot.slane %v2870, %v2888
        %v2891 = vmul.f32 %v2884, %v2889
        %v2893 = vlaneseq
        %v2894 = vshrl.u32 %v2893, 7
        %v2895 = vsub.s32 0, %v2894
        %v2896 = vrot.slane %v2871, %v2895
        %v2898 = vadd.f32 %v2891, %v2896
        %2899 = vst.msk [vmem:[%s1174] sm:$0xff] %vm1214, %v2898
        %2900 = vst.msk [vmem:[%s1181] sm:$0xff] %vm1387, %v2686
        %s2901 = sand.u32 %s717, 1
        %s2902 = scalar_lea.sflag [#allocation5], %s2901
        %s2903 = sand.u32 %s717, 1
        %s2904 = smul.addr %s2903, 8
        %s2905 = scalar_lea.vmem [#allocation30], %s2904
        %s2906 = sand.u32 %s743, 1
        %s2907 = scalar_lea.sflag [#allocation32], %s2906
        %s2908 = sand.u32 %s743, 1
        %s2909 = smul.addr %s2908, 8
        %s2910 = scalar_lea.vmem [#allocation31], %s2909
        // Predicated region
        $region205: #{tpu_custom_call.1} parent=135 // pred_check
          %p2911 = pneg %p727
        $region206: #{tpu_custom_call.1} parent=135 // pred_check_branch
          %2913 = sbr.rel (%p2911) target = $region208
        $region207: #{tpu_custom_call.1} parent=135 // pred_region
          %s2915 = ssub.s32 128, 128
          %2916 = vsyncadd %s2902, %s2915
          %s2917 = smul.addr %s90, 128
          %s2918 = scalar_lea.hbm %s59, %s2917
          %s2920 = sshll.u32 %s2905, 4
          %s2921 = int_to_ptr.vmem [resolvable:$true] %s2920
          %2923 = dma.vmem_to_hbm [thread:$0]  %s2921, 128, %s2918, %s2902
        $region208: #{tpu_custom_call.1} parent=135 // pred_fallthru
          _
        // Predicated region
        $region209: #{tpu_custom_call.1} parent=135 // pred_check
          %p2924 = pneg %p753
        $region210: #{tpu_custom_call.1} parent=135 // pred_check_branch
          %2926 = sbr.rel (%p2924) target = $region212
        $region211: #{tpu_custom_call.1} parent=135 // pred_region
          %s2928 = ssub.s32 128, 128
          %2929 = vsyncadd %s2907, %s2928
          %s2930 = smul.addr %s90, 128
          %s2931 = scalar_lea.hbm %s61, %s2930
          %s2933 = sshll.u32 %s2910, 4
          %s2934 = int_to_ptr.vmem [resolvable:$true] %s2933
          %2936 = dma.vmem_to_hbm [thread:$0]  %s2934, 128, %s2931, %s2907
        $region212: #{tpu_custom_call.1} parent=135 // pred_fallthru
          _
      $region136: #{tpu_custom_call.1} parent=5 // pred_fallthru
        _
      %p2937 = scmp.le.s32.totalorder 2, %s85
      // Predicated region
      $region213: #{tpu_custom_call.1} parent=5 // pred_check
        %p2938 = pneg %p2937
      $region214: #{tpu_custom_call.1} parent=5 // pred_check_branch
        %2940 = sbr.rel (%p2938) target = $region216
      $region215: #{tpu_custom_call.1} parent=5 // pred_region
        %s2941 = ssub.s32 %s85, 2
        // Predicated region
        $region217: #{tpu_custom_call.1} parent=215 // pred_check
          %p2942 = pneg %p733
        $region218: #{tpu_custom_call.1} parent=215 // pred_check_branch
          %2944 = sbr.rel (%p2942) target = $region220
        $region219: #{tpu_custom_call.1} parent=215 // pred_region
          %s2945 = sand.u32 %s718, 1
          %s2946 = scalar_lea.sflag [#allocation5], %s2945
          %s2947 = sand.u32 %s718, 1
          %s2948 = smul.addr %s2947, 8
          %s2949 = scalar_lea.vmem [#allocation30], %s2948
          %2950 = dma.done %s2946, 128
        $region220: #{tpu_custom_call.1} parent=215 // pred_fallthru
          _
        // Predicated region
        $region221: #{tpu_custom_call.1} parent=215 // pred_check
          %p2951 = pneg %p759
        $region222: #{tpu_custom_call.1} parent=215 // pred_check_branch
          %2953 = sbr.rel (%p2951) target = $region224
        $region223: #{tpu_custom_call.1} parent=215 // pred_region
          %s2954 = sand.u32 %s744, 1
          %s2955 = scalar_lea.sflag [#allocation32], %s2954
          %s2956 = sand.u32 %s744, 1
          %s2957 = smul.addr %s2956, 8
          %s2958 = scalar_lea.vmem [#allocation31], %s2957
          %2959 = dma.done %s2955, 128
        $region224: #{tpu_custom_call.1} parent=215 // pred_fallthru
          _
      $region216: #{tpu_custom_call.1} parent=5 // pred_fallthru
        _
    $region6: #{tpu_custom_call.1} parent=1 // loop_footer
      %s89 = sadd.s32 1, %s85
    $region7: #{tpu_custom_call.1} parent=1 // loop_footer_branch
      %84 = sbr.rel target = $region3
    $region8: #{tpu_custom_call.1} parent=1 // loop_exit
      _
    %2960 = vsyncpa [#allocation4], 1
    %s2961 = scalar_lea.sflag [#allocation4], 1
    %2962 = vsyncpa %s2961, 1
    %2963 = vsyncpa [#allocation7], 1
    %2964 = vsyncpa [#allocation10], 1
    %2965 = vsyncpa [#allocation13], 1
    %2966 = vsyncpa [#allocation16], 1
    %2967 = vsyncpa [#allocation19], 1
    %2968 = vsyncpa [#allocation22], 1
    %2969 = vsyncpa [#allocation25], 1
    %2970 = vsyncpa [#allocation28], 1
    %2971 = vsyncpa [#allocation5], 1
    %s2972 = scalar_lea.sflag [#allocation5], 1
    %2973 = vsyncpa %s2972, 1
    %2974 = vsyncpa [#allocation32], 1
    %s2975 = scalar_lea.sflag [#allocation32], 1
    %2976 = vsyncpa %s2975, 1

</llo_original>
